<compile_context>
chip_gen: v7x
topology: tpu7x:2x2x1
jax: 0.10.0
libtpu: 0.0.40
codegen_flags: <defaults>
</compile_context>

<pallas_src>
import math
import functools

import jax
import jax.numpy as jnp
from jax.experimental import pallas as pl
from jax.experimental.pallas import tpu as pltpu

LN_EPS = 1e-5


@functools.lru_cache(maxsize=None)
def _vmem_limit_bytes():
    """Per-generation scoped-VMEM budget (~half of physical VMEM).
    v5e/v6e (128 MiB) -> 64 MiB; v7x (64 MiB) -> 32 MiB."""
    try:
        cap = int(getattr(pltpu.get_tpu_info(), "vmem_capacity_bytes", 128 * 1024 * 1024))
    except Exception:
        cap = 128 * 1024 * 1024
    return max(32 * 1024 * 1024, min(cap // 2, 96 * 1024 * 1024))


def _pick_tile(dim, preferred, unit):
    """Largest tile <= preferred that divides `dim` and is a multiple of `unit`;
    falls back to the full dimension (block == array dim is always legal)."""
    if dim <= preferred:
        return dim
    t = (preferred // unit) * unit
    while t >= unit:
        if dim % t == 0:
            return t
        t -= unit
    return dim


def _ln_rows(y, g, beta):
    """Row-wise LayerNorm over the last dim (f32)."""
    mu = jnp.mean(y, axis=-1, keepdims=True)
    var = jnp.mean(jnp.square(y - mu), axis=-1, keepdims=True)
    return (y - mu) * jax.lax.rsqrt(var + LN_EPS) * g + beta


def _as_bf16(x):
    return x if x.dtype == jnp.bfloat16 else x.astype(jnp.bfloat16)


# --------------------------- tiled linear kernels ----------------------------

def _linear_f32_kernel(x_ref, w_ref, b_ref, o_ref, *, relu):
    """o = act(x @ w + b), f32 output used directly as the K-axis accumulator."""
    @pl.when(pl.program_id(2) == 0)
    def _():
        o_ref[...] = jnp.zeros_like(o_ref)

    o_ref[...] += jnp.dot(_as_bf16(x_ref[...]), w_ref[...],
                          preferred_element_type=jnp.float32)

    @pl.when(pl.program_id(2) == pl.num_programs(2) - 1)
    def _():
        y = o_ref[...] + b_ref[...]
        if relu:
            y = jnp.maximum(y, 0.0)
        o_ref[...] = y


def _linear_bf16_kernel(x_ref, w_ref, b_ref, o_ref, acc_ref, *, relu):
    """bf16 output variant: f32 VMEM accumulator, cast once at the last K step."""
    @pl.when(pl.program_id(2) == 0)
    def _():
        acc_ref[...] = jnp.zeros_like(acc_ref)

    acc_ref[...] += jnp.dot(_as_bf16(x_ref[...]), w_ref[...],
                            preferred_element_type=jnp.float32)

    @pl.when(pl.program_id(2) == pl.num_programs(2) - 1)
    def _():
        y = acc_ref[...] + b_ref[...]
        if relu:
            y = jnp.maximum(y, 0.0)
        o_ref[...] = y.astype(o_ref.dtype)


def linear_pallas(x, w, b, relu=False, out_dtype=jnp.float32):
    """y = act(x @ w + b).  x:(M,K), w:(K,N) bf16 (pre-transposed at init), b:(1,N) f32."""
    M, K = x.shape
    N = w.shape[1]
    tm = _pick_tile(M, 512, 8)
    tn = _pick_tile(N, 512, 128)
    tk = _pick_tile(K, 1024, 128)
    if out_dtype == jnp.float32:
        kernel = functools.partial(_linear_f32_kernel, relu=relu)
        scratch = []
    else:
        kernel = functools.partial(_linear_bf16_kernel, relu=relu)
        scratch = [pltpu.VMEM((tm, tn), jnp.float32)]
    return pl.pallas_call(
        kernel,
        out_shape=jax.ShapeDtypeStruct((M, N), out_dtype),
        grid_spec=pltpu.PrefetchScalarGridSpec(
            num_scalar_prefetch=0,
            grid=(M // tm, N // tn, K // tk),
            in_specs=[
                pl.BlockSpec((tm, tk), lambda i, j, k: (i, k)),
                pl.BlockSpec((tk, tn), lambda i, j, k: (k, j)),
                pl.BlockSpec((1, tn), lambda i, j, k: (0, j)),
            ],
            out_specs=pl.BlockSpec((tm, tn), lambda i, j, k: (i, j)),
            scratch_shapes=scratch,
        ),
        compiler_params=pltpu.CompilerParams(
            dimension_semantics=("parallel", "parallel", "arbitrary"),
            vmem_limit_bytes=_vmem_limit_bytes()),
    )(x, w, b)


def _matmul_res_ln_kernel(x_ref, w_ref, b_ref, res_ref, g_ref, beta_ref, o_ref):
    """o = LayerNorm(x @ w + b + residual); f32 output is the K-axis accumulator."""
    @pl.when(pl.program_id(1) == 0)
    def _():
        o_ref[...] = jnp.zeros_like(o_ref)

    o_ref[...] += jnp.dot(_as_bf16(x_ref[...]), w_ref[...],
                          preferred_element_type=jnp.float32)

    @pl.when(pl.program_id(1) == pl.num_programs(1) - 1)
    def _():
        y = o_ref[...] + b_ref[...] + res_ref[...]
        o_ref[...] = _ln_rows(y, g_ref[...], beta_ref[...])


def matmul_res_ln_pallas(x, w, b, res, gamma, beta):
    """Fused Linear + residual + LayerNorm (ff2 / norm3).  x:(M,K) bf16, res:(M,N) f32."""
    M, K = x.shape
    N = w.shape[1]
    tm = _pick_tile(M, 512, 8)
    tk = _pick_tile(K, 1024, 128)
    return pl.pallas_call(
        _matmul_res_ln_kernel,
        out_shape=jax.ShapeDtypeStruct((M, N), jnp.float32),
        grid_spec=pltpu.PrefetchScalarGridSpec(
            num_scalar_prefetch=0,
            grid=(M // tm, K // tk),
            in_specs=[
                pl.BlockSpec((tm, tk), lambda i, k: (i, k)),
                pl.BlockSpec((tk, N), lambda i, k: (k, 0)),
                pl.BlockSpec((1, N), lambda i, k: (0, 0)),
                pl.BlockSpec((tm, N), lambda i, k: (i, 0)),
                pl.BlockSpec((1, N), lambda i, k: (0, 0)),
                pl.BlockSpec((1, N), lambda i, k: (0, 0)),
            ],
            out_specs=pl.BlockSpec((tm, N), lambda i, k: (i, 0)),
        ),
        compiler_params=pltpu.CompilerParams(
            dimension_semantics=("parallel", "arbitrary"),
            vmem_limit_bytes=_vmem_limit_bytes()),
    )(x, w, b, res, gamma, beta)


# ------------------- fused attention-block kernels ---------------------------

def _mha_outproj(q, k, v, wo, mask, n_heads, scale):
    """Multi-head attention + out-projection accumulation for one batch element.
    q:(Sq,D) f32, k/v:(Sk,D) f32, wo:(D,D) bf16.  Returns (Sq,D) f32 (no bias)."""
    Sq, D = q.shape
    Dh = D // n_heads
    acc = jnp.zeros((Sq, D), jnp.float32)
    for h in range(n_heads):
        lo, hi = h * Dh, (h + 1) * Dh
        qh = _as_bf16(q[:, lo:hi])
        kh = _as_bf16(k[:, lo:hi])
        vh = _as_bf16(v[:, lo:hi])
        # contract over Dh (no explicit k.T transpose); scale in f32 on the scores
        s = jax.lax.dot_general(qh, kh, (((1,), (1,)), ((), ())),
                                preferred_element_type=jnp.float32) * scale
        if mask is not None:
            s = jnp.where(mask, s, -jnp.inf)
        s = s - jnp.max(s, axis=-1, keepdims=True)
        p = jnp.exp(s)
        p = p * pl.reciprocal(jnp.sum(p, axis=-1, keepdims=True), approx=True)
        ctx = jnp.dot(p.astype(jnp.bfloat16), vh, preferred_element_type=jnp.float32)
        # per-head out-projection accumulation: no concat, short live ranges
        acc = acc + jnp.dot(_as_bf16(ctx), wo[lo:hi, :], preferred_element_type=jnp.float32)
    return acc


def _self_attn_block_kernel(x_ref, wqkv_ref, bqkv_ref, wo_ref, bo_ref, g_ref, beta_ref,
                            o_ref, *, n_heads, scale):
    """QKV-proj + causal MHA + out-proj + residual + LayerNorm for one batch element."""
    _, S, D = o_ref.shape
    x = x_ref[0]                                                    # (S, D) f32 residual
    qkv = jnp.dot(_as_bf16(x), wqkv_ref[...],
                  preferred_element_type=jnp.float32) + bqkv_ref[...]   # (S, 3D)
    # causal mask generated in-kernel (no HBM DMA of an (S,S) mask)
    row = jax.lax.broadcasted_iota(jnp.int32, (S, S), 0)
    col = jax.lax.broadcasted_iota(jnp.int32, (S, S), 1)
    causal = col <= row
    attn = _mha_outproj(qkv[:, :D], qkv[:, D:2 * D], qkv[:, 2 * D:],
                        wo_ref[...], causal, n_heads, scale)
    y = attn + bo_ref[...] + x
    o_ref[0] = _ln_rows(y, g_ref[...], beta_ref[...])


def _cross_attn_block_kernel(x_ref, mem_ref, wq_ref, bq_ref, wkv_ref, bkv_ref,
                             wo_ref, bo_ref, g_ref, beta_ref, o_ref, *, n_heads, scale):
    """Q/KV-proj + cross MHA (no mask) + out-proj + residual + LayerNorm, one batch element."""
    _, S, D = o_ref.shape
    x = x_ref[0]                                                    # (S, D) f32 residual
    mem = mem_ref[0]                                                # (Sm, D) f32
    q = jnp.dot(_as_bf16(x), wq_ref[...],
                preferred_element_type=jnp.float32) + bq_ref[...]
    kv = jnp.dot(_as_bf16(mem), wkv_ref[...],
                 preferred_element_type=jnp.float32) + bkv_ref[...]     # (Sm, 2D)
    attn = _mha_outproj(q, kv[:, :D], kv[:, D:], wo_ref[...], None, n_heads, scale)
    y = attn + bo_ref[...] + x
    o_ref[0] = _ln_rows(y, g_ref[...], beta_ref[...])


def self_attn_block_pallas(x, wqkv, bqkv, wo, bo, gamma, beta, n_heads):
    B, S, D = x.shape
    scale = 1.0 / math.sqrt(D // n_heads)
    kernel = functools.partial(_self_attn_block_kernel, n_heads=n_heads, scale=scale)
    return pl.pallas_call(
        kernel,
        out_shape=jax.ShapeDtypeStruct((B, S, D), jnp.float32),
        grid_spec=pltpu.PrefetchScalarGridSpec(
            num_scalar_prefetch=0,
            grid=(B,),
            in_specs=[
                pl.BlockSpec((1, S, D), lambda b: (b, 0, 0)),
                pl.BlockSpec((D, 3 * D), lambda b: (0, 0)),
                pl.BlockSpec((1, 3 * D), lambda b: (0, 0)),
                pl.BlockSpec((D, D), lambda b: (0, 0)),
                pl.BlockSpec((1, D), lambda b: (0, 0)),
                pl.BlockSpec((1, D), lambda b: (0, 0)),
                pl.BlockSpec((1, D), lambda b: (0, 0)),
            ],
            out_specs=pl.BlockSpec((1, S, D), lambda b: (b, 0, 0)),
        ),
        compiler_params=pltpu.CompilerParams(
            dimension_semantics=("parallel",),
            vmem_limit_bytes=_vmem_limit_bytes()),
    )(x, wqkv, bqkv, wo, bo, gamma, beta)


def cross_attn_block_pallas(x, mem, wq, bq, wkv, bkv, wo, bo, gamma, beta, n_heads):
    B, S, D = x.shape
    Sm = mem.shape[1]
    scale = 1.0 / math.sqrt(D // n_heads)
    kernel = functools.partial(_cross_attn_block_kernel, n_heads=n_heads, scale=scale)
    return pl.pallas_call(
        kernel,
        out_shape=jax.ShapeDtypeStruct((B, S, D), jnp.float32),
        grid_spec=pltpu.PrefetchScalarGridSpec(
            num_scalar_prefetch=0,
            grid=(B,),
            in_specs=[
                pl.BlockSpec((1, S, D), lambda b: (b, 0, 0)),
                pl.BlockSpec((1, Sm, D), lambda b: (b, 0, 0)),
                pl.BlockSpec((D, D), lambda b: (0, 0)),
                pl.BlockSpec((1, D), lambda b: (0, 0)),
                pl.BlockSpec((D, 2 * D), lambda b: (0, 0)),
                pl.BlockSpec((1, 2 * D), lambda b: (0, 0)),
                pl.BlockSpec((D, D), lambda b: (0, 0)),
                pl.BlockSpec((1, D), lambda b: (0, 0)),
                pl.BlockSpec((1, D), lambda b: (0, 0)),
                pl.BlockSpec((1, D), lambda b: (0, 0)),
            ],
            out_specs=pl.BlockSpec((1, S, D), lambda b: (b, 0, 0)),
        ),
        compiler_params=pltpu.CompilerParams(
            dimension_semantics=("parallel",),
            vmem_limit_bytes=_vmem_limit_bytes()),
    )(x, mem, wq, bq, wkv, bkv, wo, bo, gamma, beta)


# ----------------------------- JAX glue (model) -------------------------------

def decoder_layer_forward(x, mem, p, n_heads):
    """PyTorch TransformerDecoderLayer (post-norm, ReLU), dropout disabled.
    x: (B, S, D) batch-major residual stream; mem: (B, Sm, D)."""
    B, S, D = x.shape

    # --- self-attention block: QKV proj + attn + out-proj + residual + LN, fused ---
    x = self_attn_block_pallas(x, p["sa_wqkv"], p["sa_bqkv"], p["sa_wo"], p["sa_bo"],
                               p["ln1_g"], p["ln1_b"], n_heads)

    # --- cross-attention block: Q/KV proj + attn + out-proj + residual + LN, fused ---
    x = cross_attn_block_pallas(x, mem, p["ca_wq"], p["ca_bq"], p["ca_wkv"], p["ca_bkv"],
                                p["ca_wo"], p["ca_bo"], p["ln2_g"], p["ln2_b"], n_heads)

    # --- FFN: linear+ReLU (bf16 activation), then fused linear+residual+LayerNorm ---
    x_flat = x.reshape(B * S, D)
    h = linear_pallas(x_flat, p["ff_w1"], p["ff_b1"], relu=True, out_dtype=jnp.bfloat16)
    y = matmul_res_ln_pallas(h, p["ff_w2"], p["ff_b2"], x_flat, p["ln3_g"], p["ln3_b"])
    return y.reshape(B, S, D)


def positional_encoding(seq_len, d):
    pos = jnp.arange(seq_len, dtype=jnp.float32)[:, None]
    div = jnp.exp(jnp.arange(0, d, 2, dtype=jnp.float32) * (-math.log(10000.0) / d))
    pe = jnp.zeros((seq_len, d), jnp.float32)
    pe = pe.at[:, 0::2].set(jnp.sin(pos * div))
    pe = pe.at[:, 1::2].set(jnp.cos(pos * div)[:, : d // 2])
    return pe


def decoder_forward(target, memory, params, n_heads, n_layers):
    """Decoder.forward(target, memory, module='train').  target:(S,B,Din), memory:(Sm,B,2*Din)."""
    S, B, Din = target.shape
    D = 2 * Din

    # PositionalEncoding: concat PE along feature dim (see header comment).
    pe = positional_encoding(S, Din)
    x = jnp.concatenate([target, jnp.broadcast_to(pe[:, None, :], (S, B, Din))], axis=-1)

    # Switch to batch-major ONCE for the whole stack (3 layout transposes total).
    x = x.transpose(1, 0, 2)                # (B, S, D)
    mem = memory.transpose(1, 0, 2)         # (B, Sm, D)

    for l in range(n_layers):
        x = decoder_layer_forward(x, mem, params["layers"][l], n_heads)

    # Final projection with lane-dense (padded-to-128) output; slice the pad off outside.
    out_pad = linear_pallas(x.reshape(B * S, D), params["final_w"], params["final_b"])
    out = out_pad[:, :Din] if out_pad.shape[1] != Din else out_pad
    return out.reshape(B, S, Din).transpose(1, 0, 2)    # back to (S, B, Din)


# ----------------------------- param init -------------------------------------
# Weights are stored "prepared": (K, N) layout (torch weight.T, transposed ONCE here, never
# per forward) and bf16 for MXU operands.  Biases / LN params stay f32, shaped (1, N) for
# direct in-kernel broadcast.  The attention 1/sqrt(Dh) scale is applied in-kernel to the f32
# scores, so real PyTorch checkpoints can be loaded without any rescaling.

def init_params(key, output_dim, n_heads, n_layers, d_ff=2048):
    D = output_dim * 2
    keys = iter(jax.random.split(key, n_layers * 8 + 2))

    def w(*shape):
        return 0.02 * jax.random.normal(next(keys), shape, jnp.float32)

    def zeros(*shape):
        return jnp.zeros(shape, jnp.float32)

    layers = []
    for _ in range(n_layers):
        layers.append({
            "sa_wqkv": w(D, 3 * D).astype(jnp.bfloat16), "sa_bqkv": zeros(1, 3 * D),
            "sa_wo": w(D, D).astype(jnp.bfloat16), "sa_bo": zeros(1, D),
            "ca_wq": w(D, D).astype(jnp.bfloat16), "ca_bq": zeros(1, D),
            "ca_wkv": w(D, 2 * D).astype(jnp.bfloat16), "ca_bkv": zeros(1, 2 * D),
            "ca_wo": w(D, D).astype(jnp.bfloat16), "ca_bo": zeros(1, D),
            "ff_w1": w(D, d_ff).astype(jnp.bfloat16), "ff_b1": zeros(1, d_ff),
            "ff_w2": w(d_ff, D).astype(jnp.bfloat16), "ff_b2": zeros(1, D),
            "ln1_g": jnp.ones((1, D), jnp.float32), "ln1_b": zeros(1, D),
            "ln2_g": jnp.ones((1, D), jnp.float32), "ln2_b": zeros(1, D),
            "ln3_g": jnp.ones((1, D), jnp.float32), "ln3_b": zeros(1, D),
        })

    # Pad final projection to a lane-dense multiple of 128 output columns (zeros are sliced
    # off in decoder_forward) -> unmasked vector stores instead of masked partial stores.
    n_pad = max(128, ((output_dim + 127) // 128) * 128)
    fw = jnp.zeros((D, n_pad), jnp.float32).at[:, :output_dim].set(w(D, output_dim))
    return {
        "layers": layers,
        "final_w": fw.astype(jnp.bfloat16),
        "final_b": zeros(1, n_pad),
    }


# ----------------------------- demo --------------------------------------------

if __name__ == "__main__":
    output_dim, n_heads, n_layers, dropout = 16, 4, 2, 0.1   # Decoder(__init__) args
    TRG_LEN, BATCH, MEM_LEN = 8, 2, 8

    key = jax.random.PRNGKey(0)
    k_t, k_m, k_p = jax.random.split(key, 3)
    target = jax.random.normal(k_t, (TRG_LEN, BATCH, output_dim), jnp.float32)
    memory = jax.random.normal(k_m, (MEM_LEN, BATCH, 2 * output_dim), jnp.float32)
    params = init_params(k_p, output_dim, n_heads, n_layers)

    fwd = jax.jit(functools.partial(decoder_forward, n_heads=n_heads, n_layers=n_layers))
    out = jax.block_until_ready(fwd(target, memory, params))

    assert out.shape == (TRG_LEN, BATCH, output_dim)
    assert bool(jnp.all(jnp.isfinite(out)))
    print("KERNEL_OK")
</pallas_src>

<mosaic_0001>
module attributes {stable_mosaic.version = 11 : i64} {
  func.func @_self_attn_block_kernel(%arg0: i32, %arg1: memref<1x8x32xf32, #tpu.memory_space<vmem>>, %arg2: memref<32x96xbf16, #tpu.memory_space<vmem>>, %arg3: memref<1x96xf32, #tpu.memory_space<vmem>>, %arg4: memref<32x32xbf16, #tpu.memory_space<vmem>>, %arg5: memref<1x32xf32, #tpu.memory_space<vmem>>, %arg6: memref<1x32xf32, #tpu.memory_space<vmem>>, %arg7: memref<1x32xf32, #tpu.memory_space<vmem>>, %arg8: memref<1x8x32xf32, #tpu.memory_space<vmem>>) attributes {dimension_semantics = [#tpu.dimension_semantics<parallel>], iteration_bounds = array<i64: 2>, scalar_prefetch = 0 : i64, scratch_operands = 0 : i64, tpu.core_type = #tpu.core_type<tc>, window_params = [{transform_indices = @transform_0, window_bounds = array<i64: 1, 8, 32>}, {pipeline_mode = #tpu.pipeline_mode<synchronous>, transform_indices = @transform_1, window_bounds = array<i64: 32, 96>}, {pipeline_mode = #tpu.pipeline_mode<synchronous>, transform_indices = @transform_2, window_bounds = array<i64: 1, 96>}, {pipeline_mode = #tpu.pipeline_mode<synchronous>, transform_indices = @transform_3, window_bounds = array<i64: 32, 32>}, {pipeline_mode = #tpu.pipeline_mode<synchronous>, transform_indices = @transform_4, window_bounds = array<i64: 1, 32>}, {pipeline_mode = #tpu.pipeline_mode<synchronous>, transform_indices = @transform_5, window_bounds = array<i64: 1, 32>}, {pipeline_mode = #tpu.pipeline_mode<synchronous>, transform_indices = @transform_6, window_bounds = array<i64: 1, 32>}, {transform_indices = @transform_7, window_bounds = array<i64: 1, 8, 32>}]} {
    %c0 = arith.constant 0 : index
    %c0_0 = arith.constant 0 : index
    %c0_1 = arith.constant 0 : index
    %0 = vector.load %arg1[%c0, %c0_0, %c0_1] : memref<1x8x32xf32, #tpu.memory_space<vmem>>, vector<1x8x32xf32>
    %1 = vector.shape_cast %0 : vector<1x8x32xf32> to vector<8x32xf32>
    %2 = arith.truncf %1 : vector<8x32xf32> to vector<8x32xbf16>
    %c0_2 = arith.constant 0 : index
    %c0_3 = arith.constant 0 : index
    %3 = vector.load %arg2[%c0_2, %c0_3] : memref<32x96xbf16, #tpu.memory_space<vmem>>, vector<32x96xbf16>
    %cst = arith.constant dense<0.000000e+00> : vector<8x96xf32>
    %4 = tpu.matmul %2, %3, %cst {dimension_numbers = #tpu.dot_dimension_numbers<[1], [0], [0], [1], [0, 0, 1, 1], [], []>} : vector<8x32xbf16>, vector<32x96xbf16>, vector<8x96xf32> -> vector<8x96xf32>
    %c0_4 = arith.constant 0 : index
    %c0_5 = arith.constant 0 : index
    %5 = vector.load %arg3[%c0_4, %c0_5] : memref<1x96xf32, #tpu.memory_space<vmem>>, vector<1x96xf32>
    %6 = vector.broadcast %5 : vector<1x96xf32> to vector<8x96xf32>
    %7 = arith.addf %4, %6 : vector<8x96xf32>
    %8 = tpu.iota {dimensions = array<i32: 0>} : vector<8x8xi32>
    %9 = tpu.iota {dimensions = array<i32: 1>} : vector<8x8xi32>
    %10 = arith.cmpi sle, %9, %8 : vector<8x8xi32>
    %11 = vector.extract_strided_slice %7 {offsets = [0, 0], sizes = [8, 32], strides = [1, 1]} : vector<8x96xf32> to vector<8x32xf32>
    %12 = vector.extract_strided_slice %7 {offsets = [0, 32], sizes = [8, 32], strides = [1, 1]} : vector<8x96xf32> to vector<8x32xf32>
    %13 = vector.extract_strided_slice %7 {offsets = [0, 64], sizes = [8, 32], strides = [1, 1]} : vector<8x96xf32> to vector<8x32xf32>
    %c0_6 = arith.constant 0 : index
    %c0_7 = arith.constant 0 : index
    %14 = vector.load %arg4[%c0_6, %c0_7] : memref<32x32xbf16, #tpu.memory_space<vmem>>, vector<32x32xbf16>
    %cst_8 = arith.constant 0.000000e+00 : f32
    %15 = vector.broadcast %cst_8 : f32 to vector<8x32xf32>
    %16 = vector.extract_strided_slice %11 {offsets = [0, 0], sizes = [8, 8], strides = [1, 1]} : vector<8x32xf32> to vector<8x8xf32>
    %17 = arith.truncf %16 : vector<8x8xf32> to vector<8x8xbf16>
    %18 = vector.extract_strided_slice %12 {offsets = [0, 0], sizes = [8, 8], strides = [1, 1]} : vector<8x32xf32> to vector<8x8xf32>
    %19 = arith.truncf %18 : vector<8x8xf32> to vector<8x8xbf16>
    %20 = vector.extract_strided_slice %13 {offsets = [0, 0], sizes = [8, 8], strides = [1, 1]} : vector<8x32xf32> to vector<8x8xf32>
    %21 = arith.truncf %20 : vector<8x8xf32> to vector<8x8xbf16>
    %cst_9 = arith.constant dense<0.000000e+00> : vector<8x8xf32>
    %22 = tpu.matmul %17, %19, %cst_9 {dimension_numbers = #tpu.dot_dimension_numbers<[1], [1], [0], [0], [0, 0, 1, 0], [], []>} : vector<8x8xbf16>, vector<8x8xbf16>, vector<8x8xf32> -> vector<8x8xf32>
    %cst_10 = arith.constant 0.353553385 : f32
    %23 = vector.broadcast %cst_10 : f32 to vector<8x8xf32>
    %24 = arith.mulf %22, %23 : vector<8x8xf32>
    %cst_11 = arith.constant 0xFF800000 : f32
    %25 = vector.broadcast %cst_11 : f32 to vector<8x8xf32>
    %26 = arith.select %10, %24, %25 : vector<8x8xi1>, vector<8x8xf32>
    %cst_12 = arith.constant dense<0xFF800000> : vector<8xf32>
    %27 = vector.multi_reduction <maximumf>, %26, %cst_12 [1] : vector<8x8xf32> to vector<8xf32>
    %28 = vector.shape_cast %27 : vector<8xf32> to vector<8x1xf32>
    %29 = vector.broadcast %28 : vector<8x1xf32> to vector<8x8xf32>
    %30 = arith.subf %26, %29 : vector<8x8xf32>
    %31 = math.exp %30 : vector<8x8xf32>
    %cst_13 = arith.constant dense<0.000000e+00> : vector<8xf32>
    %32 = vector.multi_reduction <add>, %31, %cst_13 [1] : vector<8x8xf32> to vector<8xf32>
    %33 = vector.shape_cast %32 : vector<8xf32> to vector<8x1xf32>
    %34 = tpu.reciprocal %33 {approx = true} : vector<8x1xf32> -> vector<8x1xf32>
    %35 = vector.broadcast %34 : vector<8x1xf32> to vector<8x8xf32>
    %36 = arith.mulf %31, %35 : vector<8x8xf32>
    %37 = arith.truncf %36 : vector<8x8xf32> to vector<8x8xbf16>
    %cst_14 = arith.constant dense<0.000000e+00> : vector<8x8xf32>
    %38 = tpu.matmul %37, %21, %cst_14 {dimension_numbers = #tpu.dot_dimension_numbers<[1], [0], [0], [1], [0, 0, 1, 1], [], []>} : vector<8x8xbf16>, vector<8x8xbf16>, vector<8x8xf32> -> vector<8x8xf32>
    %39 = arith.truncf %38 : vector<8x8xf32> to vector<8x8xbf16>
    %40 = vector.extract_strided_slice %14 {offsets = [0, 0], sizes = [8, 32], strides = [1, 1]} : vector<32x32xbf16> to vector<8x32xbf16>
    %cst_15 = arith.constant dense<0.000000e+00> : vector<8x32xf32>
    %41 = tpu.matmul %39, %40, %cst_15 {dimension_numbers = #tpu.dot_dimension_numbers<[1], [0], [0], [1], [0, 0, 1, 1], [], []>} : vector<8x8xbf16>, vector<8x32xbf16>, vector<8x32xf32> -> vector<8x32xf32>
    %42 = arith.addf %15, %41 : vector<8x32xf32>
    %43 = vector.extract_strided_slice %11 {offsets = [0, 8], sizes = [8, 8], strides = [1, 1]} : vector<8x32xf32> to vector<8x8xf32>
    %44 = arith.truncf %43 : vector<8x8xf32> to vector<8x8xbf16>
    %45 = vector.extract_strided_slice %12 {offsets = [0, 8], sizes = [8, 8], strides = [1, 1]} : vector<8x32xf32> to vector<8x8xf32>
    %46 = arith.truncf %45 : vector<8x8xf32> to vector<8x8xbf16>
    %47 = vector.extract_strided_slice %13 {offsets = [0, 8], sizes = [8, 8], strides = [1, 1]} : vector<8x32xf32> to vector<8x8xf32>
    %48 = arith.truncf %47 : vector<8x8xf32> to vector<8x8xbf16>
    %cst_16 = arith.constant dense<0.000000e+00> : vector<8x8xf32>
    %49 = tpu.matmul %44, %46, %cst_16 {dimension_numbers = #tpu.dot_dimension_numbers<[1], [1], [0], [0], [0, 0, 1, 0], [], []>} : vector<8x8xbf16>, vector<8x8xbf16>, vector<8x8xf32> -> vector<8x8xf32>
    %cst_17 = arith.constant 0.353553385 : f32
    %50 = vector.broadcast %cst_17 : f32 to vector<8x8xf32>
    %51 = arith.mulf %49, %50 : vector<8x8xf32>
    %cst_18 = arith.constant 0xFF800000 : f32
    %52 = vector.broadcast %cst_18 : f32 to vector<8x8xf32>
    %53 = arith.select %10, %51, %52 : vector<8x8xi1>, vector<8x8xf32>
    %cst_19 = arith.constant dense<0xFF800000> : vector<8xf32>
    %54 = vector.multi_reduction <maximumf>, %53, %cst_19 [1] : vector<8x8xf32> to vector<8xf32>
    %55 = vector.shape_cast %54 : vector<8xf32> to vector<8x1xf32>
    %56 = vector.broadcast %55 : vector<8x1xf32> to vector<8x8xf32>
    %57 = arith.subf %53, %56 : vector<8x8xf32>
    %58 = math.exp %57 : vector<8x8xf32>
    %cst_20 = arith.constant dense<0.000000e+00> : vector<8xf32>
    %59 = vector.multi_reduction <add>, %58, %cst_20 [1] : vector<8x8xf32> to vector<8xf32>
    %60 = vector.shape_cast %59 : vector<8xf32> to vector<8x1xf32>
    %61 = tpu.reciprocal %60 {approx = true} : vector<8x1xf32> -> vector<8x1xf32>
    %62 = vector.broadcast %61 : vector<8x1xf32> to vector<8x8xf32>
    %63 = arith.mulf %58, %62 : vector<8x8xf32>
    %64 = arith.truncf %63 : vector<8x8xf32> to vector<8x8xbf16>
    %cst_21 = arith.constant dense<0.000000e+00> : vector<8x8xf32>
    %65 = tpu.matmul %64, %48, %cst_21 {dimension_numbers = #tpu.dot_dimension_numbers<[1], [0], [0], [1], [0, 0, 1, 1], [], []>} : vector<8x8xbf16>, vector<8x8xbf16>, vector<8x8xf32> -> vector<8x8xf32>
    %66 = arith.truncf %65 : vector<8x8xf32> to vector<8x8xbf16>
    %67 = vector.extract_strided_slice %14 {offsets = [8, 0], sizes = [8, 32], strides = [1, 1]} : vector<32x32xbf16> to vector<8x32xbf16>
    %cst_22 = arith.constant dense<0.000000e+00> : vector<8x32xf32>
    %68 = tpu.matmul %66, %67, %cst_22 {dimension_numbers = #tpu.dot_dimension_numbers<[1], [0], [0], [1], [0, 0, 1, 1], [], []>} : vector<8x8xbf16>, vector<8x32xbf16>, vector<8x32xf32> -> vector<8x32xf32>
    %69 = arith.addf %42, %68 : vector<8x32xf32>
    %70 = vector.extract_strided_slice %11 {offsets = [0, 16], sizes = [8, 8], strides = [1, 1]} : vector<8x32xf32> to vector<8x8xf32>
    %71 = arith.truncf %70 : vector<8x8xf32> to vector<8x8xbf16>
    %72 = vector.extract_strided_slice %12 {offsets = [0, 16], sizes = [8, 8], strides = [1, 1]} : vector<8x32xf32> to vector<8x8xf32>
    %73 = arith.truncf %72 : vector<8x8xf32> to vector<8x8xbf16>
    %74 = vector.extract_strided_slice %13 {offsets = [0, 16], sizes = [8, 8], strides = [1, 1]} : vector<8x32xf32> to vector<8x8xf32>
    %75 = arith.truncf %74 : vector<8x8xf32> to vector<8x8xbf16>
    %cst_23 = arith.constant dense<0.000000e+00> : vector<8x8xf32>
    %76 = tpu.matmul %71, %73, %cst_23 {dimension_numbers = #tpu.dot_dimension_numbers<[1], [1], [0], [0], [0, 0, 1, 0], [], []>} : vector<8x8xbf16>, vector<8x8xbf16>, vector<8x8xf32> -> vector<8x8xf32>
    %cst_24 = arith.constant 0.353553385 : f32
    %77 = vector.broadcast %cst_24 : f32 to vector<8x8xf32>
    %78 = arith.mulf %76, %77 : vector<8x8xf32>
    %cst_25 = arith.constant 0xFF800000 : f32
    %79 = vector.broadcast %cst_25 : f32 to vector<8x8xf32>
    %80 = arith.select %10, %78, %79 : vector<8x8xi1>, vector<8x8xf32>
    %cst_26 = arith.constant dense<0xFF800000> : vector<8xf32>
    %81 = vector.multi_reduction <maximumf>, %80, %cst_26 [1] : vector<8x8xf32> to vector<8xf32>
    %82 = vector.shape_cast %81 : vector<8xf32> to vector<8x1xf32>
    %83 = vector.broadcast %82 : vector<8x1xf32> to vector<8x8xf32>
    %84 = arith.subf %80, %83 : vector<8x8xf32>
    %85 = math.exp %84 : vector<8x8xf32>
    %cst_27 = arith.constant dense<0.000000e+00> : vector<8xf32>
    %86 = vector.multi_reduction <add>, %85, %cst_27 [1] : vector<8x8xf32> to vector<8xf32>
    %87 = vector.shape_cast %86 : vector<8xf32> to vector<8x1xf32>
    %88 = tpu.reciprocal %87 {approx = true} : vector<8x1xf32> -> vector<8x1xf32>
    %89 = vector.broadcast %88 : vector<8x1xf32> to vector<8x8xf32>
    %90 = arith.mulf %85, %89 : vector<8x8xf32>
    %91 = arith.truncf %90 : vector<8x8xf32> to vector<8x8xbf16>
    %cst_28 = arith.constant dense<0.000000e+00> : vector<8x8xf32>
    %92 = tpu.matmul %91, %75, %cst_28 {dimension_numbers = #tpu.dot_dimension_numbers<[1], [0], [0], [1], [0, 0, 1, 1], [], []>} : vector<8x8xbf16>, vector<8x8xbf16>, vector<8x8xf32> -> vector<8x8xf32>
    %93 = arith.truncf %92 : vector<8x8xf32> to vector<8x8xbf16>
    %94 = vector.extract_strided_slice %14 {offsets = [16, 0], sizes = [8, 32], strides = [1, 1]} : vector<32x32xbf16> to vector<8x32xbf16>
    %cst_29 = arith.constant dense<0.000000e+00> : vector<8x32xf32>
    %95 = tpu.matmul %93, %94, %cst_29 {dimension_numbers = #tpu.dot_dimension_numbers<[1], [0], [0], [1], [0, 0, 1, 1], [], []>} : vector<8x8xbf16>, vector<8x32xbf16>, vector<8x32xf32> -> vector<8x32xf32>
    %96 = arith.addf %69, %95 : vector<8x32xf32>
    %97 = vector.extract_strided_slice %11 {offsets = [0, 24], sizes = [8, 8], strides = [1, 1]} : vector<8x32xf32> to vector<8x8xf32>
    %98 = arith.truncf %97 : vector<8x8xf32> to vector<8x8xbf16>
    %99 = vector.extract_strided_slice %12 {offsets = [0, 24], sizes = [8, 8], strides = [1, 1]} : vector<8x32xf32> to vector<8x8xf32>
    %100 = arith.truncf %99 : vector<8x8xf32> to vector<8x8xbf16>
    %101 = vector.extract_strided_slice %13 {offsets = [0, 24], sizes = [8, 8], strides = [1, 1]} : vector<8x32xf32> to vector<8x8xf32>
    %102 = arith.truncf %101 : vector<8x8xf32> to vector<8x8xbf16>
    %cst_30 = arith.constant dense<0.000000e+00> : vector<8x8xf32>
    %103 = tpu.matmul %98, %100, %cst_30 {dimension_numbers = #tpu.dot_dimension_numbers<[1], [1], [0], [0], [0, 0, 1, 0], [], []>} : vector<8x8xbf16>, vector<8x8xbf16>, vector<8x8xf32> -> vector<8x8xf32>
    %cst_31 = arith.constant 0.353553385 : f32
    %104 = vector.broadcast %cst_31 : f32 to vector<8x8xf32>
    %105 = arith.mulf %103, %104 : vector<8x8xf32>
    %cst_32 = arith.constant 0xFF800000 : f32
    %106 = vector.broadcast %cst_32 : f32 to vector<8x8xf32>
    %107 = arith.select %10, %105, %106 : vector<8x8xi1>, vector<8x8xf32>
    %cst_33 = arith.constant dense<0xFF800000> : vector<8xf32>
    %108 = vector.multi_reduction <maximumf>, %107, %cst_33 [1] : vector<8x8xf32> to vector<8xf32>
    %109 = vector.shape_cast %108 : vector<8xf32> to vector<8x1xf32>
    %110 = vector.broadcast %109 : vector<8x1xf32> to vector<8x8xf32>
    %111 = arith.subf %107, %110 : vector<8x8xf32>
    %112 = math.exp %111 : vector<8x8xf32>
    %cst_34 = arith.constant dense<0.000000e+00> : vector<8xf32>
    %113 = vector.multi_reduction <add>, %112, %cst_34 [1] : vector<8x8xf32> to vector<8xf32>
    %114 = vector.shape_cast %113 : vector<8xf32> to vector<8x1xf32>
    %115 = tpu.reciprocal %114 {approx = true} : vector<8x1xf32> -> vector<8x1xf32>
    %116 = vector.broadcast %115 : vector<8x1xf32> to vector<8x8xf32>
    %117 = arith.mulf %112, %116 : vector<8x8xf32>
    %118 = arith.truncf %117 : vector<8x8xf32> to vector<8x8xbf16>
    %cst_35 = arith.constant dense<0.000000e+00> : vector<8x8xf32>
    %119 = tpu.matmul %118, %102, %cst_35 {dimension_numbers = #tpu.dot_dimension_numbers<[1], [0], [0], [1], [0, 0, 1, 1], [], []>} : vector<8x8xbf16>, vector<8x8xbf16>, vector<8x8xf32> -> vector<8x8xf32>
    %120 = arith.truncf %119 : vector<8x8xf32> to vector<8x8xbf16>
    %121 = vector.extract_strided_slice %14 {offsets = [24, 0], sizes = [8, 32], strides = [1, 1]} : vector<32x32xbf16> to vector<8x32xbf16>
    %cst_36 = arith.constant dense<0.000000e+00> : vector<8x32xf32>
    %122 = tpu.matmul %120, %121, %cst_36 {dimension_numbers = #tpu.dot_dimension_numbers<[1], [0], [0], [1], [0, 0, 1, 1], [], []>} : vector<8x8xbf16>, vector<8x32xbf16>, vector<8x32xf32> -> vector<8x32xf32>
    %123 = arith.addf %96, %122 : vector<8x32xf32>
    %c0_37 = arith.constant 0 : index
    %c0_38 = arith.constant 0 : index
    %124 = vector.load %arg5[%c0_37, %c0_38] : memref<1x32xf32, #tpu.memory_space<vmem>>, vector<1x32xf32>
    %125 = vector.broadcast %124 : vector<1x32xf32> to vector<8x32xf32>
    %126 = arith.addf %123, %125 : vector<8x32xf32>
    %127 = arith.addf %126, %1 : vector<8x32xf32>
    %c0_39 = arith.constant 0 : index
    %c0_40 = arith.constant 0 : index
    %128 = vector.load %arg6[%c0_39, %c0_40] : memref<1x32xf32, #tpu.memory_space<vmem>>, vector<1x32xf32>
    %c0_41 = arith.constant 0 : index
    %c0_42 = arith.constant 0 : index
    %129 = vector.load %arg7[%c0_41, %c0_42] : memref<1x32xf32, #tpu.memory_space<vmem>>, vector<1x32xf32>
    %cst_43 = arith.constant dense<0.000000e+00> : vector<8xf32>
    %130 = vector.multi_reduction <add>, %127, %cst_43 [1] : vector<8x32xf32> to vector<8xf32>
    %131 = vector.shape_cast %130 : vector<8xf32> to vector<8x1xf32>
    %cst_44 = arith.constant 3.200000e+01 : f32
    %132 = vector.broadcast %cst_44 : f32 to vector<8x1xf32>
    %133 = arith.divf %131, %132 : vector<8x1xf32>
    %134 = vector.broadcast %133 : vector<8x1xf32> to vector<8x32xf32>
    %135 = arith.subf %127, %134 : vector<8x32xf32>
    %136 = arith.mulf %135, %135 : vector<8x32xf32>
    %cst_45 = arith.constant dense<0.000000e+00> : vector<8xf32>
    %137 = vector.multi_reduction <add>, %136, %cst_45 [1] : vector<8x32xf32> to vector<8xf32>
    %138 = vector.shape_cast %137 : vector<8xf32> to vector<8x1xf32>
    %cst_46 = arith.constant 3.200000e+01 : f32
    %139 = vector.broadcast %cst_46 : f32 to vector<8x1xf32>
    %140 = arith.divf %138, %139 : vector<8x1xf32>
    %141 = vector.broadcast %133 : vector<8x1xf32> to vector<8x32xf32>
    %142 = arith.subf %127, %141 : vector<8x32xf32>
    %cst_47 = arith.constant 9.99999974E-6 : f32
    %143 = vector.broadcast %cst_47 : f32 to vector<8x1xf32>
    %144 = arith.addf %140, %143 : vector<8x1xf32>
    %145 = math.rsqrt %144 : vector<8x1xf32>
    %146 = vector.broadcast %145 : vector<8x1xf32> to vector<8x32xf32>
    %147 = arith.mulf %142, %146 : vector<8x32xf32>
    %148 = vector.broadcast %128 : vector<1x32xf32> to vector<8x32xf32>
    %149 = arith.mulf %147, %148 : vector<8x32xf32>
    %150 = vector.broadcast %129 : vector<1x32xf32> to vector<8x32xf32>
    %151 = arith.addf %149, %150 : vector<8x32xf32>
    %c0_48 = arith.constant 0 : index
    %c0_49 = arith.constant 0 : index
    %c0_50 = arith.constant 0 : index
    %152 = vector.load %arg8[%c0_48, %c0_49, %c0_50] : memref<1x8x32xf32, #tpu.memory_space<vmem>>, vector<1x8x32xf32>
    %153 = vector.shape_cast %152 : vector<1x8x32xf32> to vector<8x32xf32>
    %154 = vector.shape_cast %151 : vector<8x32xf32> to vector<1x8x32xf32>
    tpu.vector_store %arg8[%c0_48, %c0_49, %c0_50], %154 {strides = array<i32>} : memref<1x8x32xf32, #tpu.memory_space<vmem>>, vector<1x8x32xf32>,
    return
  }
  func.func @transform_0(%arg0: i32) -> (i32, i32, i32) {
    %c0_i32 = arith.constant 0 : i32
    %c0_i32_0 = arith.constant 0 : i32
    %c0_i32_1 = arith.constant 0 : i32
    return %arg0, %c0_i32, %c0_i32_0 : i32, i32, i32
  }
  func.func @transform_1(%arg0: i32) -> (i32, i32) {
    %c0_i32 = arith.constant 0 : i32
    %c0_i32_0 = arith.constant 0 : i32
    %c0_i32_1 = arith.constant 0 : i32
    return %c0_i32, %c0_i32_0 : i32, i32
  }
  func.func @transform_2(%arg0: i32) -> (i32, i32) {
    %c0_i32 = arith.constant 0 : i32
    %c0_i32_0 = arith.constant 0 : i32
    %c0_i32_1 = arith.constant 0 : i32
    return %c0_i32, %c0_i32_0 : i32, i32
  }
  func.func @transform_3(%arg0: i32) -> (i32, i32) {
    %c0_i32 = arith.constant 0 : i32
    %c0_i32_0 = arith.constant 0 : i32
    %c0_i32_1 = arith.constant 0 : i32
    return %c0_i32, %c0_i32_0 : i32, i32
  }
  func.func @transform_4(%arg0: i32) -> (i32, i32) {
    %c0_i32 = arith.constant 0 : i32
    %c0_i32_0 = arith.constant 0 : i32
    %c0_i32_1 = arith.constant 0 : i32
    return %c0_i32, %c0_i32_0 : i32, i32
  }
  func.func @transform_5(%arg0: i32) -> (i32, i32) {
    %c0_i32 = arith.constant 0 : i32
    %c0_i32_0 = arith.constant 0 : i32
    %c0_i32_1 = arith.constant 0 : i32
    return %c0_i32, %c0_i32_0 : i32, i32
  }
  func.func @transform_6(%arg0: i32) -> (i32, i32) {
    %c0_i32 = arith.constant 0 : i32
    %c0_i32_0 = arith.constant 0 : i32
    %c0_i32_1 = arith.constant 0 : i32
    return %c0_i32, %c0_i32_0 : i32, i32
  }
  func.func @transform_7(%arg0: i32) -> (i32, i32, i32) {
    %c0_i32 = arith.constant 0 : i32
    %c0_i32_0 = arith.constant 0 : i32
    %c0_i32_1 = arith.constant 0 : i32
    return %arg0, %c0_i32, %c0_i32_0 : i32, i32, i32
  }
}

module attributes {stable_mosaic.version = 11 : i64} {
  func.func @_linear_bf16_kernel(%arg0: i32, %arg1: i32, %arg2: i32, %arg3: memref<16x32xf32, #tpu.memory_space<vmem>>, %arg4: memref<32x512xbf16, #tpu.memory_space<vmem>>, %arg5: memref<1x512xf32, #tpu.memory_space<vmem>>, %arg6: memref<16x512xbf16, #tpu.memory_space<vmem>>, %arg7: memref<16x512xf32, #tpu.memory_space<vmem>>) attributes {dimension_semantics = [#tpu.dimension_semantics<parallel>, #tpu.dimension_semantics<parallel>, #tpu.dimension_semantics<arbitrary>], iteration_bounds = array<i64: 1, 4, 1>, scalar_prefetch = 0 : i64, scratch_operands = 1 : i64, tpu.core_type = #tpu.core_type<tc>, window_params = [{transform_indices = @transform_0, window_bounds = array<i64: 16, 32>}, {transform_indices = @transform_1, window_bounds = array<i64: 32, 512>}, {transform_indices = @transform_2, window_bounds = array<i64: 1, 512>}, {transform_indices = @transform_3, window_bounds = array<i64: 16, 512>}]} {
    %c0_i32 = arith.constant 0 : i32
    %0 = arith.cmpi eq, %arg2, %c0_i32 : i32
    %1 = arith.extui %0 : i1 to i32
    %c0_i32_0 = arith.constant 0 : i32
    %2 = arith.cmpi ne, %1, %c0_i32_0 : i32
    scf.if %2 {
      %cst_10 = arith.constant 0.000000e+00 : f32
      %13 = vector.broadcast %cst_10 : f32 to vector<16x512xf32>
      %c0_11 = arith.constant 0 : index
      %c0_12 = arith.constant 0 : index
      %14 = vector.load %arg7[%c0_11, %c0_12] : memref<16x512xf32, #tpu.memory_space<vmem>>, vector<16x512xf32>
      tpu.vector_store %arg7[%c0_11, %c0_12], %13 {strides = array<i32>} : memref<16x512xf32, #tpu.memory_space<vmem>>, vector<16x512xf32>,
    } else {
    }
    %c0 = arith.constant 0 : index
    %c0_1 = arith.constant 0 : index
    %3 = vector.load %arg7[%c0, %c0_1] : memref<16x512xf32, #tpu.memory_space<vmem>>, vector<16x512xf32>
    %c0_2 = arith.constant 0 : index
    %c0_3 = arith.constant 0 : index
    %4 = vector.load %arg3[%c0_2, %c0_3] : memref<16x32xf32, #tpu.memory_space<vmem>>, vector<16x32xf32>
    %5 = arith.truncf %4 : vector<16x32xf32> to vector<16x32xbf16>
    %c0_4 = arith.constant 0 : index
    %c0_5 = arith.constant 0 : index
    %6 = vector.load %arg4[%c0_4, %c0_5] : memref<32x512xbf16, #tpu.memory_space<vmem>>, vector<32x512xbf16>
    %cst = arith.constant dense<0.000000e+00> : vector<16x512xf32>
    %7 = tpu.matmul %5, %6, %cst {dimension_numbers = #tpu.dot_dimension_numbers<[1], [0], [0], [1], [0, 0, 1, 1], [], []>} : vector<16x32xbf16>, vector<32x512xbf16>, vector<16x512xf32> -> vector<16x512xf32>
    %8 = arith.addf %3, %7 : vector<16x512xf32>
    %c0_6 = arith.constant 0 : index
    %c0_7 = arith.constant 0 : index
    %9 = vector.load %arg7[%c0_6, %c0_7] : memref<16x512xf32, #tpu.memory_space<vmem>>, vector<16x512xf32>
    tpu.vector_store %arg7[%c0_6, %c0_7], %8 {strides = array<i32>} : memref<16x512xf32, #tpu.memory_space<vmem>>, vector<16x512xf32>,
    %c0_i32_8 = arith.constant 0 : i32
    %10 = arith.cmpi eq, %arg2, %c0_i32_8 : i32
    %11 = arith.extui %10 : i1 to i32
    %c0_i32_9 = arith.constant 0 : i32
    %12 = arith.cmpi ne, %11, %c0_i32_9 : i32
    scf.if %12 {
      %c0_10 = arith.constant 0 : index
      %c0_11 = arith.constant 0 : index
      %13 = vector.load %arg7[%c0_10, %c0_11] : memref<16x512xf32, #tpu.memory_space<vmem>>, vector<16x512xf32>
      %c0_12 = arith.constant 0 : index
      %c0_13 = arith.constant 0 : index
      %14 = vector.load %arg5[%c0_12, %c0_13] : memref<1x512xf32, #tpu.memory_space<vmem>>, vector<1x512xf32>
      %15 = vector.broadcast %14 : vector<1x512xf32> to vector<16x512xf32>
      %16 = arith.addf %13, %15 : vector<16x512xf32>
      %cst_14 = arith.constant 0.000000e+00 : f32
      %17 = vector.broadcast %cst_14 : f32 to vector<16x512xf32>
      %18 = arith.maximumf %16, %17 : vector<16x512xf32>
      %19 = arith.truncf %18 : vector<16x512xf32> to vector<16x512xbf16>
      %c0_15 = arith.constant 0 : index
      %c0_16 = arith.constant 0 : index
      %20 = vector.load %arg6[%c0_15, %c0_16] : memref<16x512xbf16, #tpu.memory_space<vmem>>, vector<16x512xbf16>
      tpu.vector_store %arg6[%c0_15, %c0_16], %19 {strides = array<i32>} : memref<16x512xbf16, #tpu.memory_space<vmem>>, vector<16x512xbf16>,
    } else {
    }
    return
  }
  func.func @transform_0(%arg0: i32, %arg1: i32, %arg2: i32) -> (i32, i32) {
    %c0_i32 = arith.constant 0 : i32
    return %arg0, %arg2 : i32, i32
  }
  func.func @transform_1(%arg0: i32, %arg1: i32, %arg2: i32) -> (i32, i32) {
    %c0_i32 = arith.constant 0 : i32
    return %arg2, %arg1 : i32, i32
  }
  func.func @transform_2(%arg0: i32, %arg1: i32, %arg2: i32) -> (i32, i32) {
    %c0_i32 = arith.constant 0 : i32
    %c0_i32_0 = arith.constant 0 : i32
    return %c0_i32, %arg1 : i32, i32
  }
  func.func @transform_3(%arg0: i32, %arg1: i32, %arg2: i32) -> (i32, i32) {
    %c0_i32 = arith.constant 0 : i32
    return %arg0, %arg1 : i32, i32
  }
}

module attributes {stable_mosaic.version = 11 : i64} {
  func.func @_cross_attn_block_kernel(%arg0: i32, %arg1: memref<1x8x32xf32, #tpu.memory_space<vmem>>, %arg2: memref<1x8x32xf32, #tpu.memory_space<vmem>>, %arg3: memref<32x32xbf16, #tpu.memory_space<vmem>>, %arg4: memref<1x32xf32, #tpu.memory_space<vmem>>, %arg5: memref<32x64xbf16, #tpu.memory_space<vmem>>, %arg6: memref<1x64xf32, #tpu.memory_space<vmem>>, %arg7: memref<32x32xbf16, #tpu.memory_space<vmem>>, %arg8: memref<1x32xf32, #tpu.memory_space<vmem>>, %arg9: memref<1x32xf32, #tpu.memory_space<vmem>>, %arg10: memref<1x32xf32, #tpu.memory_space<vmem>>, %arg11: memref<1x8x32xf32, #tpu.memory_space<vmem>>) attributes {dimension_semantics = [#tpu.dimension_semantics<parallel>], iteration_bounds = array<i64: 2>, scalar_prefetch = 0 : i64, scratch_operands = 0 : i64, tpu.core_type = #tpu.core_type<tc>, window_params = [{transform_indices = @transform_0, window_bounds = array<i64: 1, 8, 32>}, {transform_indices = @transform_1, window_bounds = array<i64: 1, 8, 32>}, {pipeline_mode = #tpu.pipeline_mode<synchronous>, transform_indices = @transform_2, window_bounds = array<i64: 32, 32>}, {pipeline_mode = #tpu.pipeline_mode<synchronous>, transform_indices = @transform_3, window_bounds = array<i64: 1, 32>}, {pipeline_mode = #tpu.pipeline_mode<synchronous>, transform_indices = @transform_4, window_bounds = array<i64: 32, 64>}, {pipeline_mode = #tpu.pipeline_mode<synchronous>, transform_indices = @transform_5, window_bounds = array<i64: 1, 64>}, {pipeline_mode = #tpu.pipeline_mode<synchronous>, transform_indices = @transform_6, window_bounds = array<i64: 32, 32>}, {pipeline_mode = #tpu.pipeline_mode<synchronous>, transform_indices = @transform_7, window_bounds = array<i64: 1, 32>}, {pipeline_mode = #tpu.pipeline_mode<synchronous>, transform_indices = @transform_8, window_bounds = array<i64: 1, 32>}, {pipeline_mode = #tpu.pipeline_mode<synchronous>, transform_indices = @transform_9, window_bounds = array<i64: 1, 32>}, {transform_indices = @transform_10, window_bounds = array<i64: 1, 8, 32>}]} {
    %c0 = arith.constant 0 : index
    %c0_0 = arith.constant 0 : index
    %c0_1 = arith.constant 0 : index
    %0 = vector.load %arg1[%c0, %c0_0, %c0_1] : memref<1x8x32xf32, #tpu.memory_space<vmem>>, vector<1x8x32xf32>
    %1 = vector.shape_cast %0 : vector<1x8x32xf32> to vector<8x32xf32>
    %c0_2 = arith.constant 0 : index
    %c0_3 = arith.constant 0 : index
    %c0_4 = arith.constant 0 : index
    %2 = vector.load %arg2[%c0_2, %c0_3, %c0_4] : memref<1x8x32xf32, #tpu.memory_space<vmem>>, vector<1x8x32xf32>
    %3 = vector.shape_cast %2 : vector<1x8x32xf32> to vector<8x32xf32>
    %4 = arith.truncf %1 : vector<8x32xf32> to vector<8x32xbf16>
    %c0_5 = arith.constant 0 : index
    %c0_6 = arith.constant 0 : index
    %5 = vector.load %arg3[%c0_5, %c0_6] : memref<32x32xbf16, #tpu.memory_space<vmem>>, vector<32x32xbf16>
    %cst = arith.constant dense<0.000000e+00> : vector<8x32xf32>
    %6 = tpu.matmul %4, %5, %cst {dimension_numbers = #tpu.dot_dimension_numbers<[1], [0], [0], [1], [0, 0, 1, 1], [], []>} : vector<8x32xbf16>, vector<32x32xbf16>, vector<8x32xf32> -> vector<8x32xf32>
    %c0_7 = arith.constant 0 : index
    %c0_8 = arith.constant 0 : index
    %7 = vector.load %arg4[%c0_7, %c0_8] : memref<1x32xf32, #tpu.memory_space<vmem>>, vector<1x32xf32>
    %8 = vector.broadcast %7 : vector<1x32xf32> to vector<8x32xf32>
    %9 = arith.addf %6, %8 : vector<8x32xf32>
    %10 = arith.truncf %3 : vector<8x32xf32> to vector<8x32xbf16>
    %c0_9 = arith.constant 0 : index
    %c0_10 = arith.constant 0 : index
    %11 = vector.load %arg5[%c0_9, %c0_10] : memref<32x64xbf16, #tpu.memory_space<vmem>>, vector<32x64xbf16>
    %cst_11 = arith.constant dense<0.000000e+00> : vector<8x64xf32>
    %12 = tpu.matmul %10, %11, %cst_11 {dimension_numbers = #tpu.dot_dimension_numbers<[1], [0], [0], [1], [0, 0, 1, 1], [], []>} : vector<8x32xbf16>, vector<32x64xbf16>, vector<8x64xf32> -> vector<8x64xf32>
    %c0_12 = arith.constant 0 : index
    %c0_13 = arith.constant 0 : index
    %13 = vector.load %arg6[%c0_12, %c0_13] : memref<1x64xf32, #tpu.memory_space<vmem>>, vector<1x64xf32>
    %14 = vector.broadcast %13 : vector<1x64xf32> to vector<8x64xf32>
    %15 = arith.addf %12, %14 : vector<8x64xf32>
    %16 = vector.extract_strided_slice %15 {offsets = [0, 0], sizes = [8, 32], strides = [1, 1]} : vector<8x64xf32> to vector<8x32xf32>
    %17 = vector.extract_strided_slice %15 {offsets = [0, 32], sizes = [8, 32], strides = [1, 1]} : vector<8x64xf32> to vector<8x32xf32>
    %c0_14 = arith.constant 0 : index
    %c0_15 = arith.constant 0 : index
    %18 = vector.load %arg7[%c0_14, %c0_15] : memref<32x32xbf16, #tpu.memory_space<vmem>>, vector<32x32xbf16>
    %cst_16 = arith.constant 0.000000e+00 : f32
    %19 = vector.broadcast %cst_16 : f32 to vector<8x32xf32>
    %20 = vector.extract_strided_slice %9 {offsets = [0, 0], sizes = [8, 8], strides = [1, 1]} : vector<8x32xf32> to vector<8x8xf32>
    %21 = arith.truncf %20 : vector<8x8xf32> to vector<8x8xbf16>
    %22 = vector.extract_strided_slice %16 {offsets = [0, 0], sizes = [8, 8], strides = [1, 1]} : vector<8x32xf32> to vector<8x8xf32>
    %23 = arith.truncf %22 : vector<8x8xf32> to vector<8x8xbf16>
    %24 = vector.extract_strided_slice %17 {offsets = [0, 0], sizes = [8, 8], strides = [1, 1]} : vector<8x32xf32> to vector<8x8xf32>
    %25 = arith.truncf %24 : vector<8x8xf32> to vector<8x8xbf16>
    %cst_17 = arith.constant dense<0.000000e+00> : vector<8x8xf32>
    %26 = tpu.matmul %21, %23, %cst_17 {dimension_numbers = #tpu.dot_dimension_numbers<[1], [1], [0], [0], [0, 0, 1, 0], [], []>} : vector<8x8xbf16>, vector<8x8xbf16>, vector<8x8xf32> -> vector<8x8xf32>
    %cst_18 = arith.constant 0.353553385 : f32
    %27 = vector.broadcast %cst_18 : f32 to vector<8x8xf32>
    %28 = arith.mulf %26, %27 : vector<8x8xf32>
    %cst_19 = arith.constant dense<0xFF800000> : vector<8xf32>
    %29 = vector.multi_reduction <maximumf>, %28, %cst_19 [1] : vector<8x8xf32> to vector<8xf32>
    %30 = vector.shape_cast %29 : vector<8xf32> to vector<8x1xf32>
    %31 = vector.broadcast %30 : vector<8x1xf32> to vector<8x8xf32>
    %32 = arith.subf %28, %31 : vector<8x8xf32>
    %33 = math.exp %32 : vector<8x8xf32>
    %cst_20 = arith.constant dense<0.000000e+00> : vector<8xf32>
    %34 = vector.multi_reduction <add>, %33, %cst_20 [1] : vector<8x8xf32> to vector<8xf32>
    %35 = vector.shape_cast %34 : vector<8xf32> to vector<8x1xf32>
    %36 = tpu.reciprocal %35 {approx = true} : vector<8x1xf32> -> vector<8x1xf32>
    %37 = vector.broadcast %36 : vector<8x1xf32> to vector<8x8xf32>
    %38 = arith.mulf %33, %37 : vector<8x8xf32>
    %39 = arith.truncf %38 : vector<8x8xf32> to vector<8x8xbf16>
    %cst_21 = arith.constant dense<0.000000e+00> : vector<8x8xf32>
    %40 = tpu.matmul %39, %25, %cst_21 {dimension_numbers = #tpu.dot_dimension_numbers<[1], [0], [0], [1], [0, 0, 1, 1], [], []>} : vector<8x8xbf16>, vector<8x8xbf16>, vector<8x8xf32> -> vector<8x8xf32>
    %41 = arith.truncf %40 : vector<8x8xf32> to vector<8x8xbf16>
    %42 = vector.extract_strided_slice %18 {offsets = [0, 0], sizes = [8, 32], strides = [1, 1]} : vector<32x32xbf16> to vector<8x32xbf16>
    %cst_22 = arith.constant dense<0.000000e+00> : vector<8x32xf32>
    %43 = tpu.matmul %41, %42, %cst_22 {dimension_numbers = #tpu.dot_dimension_numbers<[1], [0], [0], [1], [0, 0, 1, 1], [], []>} : vector<8x8xbf16>, vector<8x32xbf16>, vector<8x32xf32> -> vector<8x32xf32>
    %44 = arith.addf %19, %43 : vector<8x32xf32>
    %45 = vector.extract_strided_slice %9 {offsets = [0, 8], sizes = [8, 8], strides = [1, 1]} : vector<8x32xf32> to vector<8x8xf32>
    %46 = arith.truncf %45 : vector<8x8xf32> to vector<8x8xbf16>
    %47 = vector.extract_strided_slice %16 {offsets = [0, 8], sizes = [8, 8], strides = [1, 1]} : vector<8x32xf32> to vector<8x8xf32>
    %48 = arith.truncf %47 : vector<8x8xf32> to vector<8x8xbf16>
    %49 = vector.extract_strided_slice %17 {offsets = [0, 8], sizes = [8, 8], strides = [1, 1]} : vector<8x32xf32> to vector<8x8xf32>
    %50 = arith.truncf %49 : vector<8x8xf32> to vector<8x8xbf16>
    %cst_23 = arith.constant dense<0.000000e+00> : vector<8x8xf32>
    %51 = tpu.matmul %46, %48, %cst_23 {dimension_numbers = #tpu.dot_dimension_numbers<[1], [1], [0], [0], [0, 0, 1, 0], [], []>} : vector<8x8xbf16>, vector<8x8xbf16>, vector<8x8xf32> -> vector<8x8xf32>
    %cst_24 = arith.constant 0.353553385 : f32
    %52 = vector.broadcast %cst_24 : f32 to vector<8x8xf32>
    %53 = arith.mulf %51, %52 : vector<8x8xf32>
    %cst_25 = arith.constant dense<0xFF800000> : vector<8xf32>
    %54 = vector.multi_reduction <maximumf>, %53, %cst_25 [1] : vector<8x8xf32> to vector<8xf32>
    %55 = vector.shape_cast %54 : vector<8xf32> to vector<8x1xf32>
    %56 = vector.broadcast %55 : vector<8x1xf32> to vector<8x8xf32>
    %57 = arith.subf %53, %56 : vector<8x8xf32>
    %58 = math.exp %57 : vector<8x8xf32>
    %cst_26 = arith.constant dense<0.000000e+00> : vector<8xf32>
    %59 = vector.multi_reduction <add>, %58, %cst_26 [1] : vector<8x8xf32> to vector<8xf32>
    %60 = vector.shape_cast %59 : vector<8xf32> to vector<8x1xf32>
    %61 = tpu.reciprocal %60 {approx = true} : vector<8x1xf32> -> vector<8x1xf32>
    %62 = vector.broadcast %61 : vector<8x1xf32> to vector<8x8xf32>
    %63 = arith.mulf %58, %62 : vector<8x8xf32>
    %64 = arith.truncf %63 : vector<8x8xf32> to vector<8x8xbf16>
    %cst_27 = arith.constant dense<0.000000e+00> : vector<8x8xf32>
    %65 = tpu.matmul %64, %50, %cst_27 {dimension_numbers = #tpu.dot_dimension_numbers<[1], [0], [0], [1], [0, 0, 1, 1], [], []>} : vector<8x8xbf16>, vector<8x8xbf16>, vector<8x8xf32> -> vector<8x8xf32>
    %66 = arith.truncf %65 : vector<8x8xf32> to vector<8x8xbf16>
    %67 = vector.extract_strided_slice %18 {offsets = [8, 0], sizes = [8, 32], strides = [1, 1]} : vector<32x32xbf16> to vector<8x32xbf16>
    %cst_28 = arith.constant dense<0.000000e+00> : vector<8x32xf32>
    %68 = tpu.matmul %66, %67, %cst_28 {dimension_numbers = #tpu.dot_dimension_numbers<[1], [0], [0], [1], [0, 0, 1, 1], [], []>} : vector<8x8xbf16>, vector<8x32xbf16>, vector<8x32xf32> -> vector<8x32xf32>
    %69 = arith.addf %44, %68 : vector<8x32xf32>
    %70 = vector.extract_strided_slice %9 {offsets = [0, 16], sizes = [8, 8], strides = [1, 1]} : vector<8x32xf32> to vector<8x8xf32>
    %71 = arith.truncf %70 : vector<8x8xf32> to vector<8x8xbf16>
    %72 = vector.extract_strided_slice %16 {offsets = [0, 16], sizes = [8, 8], strides = [1, 1]} : vector<8x32xf32> to vector<8x8xf32>
    %73 = arith.truncf %72 : vector<8x8xf32> to vector<8x8xbf16>
    %74 = vector.extract_strided_slice %17 {offsets = [0, 16], sizes = [8, 8], strides = [1, 1]} : vector<8x32xf32> to vector<8x8xf32>
    %75 = arith.truncf %74 : vector<8x8xf32> to vector<8x8xbf16>
    %cst_29 = arith.constant dense<0.000000e+00> : vector<8x8xf32>
    %76 = tpu.matmul %71, %73, %cst_29 {dimension_numbers = #tpu.dot_dimension_numbers<[1], [1], [0], [0], [0, 0, 1, 0], [], []>} : vector<8x8xbf16>, vector<8x8xbf16>, vector<8x8xf32> -> vector<8x8xf32>
    %cst_30 = arith.constant 0.353553385 : f32
    %77 = vector.broadcast %cst_30 : f32 to vector<8x8xf32>
    %78 = arith.mulf %76, %77 : vector<8x8xf32>
    %cst_31 = arith.constant dense<0xFF800000> : vector<8xf32>
    %79 = vector.multi_reduction <maximumf>, %78, %cst_31 [1] : vector<8x8xf32> to vector<8xf32>
    %80 = vector.shape_cast %79 : vector<8xf32> to vector<8x1xf32>
    %81 = vector.broadcast %80 : vector<8x1xf32> to vector<8x8xf32>
    %82 = arith.subf %78, %81 : vector<8x8xf32>
    %83 = math.exp %82 : vector<8x8xf32>
    %cst_32 = arith.constant dense<0.000000e+00> : vector<8xf32>
    %84 = vector.multi_reduction <add>, %83, %cst_32 [1] : vector<8x8xf32> to vector<8xf32>
    %85 = vector.shape_cast %84 : vector<8xf32> to vector<8x1xf32>
    %86 = tpu.reciprocal %85 {approx = true} : vector<8x1xf32> -> vector<8x1xf32>
    %87 = vector.broadcast %86 : vector<8x1xf32> to vector<8x8xf32>
    %88 = arith.mulf %83, %87 : vector<8x8xf32>
    %89 = arith.truncf %88 : vector<8x8xf32> to vector<8x8xbf16>
    %cst_33 = arith.constant dense<0.000000e+00> : vector<8x8xf32>
    %90 = tpu.matmul %89, %75, %cst_33 {dimension_numbers = #tpu.dot_dimension_numbers<[1], [0], [0], [1], [0, 0, 1, 1], [], []>} : vector<8x8xbf16>, vector<8x8xbf16>, vector<8x8xf32> -> vector<8x8xf32>
    %91 = arith.truncf %90 : vector<8x8xf32> to vector<8x8xbf16>
    %92 = vector.extract_strided_slice %18 {offsets = [16, 0], sizes = [8, 32], strides = [1, 1]} : vector<32x32xbf16> to vector<8x32xbf16>
    %cst_34 = arith.constant dense<0.000000e+00> : vector<8x32xf32>
    %93 = tpu.matmul %91, %92, %cst_34 {dimension_numbers = #tpu.dot_dimension_numbers<[1], [0], [0], [1], [0, 0, 1, 1], [], []>} : vector<8x8xbf16>, vector<8x32xbf16>, vector<8x32xf32> -> vector<8x32xf32>
    %94 = arith.addf %69, %93 : vector<8x32xf32>
    %95 = vector.extract_strided_slice %9 {offsets = [0, 24], sizes = [8, 8], strides = [1, 1]} : vector<8x32xf32> to vector<8x8xf32>
    %96 = arith.truncf %95 : vector<8x8xf32> to vector<8x8xbf16>
    %97 = vector.extract_strided_slice %16 {offsets = [0, 24], sizes = [8, 8], strides = [1, 1]} : vector<8x32xf32> to vector<8x8xf32>
    %98 = arith.truncf %97 : vector<8x8xf32> to vector<8x8xbf16>
    %99 = vector.extract_strided_slice %17 {offsets = [0, 24], sizes = [8, 8], strides = [1, 1]} : vector<8x32xf32> to vector<8x8xf32>
    %100 = arith.truncf %99 : vector<8x8xf32> to vector<8x8xbf16>
    %cst_35 = arith.constant dense<0.000000e+00> : vector<8x8xf32>
    %101 = tpu.matmul %96, %98, %cst_35 {dimension_numbers = #tpu.dot_dimension_numbers<[1], [1], [0], [0], [0, 0, 1, 0], [], []>} : vector<8x8xbf16>, vector<8x8xbf16>, vector<8x8xf32> -> vector<8x8xf32>
    %cst_36 = arith.constant 0.353553385 : f32
    %102 = vector.broadcast %cst_36 : f32 to vector<8x8xf32>
    %103 = arith.mulf %101, %102 : vector<8x8xf32>
    %cst_37 = arith.constant dense<0xFF800000> : vector<8xf32>
    %104 = vector.multi_reduction <maximumf>, %103, %cst_37 [1] : vector<8x8xf32> to vector<8xf32>
    %105 = vector.shape_cast %104 : vector<8xf32> to vector<8x1xf32>
    %106 = vector.broadcast %105 : vector<8x1xf32> to vector<8x8xf32>
    %107 = arith.subf %103, %106 : vector<8x8xf32>
    %108 = math.exp %107 : vector<8x8xf32>
    %cst_38 = arith.constant dense<0.000000e+00> : vector<8xf32>
    %109 = vector.multi_reduction <add>, %108, %cst_38 [1] : vector<8x8xf32> to vector<8xf32>
    %110 = vector.shape_cast %109 : vector<8xf32> to vector<8x1xf32>
    %111 = tpu.reciprocal %110 {approx = true} : vector<8x1xf32> -> vector<8x1xf32>
    %112 = vector.broadcast %111 : vector<8x1xf32> to vector<8x8xf32>
    %113 = arith.mulf %108, %112 : vector<8x8xf32>
    %114 = arith.truncf %113 : vector<8x8xf32> to vector<8x8xbf16>
    %cst_39 = arith.constant dense<0.000000e+00> : vector<8x8xf32>
    %115 = tpu.matmul %114, %100, %cst_39 {dimension_numbers = #tpu.dot_dimension_numbers<[1], [0], [0], [1], [0, 0, 1, 1], [], []>} : vector<8x8xbf16>, vector<8x8xbf16>, vector<8x8xf32> -> vector<8x8xf32>
    %116 = arith.truncf %115 : vector<8x8xf32> to vector<8x8xbf16>
    %117 = vector.extract_strided_slice %18 {offsets = [24, 0], sizes = [8, 32], strides = [1, 1]} : vector<32x32xbf16> to vector<8x32xbf16>
    %cst_40 = arith.constant dense<0.000000e+00> : vector<8x32xf32>
    %118 = tpu.matmul %116, %117, %cst_40 {dimension_numbers = #tpu.dot_dimension_numbers<[1], [0], [0], [1], [0, 0, 1, 1], [], []>} : vector<8x8xbf16>, vector<8x32xbf16>, vector<8x32xf32> -> vector<8x32xf32>
    %119 = arith.addf %94, %118 : vector<8x32xf32>
    %c0_41 = arith.constant 0 : index
    %c0_42 = arith.constant 0 : index
    %120 = vector.load %arg8[%c0_41, %c0_42] : memref<1x32xf32, #tpu.memory_space<vmem>>, vector<1x32xf32>
    %121 = vector.broadcast %120 : vector<1x32xf32> to vector<8x32xf32>
    %122 = arith.addf %119, %121 : vector<8x32xf32>
    %123 = arith.addf %122, %1 : vector<8x32xf32>
    %c0_43 = arith.constant 0 : index
    %c0_44 = arith.constant 0 : index
    %124 = vector.load %arg9[%c0_43, %c0_44] : memref<1x32xf32, #tpu.memory_space<vmem>>, vector<1x32xf32>
    %c0_45 = arith.constant 0 : index
    %c0_46 = arith.constant 0 : index
    %125 = vector.load %arg10[%c0_45, %c0_46] : memref<1x32xf32, #tpu.memory_space<vmem>>, vector<1x32xf32>
    %cst_47 = arith.constant dense<0.000000e+00> : vector<8xf32>
    %126 = vector.multi_reduction <add>, %123, %cst_47 [1] : vector<8x32xf32> to vector<8xf32>
    %127 = vector.shape_cast %126 : vector<8xf32> to vector<8x1xf32>
    %cst_48 = arith.constant 3.200000e+01 : f32
    %128 = vector.broadcast %cst_48 : f32 to vector<8x1xf32>
    %129 = arith.divf %127, %128 : vector<8x1xf32>
    %130 = vector.broadcast %129 : vector<8x1xf32> to vector<8x32xf32>
    %131 = arith.subf %123, %130 : vector<8x32xf32>
    %132 = arith.mulf %131, %131 : vector<8x32xf32>
    %cst_49 = arith.constant dense<0.000000e+00> : vector<8xf32>
    %133 = vector.multi_reduction <add>, %132, %cst_49 [1] : vector<8x32xf32> to vector<8xf32>
    %134 = vector.shape_cast %133 : vector<8xf32> to vector<8x1xf32>
    %cst_50 = arith.constant 3.200000e+01 : f32
    %135 = vector.broadcast %cst_50 : f32 to vector<8x1xf32>
    %136 = arith.divf %134, %135 : vector<8x1xf32>
    %137 = vector.broadcast %129 : vector<8x1xf32> to vector<8x32xf32>
    %138 = arith.subf %123, %137 : vector<8x32xf32>
    %cst_51 = arith.constant 9.99999974E-6 : f32
    %139 = vector.broadcast %cst_51 : f32 to vector<8x1xf32>
    %140 = arith.addf %136, %139 : vector<8x1xf32>
    %141 = math.rsqrt %140 : vector<8x1xf32>
    %142 = vector.broadcast %141 : vector<8x1xf32> to vector<8x32xf32>
    %143 = arith.mulf %138, %142 : vector<8x32xf32>
    %144 = vector.broadcast %124 : vector<1x32xf32> to vector<8x32xf32>
    %145 = arith.mulf %143, %144 : vector<8x32xf32>
    %146 = vector.broadcast %125 : vector<1x32xf32> to vector<8x32xf32>
    %147 = arith.addf %145, %146 : vector<8x32xf32>
    %c0_52 = arith.constant 0 : index
    %c0_53 = arith.constant 0 : index
    %c0_54 = arith.constant 0 : index
    %148 = vector.load %arg11[%c0_52, %c0_53, %c0_54] : memref<1x8x32xf32, #tpu.memory_space<vmem>>, vector<1x8x32xf32>
    %149 = vector.shape_cast %148 : vector<1x8x32xf32> to vector<8x32xf32>
    %150 = vector.shape_cast %147 : vector<8x32xf32> to vector<1x8x32xf32>
    tpu.vector_store %arg11[%c0_52, %c0_53, %c0_54], %150 {strides = array<i32>} : memref<1x8x32xf32, #tpu.memory_space<vmem>>, vector<1x8x32xf32>,
    return
  }
  func.func @transform_0(%arg0: i32) -> (i32, i32, i32) {
    %c0_i32 = arith.constant 0 : i32
    %c0_i32_0 = arith.constant 0 : i32
    %c0_i32_1 = arith.constant 0 : i32
    return %arg0, %c0_i32, %c0_i32_0 : i32, i32, i32
  }
  func.func @transform_1(%arg0: i32) -> (i32, i32, i32) {
    %c0_i32 = arith.constant 0 : i32
    %c0_i32_0 = arith.constant 0 : i32
    %c0_i32_1 = arith.constant 0 : i32
    return %arg0, %c0_i32, %c0_i32_0 : i32, i32, i32
  }
  func.func @transform_2(%arg0: i32) -> (i32, i32) {
    %c0_i32 = arith.constant 0 : i32
    %c0_i32_0 = arith.constant 0 : i32
    %c0_i32_1 = arith.constant 0 : i32
    return %c0_i32, %c0_i32_0 : i32, i32
  }
  func.func @transform_3(%arg0: i32) -> (i32, i32) {
    %c0_i32 = arith.constant 0 : i32
    %c0_i32_0 = arith.constant 0 : i32
    %c0_i32_1 = arith.constant 0 : i32
    return %c0_i32, %c0_i32_0 : i32, i32
  }
  func.func @transform_4(%arg0: i32) -> (i32, i32) {
    %c0_i32 = arith.constant 0 : i32
    %c0_i32_0 = arith.constant 0 : i32
    %c0_i32_1 = arith.constant 0 : i32
    return %c0_i32, %c0_i32_0 : i32, i32
  }
  func.func @transform_5(%arg0: i32) -> (i32, i32) {
    %c0_i32 = arith.constant 0 : i32
    %c0_i32_0 = arith.constant 0 : i32
    %c0_i32_1 = arith.constant 0 : i32
    return %c0_i32, %c0_i32_0 : i32, i32
  }
  func.func @transform_6(%arg0: i32) -> (i32, i32) {
    %c0_i32 = arith.constant 0 : i32
    %c0_i32_0 = arith.constant 0 : i32
    %c0_i32_1 = arith.constant 0 : i32
    return %c0_i32, %c0_i32_0 : i32, i32
  }
  func.func @transform_7(%arg0: i32) -> (i32, i32) {
    %c0_i32 = arith.constant 0 : i32
    %c0_i32_0 = arith.constant 0 : i32
    %c0_i32_1 = arith.constant 0 : i32
    return %c0_i32, %c0_i32_0 : i32, i32
  }
  func.func @transform_8(%arg0: i32) -> (i32, i32) {
    %c0_i32 = arith.constant 0 : i32
    %c0_i32_0 = arith.constant 0 : i32
    %c0_i32_1 = arith.constant 0 : i32
    return %c0_i32, %c0_i32_0 : i32, i32
  }
  func.func @transform_9(%arg0: i32) -> (i32, i32) {
    %c0_i32 = arith.constant 0 : i32
    %c0_i32_0 = arith.constant 0 : i32
    %c0_i32_1 = arith.constant 0 : i32
    return %c0_i32, %c0_i32_0 : i32, i32
  }
  func.func @transform_10(%arg0: i32) -> (i32, i32, i32) {
    %c0_i32 = arith.constant 0 : i32
    %c0_i32_0 = arith.constant 0 : i32
    %c0_i32_1 = arith.constant 0 : i32
    return %arg0, %c0_i32, %c0_i32_0 : i32, i32, i32
  }
}

module attributes {stable_mosaic.version = 11 : i64} {
  func.func @_matmul_res_ln_kernel(%arg0: i32, %arg1: i32, %arg2: memref<16x1024xbf16, #tpu.memory_space<vmem>>, %arg3: memref<1024x32xbf16, #tpu.memory_space<vmem>>, %arg4: memref<1x32xf32, #tpu.memory_space<vmem>>, %arg5: memref<16x32xf32, #tpu.memory_space<vmem>>, %arg6: memref<1x32xf32, #tpu.memory_space<vmem>>, %arg7: memref<1x32xf32, #tpu.memory_space<vmem>>, %arg8: memref<16x32xf32, #tpu.memory_space<vmem>>) attributes {dimension_semantics = [#tpu.dimension_semantics<parallel>, #tpu.dimension_semantics<arbitrary>], iteration_bounds = array<i64: 1, 2>, scalar_prefetch = 0 : i64, scratch_operands = 0 : i64, tpu.core_type = #tpu.core_type<tc>, window_params = [{transform_indices = @transform_0, window_bounds = array<i64: 16, 1024>}, {transform_indices = @transform_1, window_bounds = array<i64: 1024, 32>}, {pipeline_mode = #tpu.pipeline_mode<synchronous>, transform_indices = @transform_2, window_bounds = array<i64: 1, 32>}, {transform_indices = @transform_3, window_bounds = array<i64: 16, 32>}, {pipeline_mode = #tpu.pipeline_mode<synchronous>, transform_indices = @transform_4, window_bounds = array<i64: 1, 32>}, {pipeline_mode = #tpu.pipeline_mode<synchronous>, transform_indices = @transform_5, window_bounds = array<i64: 1, 32>}, {transform_indices = @transform_6, window_bounds = array<i64: 16, 32>}]} {
    %c0_i32 = arith.constant 0 : i32
    %0 = arith.cmpi eq, %arg1, %c0_i32 : i32
    %1 = arith.extui %0 : i1 to i32
    %c0_i32_0 = arith.constant 0 : i32
    %2 = arith.cmpi ne, %1, %c0_i32_0 : i32
    scf.if %2 {
      %cst_9 = arith.constant 0.000000e+00 : f32
      %12 = vector.broadcast %cst_9 : f32 to vector<16x32xf32>
      %c0_10 = arith.constant 0 : index
      %c0_11 = arith.constant 0 : index
      %13 = vector.load %arg8[%c0_10, %c0_11] : memref<16x32xf32, #tpu.memory_space<vmem>>, vector<16x32xf32>
      tpu.vector_store %arg8[%c0_10, %c0_11], %12 {strides = array<i32>} : memref<16x32xf32, #tpu.memory_space<vmem>>, vector<16x32xf32>,
    } else {
    }
    %c0 = arith.constant 0 : index
    %c0_1 = arith.constant 0 : index
    %3 = vector.load %arg8[%c0, %c0_1] : memref<16x32xf32, #tpu.memory_space<vmem>>, vector<16x32xf32>
    %c0_2 = arith.constant 0 : index
    %c0_3 = arith.constant 0 : index
    %4 = vector.load %arg2[%c0_2, %c0_3] : memref<16x1024xbf16, #tpu.memory_space<vmem>>, vector<16x1024xbf16>
    %c0_4 = arith.constant 0 : index
    %c0_5 = arith.constant 0 : index
    %5 = vector.load %arg3[%c0_4, %c0_5] : memref<1024x32xbf16, #tpu.memory_space<vmem>>, vector<1024x32xbf16>
    %cst = arith.constant dense<0.000000e+00> : vector<16x32xf32>
    %6 = tpu.matmul %4, %5, %cst {dimension_numbers = #tpu.dot_dimension_numbers<[1], [0], [0], [1], [0, 0, 1, 1], [], []>} : vector<16x1024xbf16>, vector<1024x32xbf16>, vector<16x32xf32> -> vector<16x32xf32>
    %7 = arith.addf %3, %6 : vector<16x32xf32>
    %c0_6 = arith.constant 0 : index
    %c0_7 = arith.constant 0 : index
    %8 = vector.load %arg8[%c0_6, %c0_7] : memref<16x32xf32, #tpu.memory_space<vmem>>, vector<16x32xf32>
    tpu.vector_store %arg8[%c0_6, %c0_7], %7 {strides = array<i32>} : memref<16x32xf32, #tpu.memory_space<vmem>>, vector<16x32xf32>,
    %c1_i32 = arith.constant 1 : i32
    %9 = arith.cmpi eq, %arg1, %c1_i32 : i32
    %10 = arith.extui %9 : i1 to i32
    %c0_i32_8 = arith.constant 0 : i32
    %11 = arith.cmpi ne, %10, %c0_i32_8 : i32
    scf.if %11 {
      %c0_9 = arith.constant 0 : index
      %c0_10 = arith.constant 0 : index
      %12 = vector.load %arg8[%c0_9, %c0_10] : memref<16x32xf32, #tpu.memory_space<vmem>>, vector<16x32xf32>
      %c0_11 = arith.constant 0 : index
      %c0_12 = arith.constant 0 : index
      %13 = vector.load %arg4[%c0_11, %c0_12] : memref<1x32xf32, #tpu.memory_space<vmem>>, vector<1x32xf32>
      %14 = vector.broadcast %13 : vector<1x32xf32> to vector<16x32xf32>
      %15 = arith.addf %12, %14 : vector<16x32xf32>
      %c0_13 = arith.constant 0 : index
      %c0_14 = arith.constant 0 : index
      %16 = vector.load %arg5[%c0_13, %c0_14] : memref<16x32xf32, #tpu.memory_space<vmem>>, vector<16x32xf32>
      %17 = arith.addf %15, %16 : vector<16x32xf32>
      %c0_15 = arith.constant 0 : index
      %c0_16 = arith.constant 0 : index
      %18 = vector.load %arg6[%c0_15, %c0_16] : memref<1x32xf32, #tpu.memory_space<vmem>>, vector<1x32xf32>
      %c0_17 = arith.constant 0 : index
      %c0_18 = arith.constant 0 : index
      %19 = vector.load %arg7[%c0_17, %c0_18] : memref<1x32xf32, #tpu.memory_space<vmem>>, vector<1x32xf32>
      %cst_19 = arith.constant dense<0.000000e+00> : vector<16xf32>
      %20 = vector.multi_reduction <add>, %17, %cst_19 [1] : vector<16x32xf32> to vector<16xf32>
      %21 = vector.shape_cast %20 : vector<16xf32> to vector<16x1xf32>
      %cst_20 = arith.constant 3.200000e+01 : f32
      %22 = vector.broadcast %cst_20 : f32 to vector<16x1xf32>
      %23 = arith.divf %21, %22 : vector<16x1xf32>
      %24 = vector.broadcast %23 : vector<16x1xf32> to vector<16x32xf32>
      %25 = arith.subf %17, %24 : vector<16x32xf32>
      %26 = arith.mulf %25, %25 : vector<16x32xf32>
      %cst_21 = arith.constant dense<0.000000e+00> : vector<16xf32>
      %27 = vector.multi_reduction <add>, %26, %cst_21 [1] : vector<16x32xf32> to vector<16xf32>
      %28 = vector.shape_cast %27 : vector<16xf32> to vector<16x1xf32>
      %cst_22 = arith.constant 3.200000e+01 : f32
      %29 = vector.broadcast %cst_22 : f32 to vector<16x1xf32>
      %30 = arith.divf %28, %29 : vector<16x1xf32>
      %31 = vector.broadcast %23 : vector<16x1xf32> to vector<16x32xf32>
      %32 = arith.subf %17, %31 : vector<16x32xf32>
      %cst_23 = arith.constant 9.99999974E-6 : f32
      %33 = vector.broadcast %cst_23 : f32 to vector<16x1xf32>
      %34 = arith.addf %30, %33 : vector<16x1xf32>
      %35 = math.rsqrt %34 : vector<16x1xf32>
      %36 = vector.broadcast %35 : vector<16x1xf32> to vector<16x32xf32>
      %37 = arith.mulf %32, %36 : vector<16x32xf32>
      %38 = vector.broadcast %18 : vector<1x32xf32> to vector<16x32xf32>
      %39 = arith.mulf %37, %38 : vector<16x32xf32>
      %40 = vector.broadcast %19 : vector<1x32xf32> to vector<16x32xf32>
      %41 = arith.addf %39, %40 : vector<16x32xf32>
      %c0_24 = arith.constant 0 : index
      %c0_25 = arith.constant 0 : index
      %42 = vector.load %arg8[%c0_24, %c0_25] : memref<16x32xf32, #tpu.memory_space<vmem>>, vector<16x32xf32>
      tpu.vector_store %arg8[%c0_24, %c0_25], %41 {strides = array<i32>} : memref<16x32xf32, #tpu.memory_space<vmem>>, vector<16x32xf32>,
    } else {
    }
    return
  }
  func.func @transform_0(%arg0: i32, %arg1: i32) -> (i32, i32) {
    %c0_i32 = arith.constant 0 : i32
    return %arg0, %arg1 : i32, i32
  }
  func.func @transform_1(%arg0: i32, %arg1: i32) -> (i32, i32) {
    %c0_i32 = arith.constant 0 : i32
    %c0_i32_0 = arith.constant 0 : i32
    return %arg1, %c0_i32 : i32, i32
  }
  func.func @transform_2(%arg0: i32, %arg1: i32) -> (i32, i32) {
    %c0_i32 = arith.constant 0 : i32
    %c0_i32_0 = arith.constant 0 : i32
    %c0_i32_1 = arith.constant 0 : i32
    return %c0_i32, %c0_i32_0 : i32, i32
  }
  func.func @transform_3(%arg0: i32, %arg1: i32) -> (i32, i32) {
    %c0_i32 = arith.constant 0 : i32
    %c0_i32_0 = arith.constant 0 : i32
    return %arg0, %c0_i32 : i32, i32
  }
  func.func @transform_4(%arg0: i32, %arg1: i32) -> (i32, i32) {
    %c0_i32 = arith.constant 0 : i32
    %c0_i32_0 = arith.constant 0 : i32
    %c0_i32_1 = arith.constant 0 : i32
    return %c0_i32, %c0_i32_0 : i32, i32
  }
  func.func @transform_5(%arg0: i32, %arg1: i32) -> (i32, i32) {
    %c0_i32 = arith.constant 0 : i32
    %c0_i32_0 = arith.constant 0 : i32
    %c0_i32_1 = arith.constant 0 : i32
    return %c0_i32, %c0_i32_0 : i32, i32
  }
  func.func @transform_6(%arg0: i32, %arg1: i32) -> (i32, i32) {
    %c0_i32 = arith.constant 0 : i32
    %c0_i32_0 = arith.constant 0 : i32
    return %arg0, %c0_i32 : i32, i32
  }
}

module attributes {stable_mosaic.version = 11 : i64} {
  func.func @_linear_f32_kernel(%arg0: i32, %arg1: i32, %arg2: i32, %arg3: memref<16x32xf32, #tpu.memory_space<vmem>>, %arg4: memref<32x128xbf16, #tpu.memory_space<vmem>>, %arg5: memref<1x128xf32, #tpu.memory_space<vmem>>, %arg6: memref<16x128xf32, #tpu.memory_space<vmem>>) attributes {dimension_semantics = [#tpu.dimension_semantics<parallel>, #tpu.dimension_semantics<parallel>, #tpu.dimension_semantics<arbitrary>], iteration_bounds = array<i64: 1, 1, 1>, scalar_prefetch = 0 : i64, scratch_operands = 0 : i64, tpu.core_type = #tpu.core_type<tc>, window_params = [{transform_indices = @transform_0, window_bounds = array<i64: 16, 32>}, {transform_indices = @transform_1, window_bounds = array<i64: 32, 128>}, {transform_indices = @transform_2, window_bounds = array<i64: 1, 128>}, {transform_indices = @transform_3, window_bounds = array<i64: 16, 128>}]} {
    %c0_i32 = arith.constant 0 : i32
    %0 = arith.cmpi eq, %arg2, %c0_i32 : i32
    %1 = arith.extui %0 : i1 to i32
    %c0_i32_0 = arith.constant 0 : i32
    %2 = arith.cmpi ne, %1, %c0_i32_0 : i32
    scf.if %2 {
      %cst_10 = arith.constant 0.000000e+00 : f32
      %13 = vector.broadcast %cst_10 : f32 to vector<16x128xf32>
      %c0_11 = arith.constant 0 : index
      %c0_12 = arith.constant 0 : index
      %14 = vector.load %arg6[%c0_11, %c0_12] : memref<16x128xf32, #tpu.memory_space<vmem>>, vector<16x128xf32>
      tpu.vector_store %arg6[%c0_11, %c0_12], %13 {strides = array<i32>} : memref<16x128xf32, #tpu.memory_space<vmem>>, vector<16x128xf32>,
    } else {
    }
    %c0 = arith.constant 0 : index
    %c0_1 = arith.constant 0 : index
    %3 = vector.load %arg6[%c0, %c0_1] : memref<16x128xf32, #tpu.memory_space<vmem>>, vector<16x128xf32>
    %c0_2 = arith.constant 0 : index
    %c0_3 = arith.constant 0 : index
    %4 = vector.load %arg3[%c0_2, %c0_3] : memref<16x32xf32, #tpu.memory_space<vmem>>, vector<16x32xf32>
    %5 = arith.truncf %4 : vector<16x32xf32> to vector<16x32xbf16>
    %c0_4 = arith.constant 0 : index
    %c0_5 = arith.constant 0 : index
    %6 = vector.load %arg4[%c0_4, %c0_5] : memref<32x128xbf16, #tpu.memory_space<vmem>>, vector<32x128xbf16>
    %cst = arith.constant dense<0.000000e+00> : vector<16x128xf32>
    %7 = tpu.matmul %5, %6, %cst {dimension_numbers = #tpu.dot_dimension_numbers<[1], [0], [0], [1], [0, 0, 1, 1], [], []>} : vector<16x32xbf16>, vector<32x128xbf16>, vector<16x128xf32> -> vector<16x128xf32>
    %8 = arith.addf %3, %7 : vector<16x128xf32>
    %c0_6 = arith.constant 0 : index
    %c0_7 = arith.constant 0 : index
    %9 = vector.load %arg6[%c0_6, %c0_7] : memref<16x128xf32, #tpu.memory_space<vmem>>, vector<16x128xf32>
    tpu.vector_store %arg6[%c0_6, %c0_7], %8 {strides = array<i32>} : memref<16x128xf32, #tpu.memory_space<vmem>>, vector<16x128xf32>,
    %c0_i32_8 = arith.constant 0 : i32
    %10 = arith.cmpi eq, %arg2, %c0_i32_8 : i32
    %11 = arith.extui %10 : i1 to i32
    %c0_i32_9 = arith.constant 0 : i32
    %12 = arith.cmpi ne, %11, %c0_i32_9 : i32
    scf.if %12 {
      %c0_10 = arith.constant 0 : index
      %c0_11 = arith.constant 0 : index
      %13 = vector.load %arg6[%c0_10, %c0_11] : memref<16x128xf32, #tpu.memory_space<vmem>>, vector<16x128xf32>
      %c0_12 = arith.constant 0 : index
      %c0_13 = arith.constant 0 : index
      %14 = vector.load %arg5[%c0_12, %c0_13] : memref<1x128xf32, #tpu.memory_space<vmem>>, vector<1x128xf32>
      %15 = vector.broadcast %14 : vector<1x128xf32> to vector<16x128xf32>
      %16 = arith.addf %13, %15 : vector<16x128xf32>
      %c0_14 = arith.constant 0 : index
      %c0_15 = arith.constant 0 : index
      %17 = vector.load %arg6[%c0_14, %c0_15] : memref<16x128xf32, #tpu.memory_space<vmem>>, vector<16x128xf32>
      tpu.vector_store %arg6[%c0_14, %c0_15], %16 {strides = array<i32>} : memref<16x128xf32, #tpu.memory_space<vmem>>, vector<16x128xf32>,
    } else {
    }
    return
  }
  func.func @transform_0(%arg0: i32, %arg1: i32, %arg2: i32) -> (i32, i32) {
    %c0_i32 = arith.constant 0 : i32
    return %arg0, %arg2 : i32, i32
  }
  func.func @transform_1(%arg0: i32, %arg1: i32, %arg2: i32) -> (i32, i32) {
    %c0_i32 = arith.constant 0 : i32
    return %arg2, %arg1 : i32, i32
  }
  func.func @transform_2(%arg0: i32, %arg1: i32, %arg2: i32) -> (i32, i32) {
    %c0_i32 = arith.constant 0 : i32
    %c0_i32_0 = arith.constant 0 : i32
    return %c0_i32, %arg1 : i32, i32
  }
  func.func @transform_3(%arg0: i32, %arg1: i32, %arg2: i32) -> (i32, i32) {
    %c0_i32 = arith.constant 0 : i32
    return %arg0, %arg1 : i32, i32
  }
}

</mosaic_0001>

<llo_original>
// kernel: decoder_forward.11
$region0: #{decoder_forward.11}
  #allocation0 [shape = 'u32[]', space=smem, size = 0x4, offset = 0x4, fixed_abs, tag = 'smem constant byte address 0x4 - core index']
  #allocation1 [shape = 'u32[144,128]{1,0:T(1,128)}', space=vmem, size = 0x12000, scoped, tag = 'internal scratch']
  #allocation2 [shape = 'f32[16,512]{1,0:T(8,128)}', space=vmem, size = 0x8000, scoped, tag = 'scratch operand']
  %s0 = inlined_call_operand.hbm [shape: f32[16,32], index: 0, kind: input, shape index: {}]
  %s1 = inlined_call_operand.hbm [shape: bf16[32,2048], index: 1, kind: input, shape index: {}]
  %s2 = inlined_call_operand.hbm [shape: f32[1,2048], index: 2, kind: input, shape index: {}]
  %s3 = inlined_call_operand.hbm [shape: bf16[16,2048], index: 3, kind: output, shape index: {}]
  %s4 = sld [smem:[#allocation0]]
  $region65: #{decoder_forward.11} parent=0
    _
  %s6 = ssub.s32 1, %s4
  %s7 = scalar_select 0, %s6, %s4
  $region1: #{decoder_forward.11} parent=0
    #allocation3 [shape = 'u8[8192]{0}', space=vmem, size = 0x2000, scoped, tag = 'input window, operand 0, single buffered']
    #allocation4 [shape = 's32[2]{0}', space=sflag, size = 0x8, scoped, tag = 'scoped memory for decoder_forward.11']
    #allocation5 [shape = 's32[2]{0}', space=sflag, size = 0x8, scoped, tag = 'scoped memory for decoder_forward.11']
    #allocation6 [shape = 'u8[65536]{0}', space=vmem, size = 0x10000, scoped, tag = 'input window, operand 1']
    #allocation7 [shape = 's32[2]{0}', space=sflag, size = 0x8, scoped, tag = 'scoped memory for decoder_forward.11']
    #allocation8 [shape = 'u8[4096]{0}', space=vmem, size = 0x1000, scoped, tag = 'input window, operand 2']
    #allocation9 [shape = 'u8[32768]{0}', space=vmem, size = 0x8000, scoped, tag = 'output window, operand 0']
    %8 = vsyncpa [#allocation4], 0
    %9 = vsyncpa [#allocation7], 0
    %s10 = scalar_lea.sflag [#allocation7], 1
    %11 = vsyncpa %s10, 0
    %12 = vsyncpa [#allocation5], 0
    %s13 = scalar_lea.sflag [#allocation5], 1
    %14 = vsyncpa %s13, 0
    loop: start=0, step=1, limit=6
    $region2: #{decoder_forward.11} parent=1 // loop_pre_header
      _
    $region3: #{decoder_forward.11} parent=1 // loop_header
      %s16 = sphi 0, %s20
      %p17 = scmp.ge.s32.totalorder %s16, 6
      %s23 = sphi 0, %s42
      %s24 = sphi 0, %s38
      %s25 = sphi 0, %s34
      %s26 = sphi 0, %s23
      %s27 = sphi 0, %s24
      %s28 = sphi 0, %s25
      %s29 = sphi 0, %s26
      %s30 = sphi 0, %s27
      %s31 = sphi 0, %s28
      %s47 = sphi 0, %s49
      %s50 = sphi 0, %s47
      %s51 = sphi 0, %s50
      %s67 = sphi 0, %s51
      %s75 = sphi 0, %s77
      %s78 = sphi 0, %s75
      %s79 = sphi 0, %s78
      %s95 = sphi 0, %s79
      %s101 = sphi 0, %s103
      %s104 = sphi 0, %s101
      %s105 = sphi 0, %s104
      %s121 = sphi 0, %s105
      %s129 = sphi 0, %s131
      %s132 = sphi 0, %s129
      %s133 = sphi 0, %s132
      %s149 = sphi 0, %s133
    $region4: #{decoder_forward.11} parent=1 // loop_header_branch
      %19 = sbr.rel (%p17) target = $region8
    $region5: #{decoder_forward.11} parent=1 // loop_body
      %s21 = ssub.s32 %s16, 1
      %s22 = ssub.s32 %s16, 2
      %s32 = sadd.s32 1, %s25
      %p33 = scmp.ge.s32.totalorder %s32, 1
      %s34 = scalar_select %p33, 0, %s32
      %s35 = sadd.s32 1, %s24
      %s36 = scalar_select %p33, %s35, %s24
      %p37 = scmp.ge.s32.totalorder %s36, 4
      %s38 = scalar_select %p37, 0, %s36
      %s39 = sadd.s32 1, %s23
      %s40 = scalar_select %p37, %s39, %s23
      %p41 = scmp.ge.s32.totalorder %s40, 1
      %s42 = scalar_select %p41, 0, %s40
      %s43 = ssub.s32 %s23, %s42
      %s44 = ssub.s32 %s25, %s34
      %s45 = sor.u32 %s43, %s44
      %p46 = scmp.eq.s32.totalorder %s45, 0
      %s48 = sadd.s32 %s47, 1
      %s49 = scalar_select %p46, %s47, %s48
      %p52 = pneg %p46
      %p53 = scmp.eq.s32.totalorder %s16, 3
      %p54 = por %p52, %p53
      %p55 = scmp.ne.s32.totalorder %s47, %s50
      %p56 = scmp.eq.s32.totalorder %s16, 0
      %p57 = por %p55, %p56
      %p58 = scmp.ne.s32.totalorder %s47, %s50
      %p59 = scmp.eq.s32.totalorder %s21, 3
      %p60 = por %p58, %p59
      %p61 = scmp.ne.s32.totalorder %s50, %s51
      %p62 = scmp.eq.s32.totalorder %s21, 0
      %p63 = por %p61, %p62
      %p64 = scmp.ne.s32.totalorder %s50, %s51
      %p65 = scmp.eq.s32.totalorder %s22, 3
      %p66 = por %p64, %p65
      %p68 = scmp.ne.s32.totalorder %s51, %s67
      %p69 = scmp.eq.s32.totalorder %s22, 0
      %p70 = por %p68, %p69
      %s71 = ssub.s32 %s25, %s34
      %s72 = ssub.s32 %s24, %s38
      %s73 = sor.u32 %s71, %s72
      %p74 = scmp.eq.s32.totalorder %s73, 0
      %s76 = sadd.s32 %s75, 1
      %s77 = scalar_select %p74, %s75, %s76
      %p80 = pneg %p74
      %p81 = scmp.eq.s32.totalorder %s16, 3
      %p82 = por %p80, %p81
      %p83 = scmp.ne.s32.totalorder %s75, %s78
      %p84 = scmp.eq.s32.totalorder %s16, 0
      %p85 = por %p83, %p84
      %p86 = scmp.ne.s32.totalorder %s75, %s78
      %p87 = scmp.eq.s32.totalorder %s21, 3
      %p88 = por %p86, %p87
      %p89 = scmp.ne.s32.totalorder %s78, %s79
      %p90 = scmp.eq.s32.totalorder %s21, 0
      %p91 = por %p89, %p90
      %p92 = scmp.ne.s32.totalorder %s78, %s79
      %p93 = scmp.eq.s32.totalorder %s22, 3
      %p94 = por %p92, %p93
      %p96 = scmp.ne.s32.totalorder %s79, %s95
      %p97 = scmp.eq.s32.totalorder %s22, 0
      %p98 = por %p96, %p97
      %s99 = ssub.s32 %s24, %s38
      %p100 = scmp.eq.s32.totalorder %s99, 0
      %s102 = sadd.s32 %s101, 1
      %s103 = scalar_select %p100, %s101, %s102
      %p106 = pneg %p100
      %p107 = scmp.eq.s32.totalorder %s16, 3
      %p108 = por %p106, %p107
      %p109 = scmp.ne.s32.totalorder %s101, %s104
      %p110 = scmp.eq.s32.totalorder %s16, 0
      %p111 = por %p109, %p110
      %p112 = scmp.ne.s32.totalorder %s101, %s104
      %p113 = scmp.eq.s32.totalorder %s21, 3
      %p114 = por %p112, %p113
      %p115 = scmp.ne.s32.totalorder %s104, %s105
      %p116 = scmp.eq.s32.totalorder %s21, 0
      %p117 = por %p115, %p116
      %p118 = scmp.ne.s32.totalorder %s104, %s105
      %p119 = scmp.eq.s32.totalorder %s22, 3
      %p120 = por %p118, %p119
      %p122 = scmp.ne.s32.totalorder %s105, %s121
      %p123 = scmp.eq.s32.totalorder %s22, 0
      %p124 = por %p122, %p123
      %s125 = ssub.s32 %s23, %s42
      %s126 = ssub.s32 %s24, %s38
      %s127 = sor.u32 %s125, %s126
      %p128 = scmp.eq.s32.totalorder %s127, 0
      %s130 = sadd.s32 %s129, 1
      %s131 = scalar_select %p128, %s129, %s130
      %p134 = pneg %p128
      %p135 = scmp.eq.s32.totalorder %s16, 3
      %p136 = por %p134, %p135
      %p137 = scmp.ne.s32.totalorder %s129, %s132
      %p138 = scmp.eq.s32.totalorder %s16, 0
      %p139 = por %p137, %p138
      %p140 = scmp.ne.s32.totalorder %s129, %s132
      %p141 = scmp.eq.s32.totalorder %s21, 3
      %p142 = por %p140, %p141
      %p143 = scmp.ne.s32.totalorder %s132, %s133
      %p144 = scmp.eq.s32.totalorder %s21, 0
      %p145 = por %p143, %p144
      %p146 = scmp.ne.s32.totalorder %s132, %s133
      %p147 = scmp.eq.s32.totalorder %s22, 3
      %p148 = por %p146, %p147
      %p150 = scmp.ne.s32.totalorder %s133, %s149
      %p151 = scmp.eq.s32.totalorder %s22, 0
      %p152 = por %p150, %p151
      %p153 = scmp.le.s32.totalorder 1, %s16
      %p154 = scmp.lt.s32.totalorder %s16, 5
      %p155 = pnand %p153, %p154
      %p156 = pneg %p155
      // Predicated region
      $region9: #{decoder_forward.11} parent=5 // pred_check
        _
      $region10: #{decoder_forward.11} parent=5 // pred_check_branch
        %158 = sbr.rel (%p155) target = $region12
      $region11: #{decoder_forward.11} parent=5 // pred_region
        %s159 = ssub.s32 %s16, 1
        // Predicated region
        $region13: #{decoder_forward.11} parent=11 // pred_check
          %p160 = pneg %p63
        $region14: #{decoder_forward.11} parent=11 // pred_check_branch
          %162 = sbr.rel (%p160) target = $region16
        $region15: #{decoder_forward.11} parent=11 // pred_region
          %s163 = smul.u32 2, %s26
          %s165 = ssub.s32 256, 256
          %166 = vsyncadd [#allocation4], %s165
          %s167 = sadd.s32 %s28, %s163
          %s168 = smul.addr %s167, 128
          %s169 = scalar_lea.hbm %s0, %s168
          %s170 = sshll.u32 [#allocation3], 4
          %s171 = int_to_ptr.vmem [resolvable:$true] %s170
          %176 = dma.hbm_to_vmem [thread:$0]  %s169, 256, %s171, [#allocation4], 128, 128, 8
        $region16: #{decoder_forward.11} parent=11 // pred_fallthru
          _
      $region12: #{decoder_forward.11} parent=5 // pred_fallthru
        _
      %p177 = scmp.lt.s32.totalorder %s16, 4
      // Predicated region
      $region17: #{decoder_forward.11} parent=5 // pred_check
        %p178 = pneg %p177
      $region18: #{decoder_forward.11} parent=5 // pred_check_branch
        %180 = sbr.rel (%p178) target = $region20
      $region19: #{decoder_forward.11} parent=5 // pred_region
        // Predicated region
        $region21: #{decoder_forward.11} parent=19 // pred_check
          %p181 = pneg %p85
        $region22: #{decoder_forward.11} parent=19 // pred_check_branch
          %183 = sbr.rel (%p181) target = $region24
        $region23: #{decoder_forward.11} parent=19 // pred_region
          %s184 = sand.u32 %s16, 1
          %s185 = scalar_lea.sflag [#allocation7], %s184
          %s186 = sand.u32 %s75, 1
          %s187 = smul.addr %s186, 64
          %s188 = scalar_lea.vmem [#allocation6], %s187
          %s189 = smul.u32 4, %s25
          %s190 = smul.u32 4, %s24
          %s192 = ssub.s32 1024, 1024
          %193 = vsyncadd %s185, %s192
          %s194 = smul.addr %s189, 16
          %s195 = sadd.s32 %s190, %s194
          %s196 = smul.addr %s195, 64
          %s197 = scalar_lea.hbm %s1, %s196
          %s198 = sshll.u32 %s188, 4
          %s199 = int_to_ptr.vmem [resolvable:$true] %s198
          %204 = dma.hbm_to_vmem [thread:$0]  %s197, 1024, %s199, %s185, 1024, 256, 16
        $region24: #{decoder_forward.11} parent=19 // pred_fallthru
          _
        // Predicated region
        $region25: #{decoder_forward.11} parent=19 // pred_check
          %p205 = pneg %p111
        $region26: #{decoder_forward.11} parent=19 // pred_check_branch
          %207 = sbr.rel (%p205) target = $region28
        $region27: #{decoder_forward.11} parent=19 // pred_region
          %s208 = sand.u32 %s16, 1
          %s209 = scalar_lea.sflag [#allocation7], %s208
          %s210 = sand.u32 %s101, 1
          %s211 = smul.addr %s210, 4
          %s212 = scalar_lea.vmem [#allocation8], %s211
          %s213 = smul.u32 4, %s24
          %s215 = ssub.s32 64, 64
          %216 = vsyncadd %s209, %s215
          %s217 = smul.addr %s213, 16
          %s218 = scalar_lea.hbm %s2, %s217
          %s220 = sshll.u32 %s212, 4
          %s221 = int_to_ptr.vmem [resolvable:$true] %s220
          %223 = dma.hbm_to_vmem [thread:$0]  %s218, 64, %s221, %s209
        $region28: #{decoder_forward.11} parent=19 // pred_fallthru
          _
      $region20: #{decoder_forward.11} parent=5 // pred_fallthru
        _
      %p224 = scmp.le.s32.totalorder 1, %s16
      %p225 = scmp.lt.s32.totalorder %s16, 5
      %p226 = pnand %p224, %p225
      %p227 = pneg %p226
      // Predicated region
      $region29: #{decoder_forward.11} parent=5 // pred_check
        _
      $region30: #{decoder_forward.11} parent=5 // pred_check_branch
        %229 = sbr.rel (%p226) target = $region32
      $region31: #{decoder_forward.11} parent=5 // pred_region
        %s230 = ssub.s32 %s16, 1
        // Predicated region
        $region33: #{decoder_forward.11} parent=31 // pred_check
          %p231 = pneg %p63
        $region34: #{decoder_forward.11} parent=31 // pred_check_branch
          %233 = sbr.rel (%p231) target = $region36
        $region35: #{decoder_forward.11} parent=31 // pred_region
          %234 = dma.done [#allocation4], 256
        $region36: #{decoder_forward.11} parent=31 // pred_fallthru
          _
        %s235 = sand.u32 %s21, 1
        %s236 = scalar_lea.sflag [#allocation7], %s235
        %s237 = sand.u32 %s78, 1
        %s238 = smul.addr %s237, 64
        %s239 = scalar_lea.vmem [#allocation6], %s238
        // Predicated region
        $region37: #{decoder_forward.11} parent=31 // pred_check
          %p240 = pneg %p91
        $region38: #{decoder_forward.11} parent=31 // pred_check_branch
          %242 = sbr.rel (%p240) target = $region40
        $region39: #{decoder_forward.11} parent=31 // pred_region
          %243 = dma.done %s236, 1024
        $region40: #{decoder_forward.11} parent=31 // pred_fallthru
          _
        %s244 = sand.u32 %s21, 1
        %s245 = scalar_lea.sflag [#allocation7], %s244
        %s246 = sand.u32 %s104, 1
        %s247 = smul.addr %s246, 4
        %s248 = scalar_lea.vmem [#allocation8], %s247
        // Predicated region
        $region41: #{decoder_forward.11} parent=31 // pred_check
          %p249 = pneg %p117
        $region42: #{decoder_forward.11} parent=31 // pred_check_branch
          %251 = sbr.rel (%p249) target = $region44
        $region43: #{decoder_forward.11} parent=31 // pred_region
          %252 = dma.done %s245, 64
        $region44: #{decoder_forward.11} parent=31 // pred_fallthru
          _
        %p253 = pneg %p63
        %p254 = pneg %p60
        %s255 = sand.u32 %s21, 1
        %s256 = scalar_lea.sflag [#allocation7], %s255
        %s257 = sand.u32 %s78, 1
        %s258 = smul.addr %s257, 64
        %s259 = scalar_lea.vmem [#allocation6], %s258
        %p260 = pneg %p91
        %p261 = pneg %p88
        %s262 = sand.u32 %s21, 1
        %s263 = scalar_lea.sflag [#allocation7], %s262
        %s264 = sand.u32 %s104, 1
        %s265 = smul.addr %s264, 4
        %s266 = scalar_lea.vmem [#allocation8], %s265
        %p267 = pneg %p117
        %p268 = pneg %p114
        %p269 = pneg %p145
        %p270 = pneg %p142
        %s271 = sand.u32 %s132, 1
        %s272 = scalar_lea.sflag [#allocation5], %s271
        %s273 = sand.u32 %s132, 1
        %s274 = smul.addr %s273, 32
        %s275 = scalar_lea.vmem [#allocation9], %s274
        %s276 = smul.u32 2, %s26
        %s277 = smul.u32 4, %s28
        %s278 = smul.u32 4, %s27
        %s279 = smul.u32 4, %s27
        %s280 = smul.u32 2, %s26
        %s281 = smul.u32 4, %s27
        %p283 = scmp.eq.s32.totalorder %s28, 0
        // Predicated region
        $region45: #{decoder_forward.11} parent=31 // pred_check
          %p284 = pneg %p283
        $region46: #{decoder_forward.11} parent=31 // pred_check_branch
          %286 = sbr.rel (%p284) target = $region48
        $region47: #{decoder_forward.11} parent=31 // pred_region
          %287 = vst [vmem:[#allocation2] sm:$0xff] 0.0
          %288 = vst [vmem:[#allocation2 + $0x8] sm:$0xff] 0.0
          %289 = vst [vmem:[#allocation2 + $0x10] sm:$0xff] 0.0
          %290 = vst [vmem:[#allocation2 + $0x18] sm:$0xff] 0.0
          %291 = vst [vmem:[#allocation2 + $0x20] sm:$0xff] 0.0
          %292 = vst [vmem:[#allocation2 + $0x28] sm:$0xff] 0.0
          %293 = vst [vmem:[#allocation2 + $0x30] sm:$0xff] 0.0
          %294 = vst [vmem:[#allocation2 + $0x38] sm:$0xff] 0.0
        $region48: #{decoder_forward.11} parent=31 // pred_fallthru
          _
        %v295 = vld [vmem:[#allocation2] sm:$0xff]
        %v296 = vld [vmem:[#allocation2 + $0x8] sm:$0xff]
        %v297 = vld [vmem:[#allocation2 + $0x10] sm:$0xff]
        %v298 = vld [vmem:[#allocation2 + $0x18] sm:$0xff]
        %v299 = vld [vmem:[#allocation2 + $0x20] sm:$0xff]
        %v300 = vld [vmem:[#allocation2 + $0x28] sm:$0xff]
        %v301 = vld [vmem:[#allocation2 + $0x30] sm:$0xff]
        %v302 = vld [vmem:[#allocation2 + $0x38] sm:$0xff]
        %v303 = vld [vmem:[#allocation3] sm:$0xff]
        %v304 = vld [vmem:[#allocation3 + $0x8] sm:$0xff]
        %v305 = vpack.c.bf16 %v304, %v303
        %v306 = vld [vmem:[%s239] sm:$0xff]
        %v307 = vld [vmem:[%s239 + $0x8] sm:$0xff]
        %v308 = vld [vmem:[%s239 + $0x10] sm:$0xff]
        %v309 = vld [vmem:[%s239 + $0x18] sm:$0xff]
        %v310 = vld [vmem:[%s239 + $0x20] sm:$0xff]
        %v311 = vld [vmem:[%s239 + $0x28] sm:$0xff]
        %v312 = vld [vmem:[%s239 + $0x30] sm:$0xff]
        %v313 = vld [vmem:[%s239 + $0x38] sm:$0xff]
        %v322 = vunpack.c.l.b16 %v306
        %v323 = vunpack.c.h.b16 %v306
        %v324 = vunpack.c.l.b16 %v307
        %v325 = vunpack.c.h.b16 %v307
        %v326 = vunpack.c.l.b16 %v308
        %v327 = vunpack.c.h.b16 %v308
        %v328 = vunpack.c.l.b16 %v309
        %v329 = vunpack.c.h.b16 %v309
        %v330 = vunpack.c.l.b16 %v310
        %v331 = vunpack.c.h.b16 %v310
        %v332 = vunpack.c.l.b16 %v311
        %v333 = vunpack.c.h.b16 %v311
        %v334 = vunpack.c.l.b16 %v312
        %v335 = vunpack.c.h.b16 %v312
        %v336 = vunpack.c.l.b16 %v313
        %v337 = vunpack.c.h.b16 %v313
        %v338 = vpack.c.b16 %v326, %v322
        %v339 = vpack.c.b16 %v327, %v323
        %v340 = vpack.c.b16 %v328, %v324
        %v341 = vpack.c.b16 %v329, %v325
        %v342 = vpack.c.b16 %v334, %v330
        %v343 = vpack.c.b16 %v335, %v331
        %v344 = vpack.c.b16 %v336, %v332
        %v345 = vpack.c.b16 %v337, %v333
        %vm354 = vcmask 261120
        %v356 = vsel %vm354, %v305, 0
        %358 = vmatprep.subr.bf16.mxu0 %v339
        %359 = vmatpush1.bf16.msra.mxu0 %v338
        %360 = vmatprep.subr.bf16.mxu0 %v343
        %361 = vmatpush1.bf16.msra.mxu0 %v342
        %362 = vmatprep.subr.bf16.mxu0 0
        %363 = vmatpush1.bf16.msra.mxu0 0
        %364 = vmatprep.subr.bf16.mxu0 0
        %365 = vmatpush1.bf16.msra.mxu0 0
        %366 = vmatprep.subr.bf16.mxu0 0
        %367 = vmatpush1.bf16.msra.mxu0 0
        %368 = vmatprep.subr.bf16.mxu0 0
        %369 = vmatpush1.bf16.msra.mxu0 0
        %370 = vmatprep.subr.bf16.mxu0 0
        %371 = vmatpush1.bf16.msra.mxu0 0
        %372 = vmatprep.subr.bf16.mxu0 0
        %373 = vmatpush1.bf16.msra.mxu0 0
        %374 = vmatprep.subr.bf16.mxu0 0
        %375 = vmatpush1.bf16.msra.mxu0 0
        %376 = vmatprep.subr.bf16.mxu0 0
        %377 = vmatpush1.bf16.msra.mxu0 0
        %378 = vmatprep.subr.bf16.mxu0 0
        %379 = vmatpush1.bf16.msra.mxu0 0
        %380 = vmatprep.subr.bf16.mxu0 0
        %381 = vmatpush1.bf16.msra.mxu0 0
        %382 = vmatprep.subr.bf16.mxu0 0
        %383 = vmatpush1.bf16.msra.mxu0 0
        %384 = vmatprep.subr.bf16.mxu0 0
        %385 = vmatpush1.bf16.msra.mxu0 0
        %386 = vmatprep.subr.bf16.mxu0 0
        %387 = vmatpush1.bf16.msra.mxu0 0
        %388 = vmatprep.subr.bf16.mxu0 0
        %389 = vmatpush1.bf16.msra.mxu0 0
        %390 = vmatprep.mubr.bf16.mxu0 0
        %391 = vmatmul.mubr.bf16.gmra.mrb[0].mxu0 %v356
        %v392 = vpop.f32.mrb[0].mxu0
        %v393 = vadd.f32 0.0, %v392
        %v394 = vpop.f32.mrb[0].mxu0
        %v395 = vadd.f32 0.0, %v394
        %v396 = vpop.f32.mrb[0].mxu0
        %v397 = vadd.f32 0.0, %v396
        %v398 = vpop.f32.mrb[0].mxu0
        %v399 = vadd.f32 0.0, %v398
        %400 = vdwg.mxu0
        %401 = vmatprep.subr.bf16.mxu0 %v341
        %402 = vmatpush1.bf16.msra.mxu0 %v340
        %403 = vmatprep.subr.bf16.mxu0 %v345
        %404 = vmatpush1.bf16.msra.mxu0 %v344
        %405 = vmatprep.subr.bf16.mxu0 0
        %406 = vmatpush1.bf16.msra.mxu0 0
        %407 = vmatprep.subr.bf16.mxu0 0
        %408 = vmatpush1.bf16.msra.mxu0 0
        %409 = vmatprep.subr.bf16.mxu0 0
        %410 = vmatpush1.bf16.msra.mxu0 0
        %411 = vmatprep.subr.bf16.mxu0 0
        %412 = vmatpush1.bf16.msra.mxu0 0
        %413 = vmatprep.subr.bf16.mxu0 0
        %414 = vmatpush1.bf16.msra.mxu0 0
        %415 = vmatprep.subr.bf16.mxu0 0
        %416 = vmatpush1.bf16.msra.mxu0 0
        %417 = vmatprep.subr.bf16.mxu0 0
        %418 = vmatpush1.bf16.msra.mxu0 0
        %419 = vmatprep.subr.bf16.mxu0 0
        %420 = vmatpush1.bf16.msra.mxu0 0
        %421 = vmatprep.subr.bf16.mxu0 0
        %422 = vmatpush1.bf16.msra.mxu0 0
        %423 = vmatprep.subr.bf16.mxu0 0
        %424 = vmatpush1.bf16.msra.mxu0 0
        %425 = vmatprep.subr.bf16.mxu0 0
        %426 = vmatpush1.bf16.msra.mxu0 0
        %427 = vmatprep.subr.bf16.mxu0 0
        %428 = vmatpush1.bf16.msra.mxu0 0
        %429 = vmatprep.subr.bf16.mxu0 0
        %430 = vmatpush1.bf16.msra.mxu0 0
        %431 = vmatprep.subr.bf16.mxu0 0
        %432 = vmatpush1.bf16.msra.mxu0 0
        %433 = vmatprep.mubr.bf16.mxu0 0
        %434 = vmatmul.mubr.bf16.gmra.mrb[0].mxu0 %v356
        %v435 = vpop.f32.mrb[0].mxu0
        %v436 = vadd.f32 0.0, %v435
        %v437 = vpop.f32.mrb[0].mxu0
        %v438 = vadd.f32 0.0, %v437
        %v439 = vpop.f32.mrb[0].mxu0
        %v440 = vadd.f32 0.0, %v439
        %v441 = vpop.f32.mrb[0].mxu0
        %v442 = vadd.f32 0.0, %v441
        %443 = vdwg.mxu0
        %v444 = vadd.f32 %v295, %v393
        %v445 = vadd.f32 %v296, %v395
        %v446 = vadd.f32 %v297, %v436
        %v447 = vadd.f32 %v298, %v438
        %v448 = vadd.f32 %v299, %v397
        %v449 = vadd.f32 %v300, %v399
        %v450 = vadd.f32 %v301, %v440
        %v451 = vadd.f32 %v302, %v442
        %452 = vst [vmem:[#allocation2] sm:$0xff] %v444
        %453 = vst [vmem:[#allocation2 + $0x8] sm:$0xff] %v445
        %454 = vst [vmem:[#allocation2 + $0x10] sm:$0xff] %v446
        %455 = vst [vmem:[#allocation2 + $0x18] sm:$0xff] %v447
        %456 = vst [vmem:[#allocation2 + $0x20] sm:$0xff] %v448
        %457 = vst [vmem:[#allocation2 + $0x28] sm:$0xff] %v449
        %458 = vst [vmem:[#allocation2 + $0x30] sm:$0xff] %v450
        %459 = vst [vmem:[#allocation2 + $0x38] sm:$0xff] %v451
        // Predicated region
        $region49: #{decoder_forward.11} parent=31 // pred_check
          %p460 = pneg %p283
        $region50: #{decoder_forward.11} parent=31 // pred_check_branch
          %462 = sbr.rel (%p460) target = $region52
        $region51: #{decoder_forward.11} parent=31 // pred_region
          %v463 = vld [vmem:[#allocation2] sm:$0xff]
          %v464 = vld [vmem:[#allocation2 + $0x8] sm:$0xff]
          %v465 = vld [vmem:[#allocation2 + $0x10] sm:$0xff]
          %v466 = vld [vmem:[#allocation2 + $0x18] sm:$0xff]
          %v467 = vld [vmem:[#allocation2 + $0x20] sm:$0xff]
          %v468 = vld [vmem:[#allocation2 + $0x28] sm:$0xff]
          %v469 = vld [vmem:[#allocation2 + $0x30] sm:$0xff]
          %v470 = vld [vmem:[#allocation2 + $0x38] sm:$0xff]
          %v471 = vld [vmem:[%s248] sm:$0xf]
          %v473 = vlaneseq
          %v474 = vshrl.u32 %v473, 7
          %v475 = vsub.s32 0, %v474
          %v476 = vrot.slane %v471, %v475
          %v477 = vlaneseq
          %v478 = vshrl.u32 %v477, 7
          %v479 = vsub.s32 1, %v478
          %v480 = vrot.slane %v471, %v479
          %v481 = vlaneseq
          %v482 = vshrl.u32 %v481, 7
          %v483 = vsub.s32 2, %v482
          %v484 = vrot.slane %v471, %v483
          %v485 = vlaneseq
          %v486 = vshrl.u32 %v485, 7
          %v487 = vsub.s32 3, %v486
          %v488 = vrot.slane %v471, %v487
          %v493 = vadd.f32 %v463, %v476
          %v494 = vadd.f32 %v464, %v480
          %v495 = vadd.f32 %v465, %v484
          %v496 = vadd.f32 %v466, %v488
          %v497 = vadd.f32 %v467, %v476
          %v498 = vadd.f32 %v468, %v480
          %v499 = vadd.f32 %v469, %v484
          %v500 = vadd.f32 %v470, %v488
          %v501 = vmax.f32 %v493, 0.0
          %v502 = vmax.f32 %v494, 0.0
          %v503 = vmax.f32 %v495, 0.0
          %v504 = vmax.f32 %v496, 0.0
          %v505 = vmax.f32 %v497, 0.0
          %v506 = vmax.f32 %v498, 0.0
          %v507 = vmax.f32 %v499, 0.0
          %v508 = vmax.f32 %v500, 0.0
          %v509 = vpack.c.bf16 %v505, %v501
          %v510 = vpack.c.bf16 %v506, %v502
          %v511 = vpack.c.bf16 %v507, %v503
          %v512 = vpack.c.bf16 %v508, %v504
          %v517 = vunpack.c.l.b16 %v509
          %v518 = vunpack.c.l.b16 %v510
          %v519 = vunpack.c.l.b16 %v511
          %v520 = vunpack.c.l.b16 %v512
          %v521 = vunpack.c.h.b16 %v509
          %v522 = vunpack.c.h.b16 %v510
          %v523 = vunpack.c.h.b16 %v511
          %v524 = vunpack.c.h.b16 %v512
          %v525 = vpack.c.b16 %v518, %v517
          %v526 = vpack.c.b16 %v520, %v519
          %v527 = vpack.c.b16 %v522, %v521
          %v528 = vpack.c.b16 %v524, %v523
          %533 = vst [vmem:[%s275] sm:$0xff] %v525
          %534 = vst [vmem:[%s275 + $0x8] sm:$0xff] %v526
          %535 = vst [vmem:[%s275 + $0x10] sm:$0xff] %v527
          %536 = vst [vmem:[%s275 + $0x18] sm:$0xff] %v528
        $region52: #{decoder_forward.11} parent=31 // pred_fallthru
          _
        %s537 = sand.u32 %s132, 1
        %s538 = scalar_lea.sflag [#allocation5], %s537
        %s539 = sand.u32 %s132, 1
        %s540 = smul.addr %s539, 32
        %s541 = scalar_lea.vmem [#allocation9], %s540
        // Predicated region
        $region53: #{decoder_forward.11} parent=31 // pred_check
          %p542 = pneg %p142
        $region54: #{decoder_forward.11} parent=31 // pred_check_branch
          %544 = sbr.rel (%p542) target = $region56
        $region55: #{decoder_forward.11} parent=31 // pred_region
          %s545 = smul.u32 2, %s26
          %s546 = smul.u32 4, %s27
          %s548 = ssub.s32 512, 512
          %549 = vsyncadd %s538, %s548
          %s550 = smul.addr %s545, 16
          %s551 = sadd.s32 %s546, %s550
          %s552 = smul.addr %s551, 64
          %s553 = scalar_lea.hbm %s3, %s552
          %s554 = sshll.u32 %s541, 4
          %s555 = int_to_ptr.vmem [resolvable:$true] %s554
          %560 = dma.vmem_to_hbm [thread:$0]  %s555, 512, %s553, %s538, 256, 1024, 16
        $region56: #{decoder_forward.11} parent=31 // pred_fallthru
          _
      $region32: #{decoder_forward.11} parent=5 // pred_fallthru
        _
      %p561 = scmp.le.s32.totalorder 2, %s16
      // Predicated region
      $region57: #{decoder_forward.11} parent=5 // pred_check
        %p562 = pneg %p561
      $region58: #{decoder_forward.11} parent=5 // pred_check_branch
        %564 = sbr.rel (%p562) target = $region60
      $region59: #{decoder_forward.11} parent=5 // pred_region
        %s565 = ssub.s32 %s16, 2
        // Predicated region
        $region61: #{decoder_forward.11} parent=59 // pred_check
          %p566 = pneg %p148
        $region62: #{decoder_forward.11} parent=59 // pred_check_branch
          %568 = sbr.rel (%p566) target = $region64
        $region63: #{decoder_forward.11} parent=59 // pred_region
          %s569 = sand.u32 %s133, 1
          %s570 = scalar_lea.sflag [#allocation5], %s569
          %s571 = sand.u32 %s133, 1
          %s572 = smul.addr %s571, 32
          %s573 = scalar_lea.vmem [#allocation9], %s572
          %574 = dma.done %s570, 512
        $region64: #{decoder_forward.11} parent=59 // pred_fallthru
          _
      $region60: #{decoder_forward.11} parent=5 // pred_fallthru
        _
    $region6: #{decoder_forward.11} parent=1 // loop_footer
      %s20 = sadd.s32 1, %s16
    $region7: #{decoder_forward.11} parent=1 // loop_footer_branch
      %15 = sbr.rel target = $region3
    $region8: #{decoder_forward.11} parent=1 // loop_exit
      _
    %575 = vsyncpa [#allocation4], 1
    %s576 = scalar_lea.sflag [#allocation4], 1
    %577 = vsyncpa %s576, 1
    %578 = vsyncpa [#allocation7], 1
    %s579 = scalar_lea.sflag [#allocation7], 1
    %580 = vsyncpa %s579, 1
    %581 = vsyncpa [#allocation5], 1
    %s582 = scalar_lea.sflag [#allocation5], 1
    %583 = vsyncpa %s582, 1

// kernel: decoder_forward.9
$region0: #{decoder_forward.9}
  #allocation0 [shape = 'u32[]', space=smem, size = 0x4, offset = 0x4, fixed_abs, tag = 'smem constant byte address 0x4 - core index']
  #allocation1 [shape = 'u32[144,128]{1,0:T(1,128)}', space=vmem, size = 0x12000, scoped, tag = 'internal scratch']
  %s0 = inlined_call_operand.hbm [shape: f32[2,8,32], index: 0, kind: input, shape index: {}]
  %s1 = inlined_call_operand.hbm [shape: bf16[32,96], index: 1, kind: input, shape index: {}]
  %s2 = inlined_call_operand.hbm [shape: f32[1,96], index: 2, kind: input, shape index: {}]
  %s3 = inlined_call_operand.hbm [shape: bf16[32,32], index: 3, kind: input, shape index: {}]
  %s4 = inlined_call_operand.hbm [shape: f32[1,32], index: 4, kind: input, shape index: {}]
  %s5 = inlined_call_operand.hbm [shape: f32[1,32], index: 5, kind: input, shape index: {}]
  %s6 = inlined_call_operand.hbm [shape: f32[1,32], index: 6, kind: input, shape index: {}]
  %s7 = inlined_call_operand.hbm [shape: f32[2,8,32], index: 7, kind: output, shape index: {}]
  %s8 = sld [smem:[#allocation0]]
  $region89: #{decoder_forward.9} parent=0
    _
  %s10 = ssub.s32 1, %s8
  %s11 = scalar_select 0, %s10, %s8
  $region1: #{decoder_forward.9} parent=0
    #allocation2 [shape = 'u8[8192]{0}', space=vmem, size = 0x2000, scoped, tag = 'input window, operand 0']
    #allocation3 [shape = 's32[2]{0}', space=sflag, size = 0x8, scoped, tag = 'scoped memory for decoder_forward.9']
    #allocation4 [shape = 's32[2]{0}', space=sflag, size = 0x8, scoped, tag = 'scoped memory for decoder_forward.9']
    #allocation5 [shape = 'u8[8192]{0}', space=vmem, size = 0x2000, scoped, tag = 'input window, operand 1, single buffered']
    #allocation6 [shape = 's32[1]{0}', space=sflag, size = 0x4, scoped, tag = 'scoped memory for decoder_forward.9']
    #allocation7 [shape = 'u8[512]{0}', space=vmem, size = 0x400, scoped, tag = 'input window, operand 2, single buffered']
    #allocation8 [shape = 'u8[8192]{0}', space=vmem, size = 0x2000, scoped, tag = 'input window, operand 3, single buffered']
    #allocation9 [shape = 's32[1]{0}', space=sflag, size = 0x4, scoped, tag = 'scoped memory for decoder_forward.9']
    #allocation10 [shape = 'u8[512]{0}', space=vmem, size = 0x400, scoped, tag = 'input window, operand 4, single buffered']
    #allocation11 [shape = 'u8[512]{0}', space=vmem, size = 0x400, scoped, tag = 'input window, operand 5, single buffered']
    #allocation12 [shape = 's32[1]{0}', space=sflag, size = 0x4, scoped, tag = 'scoped memory for decoder_forward.9']
    #allocation13 [shape = 'u8[512]{0}', space=vmem, size = 0x400, scoped, tag = 'input window, operand 6, single buffered']
    #allocation14 [shape = 'u8[8192]{0}', space=vmem, size = 0x2000, scoped, tag = 'output window, operand 0']
    %12 = vsyncpa [#allocation3], 0
    %s13 = scalar_lea.sflag [#allocation3], 1
    %14 = vsyncpa %s13, 0
    %15 = vsyncpa [#allocation6], 0
    %16 = vsyncpa [#allocation9], 0
    %17 = vsyncpa [#allocation12], 0
    %18 = vsyncpa [#allocation4], 0
    %s19 = scalar_lea.sflag [#allocation4], 1
    %20 = vsyncpa %s19, 0
    loop: start=0, step=1, limit=4
    $region2: #{decoder_forward.9} parent=1 // loop_pre_header
      _
    $region3: #{decoder_forward.9} parent=1 // loop_header
      %s22 = sphi 0, %s26
      %p23 = scmp.ge.s32.totalorder %s22, 4
      %s32 = sphi 0, %s34
      %s35 = sphi 0, %s32
      %s36 = sphi 0, %s35
      %s52 = sphi 0, %s36
      %s56 = sphi 0, %s56
      %s58 = sphi 0, %s56
      %s59 = sphi 0, %s58
      %s73 = sphi 0, %s59
      %s77 = sphi 0, %s77
      %s79 = sphi 0, %s77
      %s80 = sphi 0, %s79
      %s94 = sphi 0, %s80
      %s98 = sphi 0, %s98
      %s100 = sphi 0, %s98
      %s101 = sphi 0, %s100
      %s115 = sphi 0, %s101
      %s119 = sphi 0, %s119
      %s121 = sphi 0, %s119
      %s122 = sphi 0, %s121
      %s136 = sphi 0, %s122
      %s140 = sphi 0, %s140
      %s142 = sphi 0, %s140
      %s143 = sphi 0, %s142
      %s157 = sphi 0, %s143
      %s161 = sphi 0, %s161
      %s163 = sphi 0, %s161
      %s164 = sphi 0, %s163
      %s178 = sphi 0, %s164
      %s184 = sphi 0, %s186
      %s187 = sphi 0, %s184
      %s188 = sphi 0, %s187
      %s204 = sphi 0, %s188
    $region4: #{decoder_forward.9} parent=1 // loop_header_branch
      %25 = sbr.rel (%p23) target = $region8
    $region5: #{decoder_forward.9} parent=1 // loop_body
      %s27 = ssub.s32 %s22, 1
      %s28 = ssub.s32 %s22, 2
      %s29 = sadd.s32 %s22, 1
      %s30 = ssub.s32 %s22, %s29
      %p31 = scmp.eq.s32.totalorder %s30, 0
      %s33 = sadd.s32 %s32, 1
      %s34 = scalar_select %p31, %s32, %s33
      %p37 = pneg %p31
      %p38 = scmp.eq.s32.totalorder %s22, 1
      %p39 = por %p37, %p38
      %p40 = scmp.ne.s32.totalorder %s32, %s35
      %p41 = scmp.eq.s32.totalorder %s22, 0
      %p42 = por %p40, %p41
      %p43 = scmp.ne.s32.totalorder %s32, %s35
      %p44 = scmp.eq.s32.totalorder %s27, 1
      %p45 = por %p43, %p44
      %p46 = scmp.ne.s32.totalorder %s35, %s36
      %p47 = scmp.eq.s32.totalorder %s27, 0
      %p48 = por %p46, %p47
      %p49 = scmp.ne.s32.totalorder %s35, %s36
      %p50 = scmp.eq.s32.totalorder %s28, 1
      %p51 = por %p49, %p50
      %p53 = scmp.ne.s32.totalorder %s36, %s52
      %p54 = scmp.eq.s32.totalorder %s28, 0
      %p55 = por %p53, %p54
      %s57 = sadd.s32 %s56, 1
      %p60 = scmp.eq.s32.totalorder %s22, 1
      %p61 = scmp.ne.s32.totalorder %s56, %s58
      %p62 = scmp.eq.s32.totalorder %s22, 0
      %p63 = por %p61, %p62
      %p64 = scmp.ne.s32.totalorder %s56, %s58
      %p65 = scmp.eq.s32.totalorder %s27, 1
      %p66 = por %p64, %p65
      %p67 = scmp.ne.s32.totalorder %s58, %s59
      %p68 = scmp.eq.s32.totalorder %s27, 0
      %p69 = por %p67, %p68
      %p70 = scmp.ne.s32.totalorder %s58, %s59
      %p71 = scmp.eq.s32.totalorder %s28, 1
      %p72 = por %p70, %p71
      %p74 = scmp.ne.s32.totalorder %s59, %s73
      %p75 = scmp.eq.s32.totalorder %s28, 0
      %p76 = por %p74, %p75
      %s78 = sadd.s32 %s77, 1
      %p81 = scmp.eq.s32.totalorder %s22, 1
      %p82 = scmp.ne.s32.totalorder %s77, %s79
      %p83 = scmp.eq.s32.totalorder %s22, 0
      %p84 = por %p82, %p83
      %p85 = scmp.ne.s32.totalorder %s77, %s79
      %p86 = scmp.eq.s32.totalorder %s27, 1
      %p87 = por %p85, %p86
      %p88 = scmp.ne.s32.totalorder %s79, %s80
      %p89 = scmp.eq.s32.totalorder %s27, 0
      %p90 = por %p88, %p89
      %p91 = scmp.ne.s32.totalorder %s79, %s80
      %p92 = scmp.eq.s32.totalorder %s28, 1
      %p93 = por %p91, %p92
      %p95 = scmp.ne.s32.totalorder %s80, %s94
      %p96 = scmp.eq.s32.totalorder %s28, 0
      %p97 = por %p95, %p96
      %s99 = sadd.s32 %s98, 1
      %p102 = scmp.eq.s32.totalorder %s22, 1
      %p103 = scmp.ne.s32.totalorder %s98, %s100
      %p104 = scmp.eq.s32.totalorder %s22, 0
      %p105 = por %p103, %p104
      %p106 = scmp.ne.s32.totalorder %s98, %s100
      %p107 = scmp.eq.s32.totalorder %s27, 1
      %p108 = por %p106, %p107
      %p109 = scmp.ne.s32.totalorder %s100, %s101
      %p110 = scmp.eq.s32.totalorder %s27, 0
      %p111 = por %p109, %p110
      %p112 = scmp.ne.s32.totalorder %s100, %s101
      %p113 = scmp.eq.s32.totalorder %s28, 1
      %p114 = por %p112, %p113
      %p116 = scmp.ne.s32.totalorder %s101, %s115
      %p117 = scmp.eq.s32.totalorder %s28, 0
      %p118 = por %p116, %p117
      %s120 = sadd.s32 %s119, 1
      %p123 = scmp.eq.s32.totalorder %s22, 1
      %p124 = scmp.ne.s32.totalorder %s119, %s121
      %p125 = scmp.eq.s32.totalorder %s22, 0
      %p126 = por %p124, %p125
      %p127 = scmp.ne.s32.totalorder %s119, %s121
      %p128 = scmp.eq.s32.totalorder %s27, 1
      %p129 = por %p127, %p128
      %p130 = scmp.ne.s32.totalorder %s121, %s122
      %p131 = scmp.eq.s32.totalorder %s27, 0
      %p132 = por %p130, %p131
      %p133 = scmp.ne.s32.totalorder %s121, %s122
      %p134 = scmp.eq.s32.totalorder %s28, 1
      %p135 = por %p133, %p134
      %p137 = scmp.ne.s32.totalorder %s122, %s136
      %p138 = scmp.eq.s32.totalorder %s28, 0
      %p139 = por %p137, %p138
      %s141 = sadd.s32 %s140, 1
      %p144 = scmp.eq.s32.totalorder %s22, 1
      %p145 = scmp.ne.s32.totalorder %s140, %s142
      %p146 = scmp.eq.s32.totalorder %s22, 0
      %p147 = por %p145, %p146
      %p148 = scmp.ne.s32.totalorder %s140, %s142
      %p149 = scmp.eq.s32.totalorder %s27, 1
      %p150 = por %p148, %p149
      %p151 = scmp.ne.s32.totalorder %s142, %s143
      %p152 = scmp.eq.s32.totalorder %s27, 0
      %p153 = por %p151, %p152
      %p154 = scmp.ne.s32.totalorder %s142, %s143
      %p155 = scmp.eq.s32.totalorder %s28, 1
      %p156 = por %p154, %p155
      %p158 = scmp.ne.s32.totalorder %s143, %s157
      %p159 = scmp.eq.s32.totalorder %s28, 0
      %p160 = por %p158, %p159
      %s162 = sadd.s32 %s161, 1
      %p165 = scmp.eq.s32.totalorder %s22, 1
      %p166 = scmp.ne.s32.totalorder %s161, %s163
      %p167 = scmp.eq.s32.totalorder %s22, 0
      %p168 = por %p166, %p167
      %p169 = scmp.ne.s32.totalorder %s161, %s163
      %p170 = scmp.eq.s32.totalorder %s27, 1
      %p171 = por %p169, %p170
      %p172 = scmp.ne.s32.totalorder %s163, %s164
      %p173 = scmp.eq.s32.totalorder %s27, 0
      %p174 = por %p172, %p173
      %p175 = scmp.ne.s32.totalorder %s163, %s164
      %p176 = scmp.eq.s32.totalorder %s28, 1
      %p177 = por %p175, %p176
      %p179 = scmp.ne.s32.totalorder %s164, %s178
      %p180 = scmp.eq.s32.totalorder %s28, 0
      %p181 = por %p179, %p180
      %s182 = ssub.s32 %s22, %s29
      %p183 = scmp.eq.s32.totalorder %s182, 0
      %s185 = sadd.s32 %s184, 1
      %s186 = scalar_select %p183, %s184, %s185
      %p189 = pneg %p183
      %p190 = scmp.eq.s32.totalorder %s22, 1
      %p191 = por %p189, %p190
      %p192 = scmp.ne.s32.totalorder %s184, %s187
      %p193 = scmp.eq.s32.totalorder %s22, 0
      %p194 = por %p192, %p193
      %p195 = scmp.ne.s32.totalorder %s184, %s187
      %p196 = scmp.eq.s32.totalorder %s27, 1
      %p197 = por %p195, %p196
      %p198 = scmp.ne.s32.totalorder %s187, %s188
      %p199 = scmp.eq.s32.totalorder %s27, 0
      %p200 = por %p198, %p199
      %p201 = scmp.ne.s32.totalorder %s187, %s188
      %p202 = scmp.eq.s32.totalorder %s28, 1
      %p203 = por %p201, %p202
      %p205 = scmp.ne.s32.totalorder %s188, %s204
      %p206 = scmp.eq.s32.totalorder %s28, 0
      %p207 = por %p205, %p206
      %p208 = scmp.le.s32.totalorder 1, %s22
      %p209 = scmp.lt.s32.totalorder %s22, 3
      %p210 = pnand %p208, %p209
      %p211 = pneg %p210
      // Predicated region
      $region9: #{decoder_forward.9} parent=5 // pred_check
        _
      $region10: #{decoder_forward.9} parent=5 // pred_check_branch
        %213 = sbr.rel (%p210) target = $region12
      $region11: #{decoder_forward.9} parent=5 // pred_region
        %s214 = ssub.s32 %s22, 1
        // Predicated region
        $region13: #{decoder_forward.9} parent=11 // pred_check
          %p215 = pneg %p69
        $region14: #{decoder_forward.9} parent=11 // pred_check_branch
          %217 = sbr.rel (%p215) target = $region16
        $region15: #{decoder_forward.9} parent=11 // pred_region
          %s219 = ssub.s32 256, 256
          %220 = vsyncadd [#allocation6], %s219
          %s221 = sshll.u32 [#allocation5], 4
          %s222 = int_to_ptr.vmem [resolvable:$true] %s221
          %227 = dma.hbm_to_vmem [thread:$0]  %s1, 256, %s222, [#allocation6], 64, 64, 4
        $region16: #{decoder_forward.9} parent=11 // pred_fallthru
          _
        // Predicated region
        $region17: #{decoder_forward.9} parent=11 // pred_check
          %p228 = pneg %p90
        $region18: #{decoder_forward.9} parent=11 // pred_check_branch
          %230 = sbr.rel (%p228) target = $region20
        $region19: #{decoder_forward.9} parent=11 // pred_region
          %s232 = ssub.s32 16, 16
          %233 = vsyncadd [#allocation6], %s232
          %s235 = sshll.u32 [#allocation7], 4
          %s236 = int_to_ptr.vmem [resolvable:$true] %s235
          %238 = dma.hbm_to_vmem [thread:$0]  %s2, 16, %s236, [#allocation6]
        $region20: #{decoder_forward.9} parent=11 // pred_fallthru
          _
        // Predicated region
        $region21: #{decoder_forward.9} parent=11 // pred_check
          %p239 = pneg %p111
        $region22: #{decoder_forward.9} parent=11 // pred_check_branch
          %241 = sbr.rel (%p239) target = $region24
        $region23: #{decoder_forward.9} parent=11 // pred_region
          %s243 = ssub.s32 256, 256
          %244 = vsyncadd [#allocation9], %s243
          %s245 = sshll.u32 [#allocation8], 4
          %s246 = int_to_ptr.vmem [resolvable:$true] %s245
          %251 = dma.hbm_to_vmem [thread:$0]  %s3, 256, %s246, [#allocation9], 64, 64, 4
        $region24: #{decoder_forward.9} parent=11 // pred_fallthru
          _
        // Predicated region
        $region25: #{decoder_forward.9} parent=11 // pred_check
          %p252 = pneg %p132
        $region26: #{decoder_forward.9} parent=11 // pred_check_branch
          %254 = sbr.rel (%p252) target = $region28
        $region27: #{decoder_forward.9} parent=11 // pred_region
          %s256 = ssub.s32 16, 16
          %257 = vsyncadd [#allocation9], %s256
          %s259 = sshll.u32 [#allocation10], 4
          %s260 = int_to_ptr.vmem [resolvable:$true] %s259
          %262 = dma.hbm_to_vmem [thread:$0]  %s4, 16, %s260, [#allocation9]
        $region28: #{decoder_forward.9} parent=11 // pred_fallthru
          _
        // Predicated region
        $region29: #{decoder_forward.9} parent=11 // pred_check
          %p263 = pneg %p153
        $region30: #{decoder_forward.9} parent=11 // pred_check_branch
          %265 = sbr.rel (%p263) target = $region32
        $region31: #{decoder_forward.9} parent=11 // pred_region
          %s267 = ssub.s32 16, 16
          %268 = vsyncadd [#allocation12], %s267
          %s270 = sshll.u32 [#allocation11], 4
          %s271 = int_to_ptr.vmem [resolvable:$true] %s270
          %273 = dma.hbm_to_vmem [thread:$0]  %s5, 16, %s271, [#allocation12]
        $region32: #{decoder_forward.9} parent=11 // pred_fallthru
          _
        // Predicated region
        $region33: #{decoder_forward.9} parent=11 // pred_check
          %p274 = pneg %p174
        $region34: #{decoder_forward.9} parent=11 // pred_check_branch
          %276 = sbr.rel (%p274) target = $region36
        $region35: #{decoder_forward.9} parent=11 // pred_region
          %s278 = ssub.s32 16, 16
          %279 = vsyncadd [#allocation12], %s278
          %s281 = sshll.u32 [#allocation13], 4
          %s282 = int_to_ptr.vmem [resolvable:$true] %s281
          %284 = dma.hbm_to_vmem [thread:$0]  %s6, 16, %s282, [#allocation12]
        $region36: #{decoder_forward.9} parent=11 // pred_fallthru
          _
      $region12: #{decoder_forward.9} parent=5 // pred_fallthru
        _
      %p285 = scmp.lt.s32.totalorder %s22, 2
      // Predicated region
      $region37: #{decoder_forward.9} parent=5 // pred_check
        %p286 = pneg %p285
      $region38: #{decoder_forward.9} parent=5 // pred_check_branch
        %288 = sbr.rel (%p286) target = $region40
      $region39: #{decoder_forward.9} parent=5 // pred_region
        // Predicated region
        $region41: #{decoder_forward.9} parent=39 // pred_check
          %p289 = pneg %p42
        $region42: #{decoder_forward.9} parent=39 // pred_check_branch
          %291 = sbr.rel (%p289) target = $region44
        $region43: #{decoder_forward.9} parent=39 // pred_region
          %s292 = sand.u32 %s32, 1
          %s293 = scalar_lea.sflag [#allocation3], %s292
          %s294 = sand.u32 %s32, 1
          %s295 = smul.addr %s294, 8
          %s296 = scalar_lea.vmem [#allocation2], %s295
          %s298 = ssub.s32 128, 128
          %299 = vsyncadd %s293, %s298
          %s300 = smul.addr %s22, 128
          %s301 = scalar_lea.hbm %s0, %s300
          %s303 = sshll.u32 %s296, 4
          %s304 = int_to_ptr.vmem [resolvable:$true] %s303
          %306 = dma.hbm_to_vmem [thread:$0]  %s301, 128, %s304, %s293
        $region44: #{decoder_forward.9} parent=39 // pred_fallthru
          _
      $region40: #{decoder_forward.9} parent=5 // pred_fallthru
        _
      %p307 = scmp.le.s32.totalorder 1, %s22
      %p308 = scmp.lt.s32.totalorder %s22, 3
      %p309 = pnand %p307, %p308
      %p310 = pneg %p309
      // Predicated region
      $region45: #{decoder_forward.9} parent=5 // pred_check
        _
      $region46: #{decoder_forward.9} parent=5 // pred_check_branch
        %312 = sbr.rel (%p309) target = $region48
      $region47: #{decoder_forward.9} parent=5 // pred_region
        %s313 = ssub.s32 %s22, 1
        %s314 = sand.u32 %s35, 1
        %s315 = scalar_lea.sflag [#allocation3], %s314
        %s316 = sand.u32 %s35, 1
        %s317 = smul.addr %s316, 8
        %s318 = scalar_lea.vmem [#allocation2], %s317
        // Predicated region
        $region49: #{decoder_forward.9} parent=47 // pred_check
          %p319 = pneg %p48
        $region50: #{decoder_forward.9} parent=47 // pred_check_branch
          %321 = sbr.rel (%p319) target = $region52
        $region51: #{decoder_forward.9} parent=47 // pred_region
          %322 = dma.done %s315, 128
        $region52: #{decoder_forward.9} parent=47 // pred_fallthru
          _
        // Predicated region
        $region53: #{decoder_forward.9} parent=47 // pred_check
          %p323 = pneg %p69
        $region54: #{decoder_forward.9} parent=47 // pred_check_branch
          %325 = sbr.rel (%p323) target = $region56
        $region55: #{decoder_forward.9} parent=47 // pred_region
          %326 = dma.done [#allocation6], 256
        $region56: #{decoder_forward.9} parent=47 // pred_fallthru
          _
        // Predicated region
        $region57: #{decoder_forward.9} parent=47 // pred_check
          %p327 = pneg %p90
        $region58: #{decoder_forward.9} parent=47 // pred_check_branch
          %329 = sbr.rel (%p327) target = $region60
        $region59: #{decoder_forward.9} parent=47 // pred_region
          %330 = dma.done [#allocation6], 16
        $region60: #{decoder_forward.9} parent=47 // pred_fallthru
          _
        // Predicated region
        $region61: #{decoder_forward.9} parent=47 // pred_check
          %p331 = pneg %p111
        $region62: #{decoder_forward.9} parent=47 // pred_check_branch
          %333 = sbr.rel (%p331) target = $region64
        $region63: #{decoder_forward.9} parent=47 // pred_region
          %334 = dma.done [#allocation9], 256
        $region64: #{decoder_forward.9} parent=47 // pred_fallthru
          _
        // Predicated region
        $region65: #{decoder_forward.9} parent=47 // pred_check
          %p335 = pneg %p132
        $region66: #{decoder_forward.9} parent=47 // pred_check_branch
          %337 = sbr.rel (%p335) target = $region68
        $region67: #{decoder_forward.9} parent=47 // pred_region
          %338 = dma.done [#allocation9], 16
        $region68: #{decoder_forward.9} parent=47 // pred_fallthru
          _
        // Predicated region
        $region69: #{decoder_forward.9} parent=47 // pred_check
          %p339 = pneg %p153
        $region70: #{decoder_forward.9} parent=47 // pred_check_branch
          %341 = sbr.rel (%p339) target = $region72
        $region71: #{decoder_forward.9} parent=47 // pred_region
          %342 = dma.done [#allocation12], 16
        $region72: #{decoder_forward.9} parent=47 // pred_fallthru
          _
        // Predicated region
        $region73: #{decoder_forward.9} parent=47 // pred_check
          %p343 = pneg %p174
        $region74: #{decoder_forward.9} parent=47 // pred_check_branch
          %345 = sbr.rel (%p343) target = $region76
        $region75: #{decoder_forward.9} parent=47 // pred_region
          %346 = dma.done [#allocation12], 16
        $region76: #{decoder_forward.9} parent=47 // pred_fallthru
          _
        %s347 = sand.u32 %s35, 1
        %s348 = scalar_lea.sflag [#allocation3], %s347
        %s349 = sand.u32 %s35, 1
        %s350 = smul.addr %s349, 8
        %s351 = scalar_lea.vmem [#allocation2], %s350
        %p352 = pneg %p48
        %p353 = pneg %p45
        %p354 = pneg %p69
        %p355 = pneg %p66
        %p356 = pneg %p90
        %p357 = pneg %p87
        %p358 = pneg %p111
        %p359 = pneg %p108
        %p360 = pneg %p132
        %p361 = pneg %p129
        %p362 = pneg %p153
        %p363 = pneg %p150
        %p364 = pneg %p174
        %p365 = pneg %p171
        %p366 = pneg %p200
        %p367 = pneg %p197
        %s368 = sand.u32 %s187, 1
        %s369 = scalar_lea.sflag [#allocation4], %s368
        %s370 = sand.u32 %s187, 1
        %s371 = smul.addr %s370, 8
        %s372 = scalar_lea.vmem [#allocation14], %s371
        %v374 = vld [vmem:[%s318] sm:$0xff]
        %v375 = vpack.c.bf16 %v374, %v374
        %v376 = vld [vmem:[#allocation5] sm:$0xf]
        %v377 = vld [vmem:[#allocation5 + $0x4] sm:$0xf]
        %v378 = vld [vmem:[#allocation5 + $0x8] sm:$0xf]
        %v379 = vld [vmem:[#allocation5 + $0xc] sm:$0xf]
        %v380 = vld [vmem:[#allocation7] sm:$0x1]
        %v382 = vlaneseq
        %v383 = vshrl.u32 %v382, 7
        %v384 = vsub.s32 0, %v383
        %v385 = vrot.slane %v380, %v384
        %v391 = vunpack.c.l.b16 %v376
        %v392 = vunpack.c.l.b16 %v377
        %v393 = vunpack.c.l.b16 %v378
        %v394 = vunpack.c.l.b16 %v379
        %v395 = vpack.c.b16 %v392, %v391
        %v396 = vpack.c.b16 %v394, %v393
        %vm399 = vcmask 261120
        %v401 = vsel %vm399, %v375, 0
        %403 = vmatprep.subr.bf16.mxu0 0
        %404 = vmatpush1.bf16.msra.mxu0 %v395
        %405 = vmatprep.subr.bf16.mxu0 0
        %406 = vmatpush1.bf16.msra.mxu0 %v396
        %407 = vmatprep.subr.bf16.mxu0 0
        %408 = vmatpush1.bf16.msra.mxu0 0
        %409 = vmatprep.subr.bf16.mxu0 0
        %410 = vmatpush1.bf16.msra.mxu0 0
        %411 = vmatprep.subr.bf16.mxu0 0
        %412 = vmatpush1.bf16.msra.mxu0 0
        %413 = vmatprep.subr.bf16.mxu0 0
        %414 = vmatpush1.bf16.msra.mxu0 0
        %415 = vmatprep.subr.bf16.mxu0 0
        %416 = vmatpush1.bf16.msra.mxu0 0
        %417 = vmatprep.subr.bf16.mxu0 0
        %418 = vmatpush1.bf16.msra.mxu0 0
        %419 = vmatprep.subr.bf16.mxu0 0
        %420 = vmatpush1.bf16.msra.mxu0 0
        %421 = vmatprep.subr.bf16.mxu0 0
        %422 = vmatpush1.bf16.msra.mxu0 0
        %423 = vmatprep.subr.bf16.mxu0 0
        %424 = vmatpush1.bf16.msra.mxu0 0
        %425 = vmatprep.subr.bf16.mxu0 0
        %426 = vmatpush1.bf16.msra.mxu0 0
        %427 = vmatprep.subr.bf16.mxu0 0
        %428 = vmatpush1.bf16.msra.mxu0 0
        %429 = vmatprep.subr.bf16.mxu0 0
        %430 = vmatpush1.bf16.msra.mxu0 0
        %431 = vmatprep.subr.bf16.mxu0 0
        %432 = vmatpush1.bf16.msra.mxu0 0
        %433 = vmatprep.subr.bf16.mxu0 0
        %434 = vmatpush1.bf16.msra.mxu0 0
        %435 = vmatprep.mubr.bf16.mxu0 0
        %436 = vmatmul.mubr.bf16.gmra.mrb[0].mxu0 %v401
        %v437 = vpop.f32.mrb[0].mxu0
        %v438 = vadd.f32 %v385, %v437
        %v439 = vpop.f32.mrb[0].mxu0
        %v440 = vpop.f32.mrb[0].mxu0
        %v441 = vpop.f32.mrb[0].mxu0
        %442 = vdwg.mxu0
        %v443 = vlaneseq
        %v444 = vshrl.u32 %v443, 7
        %v445 = vlaneseq
        %v446 = vand.u32 %v445, 127
        %vm447 = vcmp.le.s32.totalorder %v446, %v444
        %v448 = vld [vmem:[#allocation8] sm:$0xf]
        %v449 = vld [vmem:[#allocation8 + $0x4] sm:$0xf]
        %v450 = vld [vmem:[#allocation8 + $0x8] sm:$0xf]
        %v451 = vld [vmem:[#allocation8 + $0xc] sm:$0xf]
        %v452 = vpack.c.bf16 %v438, %v438
        %454 = vrot.lane.b32.xlu0 %v452, 96
        %v455 = vpop.permute.xlu0 %454
        %vm456 = vcmask 64512
        %v458 = vsel %vm456, %v452, 0
        %v461 = vsel %vm456, %v455, 0
        %463 = vmatprep.subr.bf16.mxu0 0
        %464 = vmatpush1.bf16.xpose.msra.mxu0 %v461
        %465 = vmatprep.subr.bf16.mxu0 0
        %466 = vmatpush1.bf16.xpose.msra.mxu0 0
        %467 = vmatprep.subr.bf16.mxu0 0
        %468 = vmatpush1.bf16.xpose.msra.mxu0 0
        %469 = vmatprep.subr.bf16.mxu0 0
        %470 = vmatpush1.bf16.xpose.msra.mxu0 0
        %471 = vmatprep.subr.bf16.mxu0 0
        %472 = vmatpush1.bf16.xpose.msra.mxu0 0
        %473 = vmatprep.subr.bf16.mxu0 0
        %474 = vmatpush1.bf16.xpose.msra.mxu0 0
        %475 = vmatprep.subr.bf16.mxu0 0
        %476 = vmatpush1.bf16.xpose.msra.mxu0 0
        %477 = vmatprep.subr.bf16.mxu0 0
        %478 = vmatpush1.bf16.xpose.msra.mxu0 0
        %479 = vmatprep.subr.bf16.mxu0 0
        %480 = vmatpush1.bf16.xpose.msra.mxu0 0
        %481 = vmatprep.subr.bf16.mxu0 0
        %482 = vmatpush1.bf16.xpose.msra.mxu0 0
        %483 = vmatprep.subr.bf16.mxu0 0
        %484 = vmatpush1.bf16.xpose.msra.mxu0 0
        %485 = vmatprep.subr.bf16.mxu0 0
        %486 = vmatpush1.bf16.xpose.msra.mxu0 0
        %487 = vmatprep.subr.bf16.mxu0 0
        %488 = vmatpush1.bf16.xpose.msra.mxu0 0
        %489 = vmatprep.subr.bf16.mxu0 0
        %490 = vmatpush1.bf16.xpose.msra.mxu0 0
        %491 = vmatprep.subr.bf16.mxu0 0
        %492 = vmatpush1.bf16.xpose.msra.mxu0 0
        %493 = vmatprep.subr.bf16.mxu0 0
        %494 = vmatpush1.bf16.xpose.msra.mxu0 0
        %495 = vmatprep.mubr.bf16.mxu0 0
        %496 = vmatmul.mubr.bf16.gmra.mrb[0].mxu0 %v458
        %v497 = vpop.f32.mrb[0].mxu0
        %v498 = vadd.f32 0.0, %v497
        %v499 = vpop.f32.mrb[0].mxu0
        %v500 = vpop.f32.mrb[0].mxu0
        %v501 = vpop.f32.mrb[0].mxu0
        %502 = vdwg.mxu0
        %v503 = vmul.f32 %v498, 0.35355338
        %v504 = vsel %vm447, %v503, -inf
        %v505 = vsel %vm456, %v504, -inf
        %506 = vmax.xlane.f32.xlu0 %v505
        %v507 = vpop.xlane.xlu0 %506
        %v508 = vsub.f32 %v504, %v507
        %v509 = vmul.f32 %v508, 1.442695
        %v510 = vpow.pop %v509
        %v511 = vsel %vm456, %v510, 0.0
        %512 = vadd.xlane.f32.xlu0 %v511
        %v513 = vpop.xlane.xlu0 %512
        %v514 = vrcp.pop %v513
        %v515 = vmul.f32 %v510, %v514
        %v516 = vpack.c.bf16 %v515, %v515
        %517 = vrot.lane.b32.xlu0 %v452, 64
        %v518 = vpop.permute.xlu0 %517
        %v520 = vsel %vm456, %v516, 0
        %vm522 = vcmask 1043456
        %v524 = vsel %vm522, %v518, 0
        %526 = vmatprep.subr.bf16.mxu0 0
        %527 = vmatpush1.bf16.msra.mxu0 %v524
        %528 = vmatprep.subr.bf16.mxu0 0
        %529 = vmatpush1.bf16.msra.mxu0 0
        %530 = vmatprep.subr.bf16.mxu0 0
        %531 = vmatpush1.bf16.msra.mxu0 0
        %532 = vmatprep.subr.bf16.mxu0 0
        %533 = vmatpush1.bf16.msra.mxu0 0
        %534 = vmatprep.subr.bf16.mxu0 0
        %535 = vmatpush1.bf16.msra.mxu0 0
        %536 = vmatprep.subr.bf16.mxu0 0
        %537 = vmatpush1.bf16.msra.mxu0 0
        %538 = vmatprep.subr.bf16.mxu0 0
        %539 = vmatpush1.bf16.msra.mxu0 0
        %540 = vmatprep.subr.bf16.mxu0 0
        %541 = vmatpush1.bf16.msra.mxu0 0
        %542 = vmatprep.subr.bf16.mxu0 0
        %543 = vmatpush1.bf16.msra.mxu0 0
        %544 = vmatprep.subr.bf16.mxu0 0
        %545 = vmatpush1.bf16.msra.mxu0 0
        %546 = vmatprep.subr.bf16.mxu0 0
        %547 = vmatpush1.bf16.msra.mxu0 0
        %548 = vmatprep.subr.bf16.mxu0 0
        %549 = vmatpush1.bf16.msra.mxu0 0
        %550 = vmatprep.subr.bf16.mxu0 0
        %551 = vmatpush1.bf16.msra.mxu0 0
        %552 = vmatprep.subr.bf16.mxu0 0
        %553 = vmatpush1.bf16.msra.mxu0 0
        %554 = vmatprep.subr.bf16.mxu0 0
        %555 = vmatpush1.bf16.msra.mxu0 0
        %556 = vmatprep.subr.bf16.mxu0 0
        %557 = vmatpush1.bf16.msra.mxu0 0
        %558 = vmatprep.mubr.bf16.mxu0 0
        %559 = vmatmul.mubr.bf16.gmra.mrb[0].mxu0 %v520
        %v560 = vpop.f32.mrb[0].mxu0
        %v561 = vadd.f32 0.0, %v560
        %v562 = vpop.f32.mrb[0].mxu0
        %v563 = vpop.f32.mrb[0].mxu0
        %v564 = vpop.f32.mrb[0].mxu0
        %565 = vdwg.mxu0
        %v566 = vpack.c.bf16 %v561, %v561
        %567 = vrot.lane.b32.xlu0 %v452, 120
        %v568 = vpop.permute.xlu0 %567
        %569 = vrot.lane.b32.xlu0 %v452, 88
        %v570 = vpop.permute.xlu0 %569
        %v572 = vsel %vm456, %v568, 0
        %v575 = vsel %vm456, %v570, 0
        %577 = vmatprep.subr.bf16.mxu0 0
        %578 = vmatpush1.bf16.xpose.msra.mxu0 %v575
        %579 = vmatprep.subr.bf16.mxu0 0
        %580 = vmatpush1.bf16.xpose.msra.mxu0 0
        %581 = vmatprep.subr.bf16.mxu0 0
        %582 = vmatpush1.bf16.xpose.msra.mxu0 0
        %583 = vmatprep.subr.bf16.mxu0 0
        %584 = vmatpush1.bf16.xpose.msra.mxu0 0
        %585 = vmatprep.subr.bf16.mxu0 0
        %586 = vmatpush1.bf16.xpose.msra.mxu0 0
        %587 = vmatprep.subr.bf16.mxu0 0
        %588 = vmatpush1.bf16.xpose.msra.mxu0 0
        %589 = vmatprep.subr.bf16.mxu0 0
        %590 = vmatpush1.bf16.xpose.msra.mxu0 0
        %591 = vmatprep.subr.bf16.mxu0 0
        %592 = vmatpush1.bf16.xpose.msra.mxu0 0
        %593 = vmatprep.subr.bf16.mxu0 0
        %594 = vmatpush1.bf16.xpose.msra.mxu0 0
        %595 = vmatprep.subr.bf16.mxu0 0
        %596 = vmatpush1.bf16.xpose.msra.mxu0 0
        %597 = vmatprep.subr.bf16.mxu0 0
        %598 = vmatpush1.bf16.xpose.msra.mxu0 0
        %599 = vmatprep.subr.bf16.mxu0 0
        %600 = vmatpush1.bf16.xpose.msra.mxu0 0
        %601 = vmatprep.subr.bf16.mxu0 0
        %602 = vmatpush1.bf16.xpose.msra.mxu0 0
        %603 = vmatprep.subr.bf16.mxu0 0
        %604 = vmatpush1.bf16.xpose.msra.mxu0 0
        %605 = vmatprep.subr.bf16.mxu0 0
        %606 = vmatpush1.bf16.xpose.msra.mxu0 0
        %607 = vmatprep.subr.bf16.mxu0 0
        %608 = vmatpush1.bf16.xpose.msra.mxu0 0
        %609 = vmatprep.mubr.bf16.mxu0 0
        %610 = vmatmul.mubr.bf16.gmra.mrb[0].mxu0 %v572
        %v611 = vpop.f32.mrb[0].mxu0
        %v612 = vadd.f32 0.0, %v611
        %v613 = vpop.f32.mrb[0].mxu0
        %v614 = vpop.f32.mrb[0].mxu0
        %v615 = vpop.f32.mrb[0].mxu0
        %616 = vdwg.mxu0
        %v617 = vmul.f32 %v612, 0.35355338
        %v618 = vsel %vm447, %v617, -inf
        %v619 = vsel %vm456, %v618, -inf
        %620 = vmax.xlane.f32.xlu0 %v619
        %v621 = vpop.xlane.xlu0 %620
        %v622 = vsub.f32 %v618, %v621
        %v623 = vmul.f32 %v622, 1.442695
        %v624 = vpow.pop %v623
        %v625 = vsel %vm456, %v624, 0.0
        %626 = vadd.xlane.f32.xlu0 %v625
        %v627 = vpop.xlane.xlu0 %626
        %v628 = vrcp.pop %v627
        %v629 = vmul.f32 %v624, %v628
        %v630 = vpack.c.bf16 %v629, %v629
        %631 = vrot.lane.b32.xlu0 %v452, 56
        %v632 = vpop.permute.xlu0 %631
        %v634 = vsel %vm456, %v630, 0
        %v637 = vsel %vm522, %v632, 0
        %639 = vmatprep.subr.bf16.mxu0 0
        %640 = vmatpush1.bf16.msra.mxu0 %v637
        %641 = vmatprep.subr.bf16.mxu0 0
        %642 = vmatpush1.bf16.msra.mxu0 0
        %643 = vmatprep.subr.bf16.mxu0 0
        %644 = vmatpush1.bf16.msra.mxu0 0
        %645 = vmatprep.subr.bf16.mxu0 0
        %646 = vmatpush1.bf16.msra.mxu0 0
        %647 = vmatprep.subr.bf16.mxu0 0
        %648 = vmatpush1.bf16.msra.mxu0 0
        %649 = vmatprep.subr.bf16.mxu0 0
        %650 = vmatpush1.bf16.msra.mxu0 0
        %651 = vmatprep.subr.bf16.mxu0 0
        %652 = vmatpush1.bf16.msra.mxu0 0
        %653 = vmatprep.subr.bf16.mxu0 0
        %654 = vmatpush1.bf16.msra.mxu0 0
        %655 = vmatprep.subr.bf16.mxu0 0
        %656 = vmatpush1.bf16.msra.mxu0 0
        %657 = vmatprep.subr.bf16.mxu0 0
        %658 = vmatpush1.bf16.msra.mxu0 0
        %659 = vmatprep.subr.bf16.mxu0 0
        %660 = vmatpush1.bf16.msra.mxu0 0
        %661 = vmatprep.subr.bf16.mxu0 0
        %662 = vmatpush1.bf16.msra.mxu0 0
        %663 = vmatprep.subr.bf16.mxu0 0
        %664 = vmatpush1.bf16.msra.mxu0 0
        %665 = vmatprep.subr.bf16.mxu0 0
        %666 = vmatpush1.bf16.msra.mxu0 0
        %667 = vmatprep.subr.bf16.mxu0 0
        %668 = vmatpush1.bf16.msra.mxu0 0
        %669 = vmatprep.subr.bf16.mxu0 0
        %670 = vmatpush1.bf16.msra.mxu0 0
        %671 = vmatprep.mubr.bf16.mxu0 0
        %672 = vmatmul.mubr.bf16.gmra.mrb[0].mxu0 %v634
        %v673 = vpop.f32.mrb[0].mxu0
        %v674 = vadd.f32 0.0, %v673
        %v675 = vpop.f32.mrb[0].mxu0
        %v676 = vpop.f32.mrb[0].mxu0
        %v677 = vpop.f32.mrb[0].mxu0
        %678 = vdwg.mxu0
        %v679 = vpack.c.bf16 %v674, %v674
        %v681 = vsel %vm456, %v679, 0
        %v684 = vsel %vm522, %v449, 0
        %686 = vmatprep.subr.bf16.mxu0 0
        %687 = vmatpush1.bf16.msra.mxu0 %v684
        %688 = vmatprep.subr.bf16.mxu0 0
        %689 = vmatpush1.bf16.msra.mxu0 0
        %690 = vmatprep.subr.bf16.mxu0 0
        %691 = vmatpush1.bf16.msra.mxu0 0
        %692 = vmatprep.subr.bf16.mxu0 0
        %693 = vmatpush1.bf16.msra.mxu0 0
        %694 = vmatprep.subr.bf16.mxu0 0
        %695 = vmatpush1.bf16.msra.mxu0 0
        %696 = vmatprep.subr.bf16.mxu0 0
        %697 = vmatpush1.bf16.msra.mxu0 0
        %698 = vmatprep.subr.bf16.mxu0 0
        %699 = vmatpush1.bf16.msra.mxu0 0
        %700 = vmatprep.subr.bf16.mxu0 0
        %701 = vmatpush1.bf16.msra.mxu0 0
        %702 = vmatprep.subr.bf16.mxu0 0
        %703 = vmatpush1.bf16.msra.mxu0 0
        %704 = vmatprep.subr.bf16.mxu0 0
        %705 = vmatpush1.bf16.msra.mxu0 0
        %706 = vmatprep.subr.bf16.mxu0 0
        %707 = vmatpush1.bf16.msra.mxu0 0
        %708 = vmatprep.subr.bf16.mxu0 0
        %709 = vmatpush1.bf16.msra.mxu0 0
        %710 = vmatprep.subr.bf16.mxu0 0
        %711 = vmatpush1.bf16.msra.mxu0 0
        %712 = vmatprep.subr.bf16.mxu0 0
        %713 = vmatpush1.bf16.msra.mxu0 0
        %714 = vmatprep.subr.bf16.mxu0 0
        %715 = vmatpush1.bf16.msra.mxu0 0
        %716 = vmatprep.subr.bf16.mxu0 0
        %717 = vmatpush1.bf16.msra.mxu0 0
        %718 = vmatprep.mubr.bf16.mxu0 0
        %719 = vmatmul.mubr.bf16.gmra.mrb[0].mxu0 %v681
        %v720 = vpop.f32.mrb[0].mxu0
        %v721 = vadd.f32 0.0, %v720
        %v722 = vpop.f32.mrb[0].mxu0
        %v723 = vpop.f32.mrb[0].mxu0
        %v724 = vpop.f32.mrb[0].mxu0
        %725 = vdwg.mxu0
        %v727 = vsel %vm456, %v566, 0
        %v730 = vsel %vm522, %v448, 0
        %732 = vmatprep.subr.bf16.mxu0 0
        %733 = vmatpush1.bf16.msra.mxu0 %v730
        %734 = vmatprep.subr.bf16.mxu0 0
        %735 = vmatpush1.bf16.msra.mxu0 0
        %736 = vmatprep.subr.bf16.mxu0 0
        %737 = vmatpush1.bf16.msra.mxu0 0
        %738 = vmatprep.subr.bf16.mxu0 0
        %739 = vmatpush1.bf16.msra.mxu0 0
        %740 = vmatprep.subr.bf16.mxu0 0
        %741 = vmatpush1.bf16.msra.mxu0 0
        %742 = vmatprep.subr.bf16.mxu0 0
        %743 = vmatpush1.bf16.msra.mxu0 0
        %744 = vmatprep.subr.bf16.mxu0 0
        %745 = vmatpush1.bf16.msra.mxu0 0
        %746 = vmatprep.subr.bf16.mxu0 0
        %747 = vmatpush1.bf16.msra.mxu0 0
        %748 = vmatprep.subr.bf16.mxu0 0
        %749 = vmatpush1.bf16.msra.mxu0 0
        %750 = vmatprep.subr.bf16.mxu0 0
        %751 = vmatpush1.bf16.msra.mxu0 0
        %752 = vmatprep.subr.bf16.mxu0 0
        %753 = vmatpush1.bf16.msra.mxu0 0
        %754 = vmatprep.subr.bf16.mxu0 0
        %755 = vmatpush1.bf16.msra.mxu0 0
        %756 = vmatprep.subr.bf16.mxu0 0
        %757 = vmatpush1.bf16.msra.mxu0 0
        %758 = vmatprep.subr.bf16.mxu0 0
        %759 = vmatpush1.bf16.msra.mxu0 0
        %760 = vmatprep.subr.bf16.mxu0 0
        %761 = vmatpush1.bf16.msra.mxu0 0
        %762 = vmatprep.subr.bf16.mxu0 0
        %763 = vmatpush1.bf16.msra.mxu0 0
        %764 = vmatprep.mubr.bf16.mxu0 0
        %765 = vmatmul.mubr.bf16.gmra.mrb[0].mxu0 %v727
        %v766 = vpop.f32.mrb[0].mxu0
        %v767 = vadd.f32 %v721, %v766
        %v768 = vpop.f32.mrb[0].mxu0
        %v769 = vpop.f32.mrb[0].mxu0
        %v770 = vpop.f32.mrb[0].mxu0
        %771 = vdwg.mxu0
        %772 = vrot.lane.b32.xlu0 %v452, 112
        %v773 = vpop.permute.xlu0 %772
        %774 = vrot.lane.b32.xlu0 %v452, 80
        %v775 = vpop.permute.xlu0 %774
        %v777 = vsel %vm456, %v773, 0
        %v780 = vsel %vm456, %v775, 0
        %782 = vmatprep.subr.bf16.mxu0 0
        %783 = vmatpush1.bf16.xpose.msra.mxu0 %v780
        %784 = vmatprep.subr.bf16.mxu0 0
        %785 = vmatpush1.bf16.xpose.msra.mxu0 0
        %786 = vmatprep.subr.bf16.mxu0 0
        %787 = vmatpush1.bf16.xpose.msra.mxu0 0
        %788 = vmatprep.subr.bf16.mxu0 0
        %789 = vmatpush1.bf16.xpose.msra.mxu0 0
        %790 = vmatprep.subr.bf16.mxu0 0
        %791 = vmatpush1.bf16.xpose.msra.mxu0 0
        %792 = vmatprep.subr.bf16.mxu0 0
        %793 = vmatpush1.bf16.xpose.msra.mxu0 0
        %794 = vmatprep.subr.bf16.mxu0 0
        %795 = vmatpush1.bf16.xpose.msra.mxu0 0
        %796 = vmatprep.subr.bf16.mxu0 0
        %797 = vmatpush1.bf16.xpose.msra.mxu0 0
        %798 = vmatprep.subr.bf16.mxu0 0
        %799 = vmatpush1.bf16.xpose.msra.mxu0 0
        %800 = vmatprep.subr.bf16.mxu0 0
        %801 = vmatpush1.bf16.xpose.msra.mxu0 0
        %802 = vmatprep.subr.bf16.mxu0 0
        %803 = vmatpush1.bf16.xpose.msra.mxu0 0
        %804 = vmatprep.subr.bf16.mxu0 0
        %805 = vmatpush1.bf16.xpose.msra.mxu0 0
        %806 = vmatprep.subr.bf16.mxu0 0
        %807 = vmatpush1.bf16.xpose.msra.mxu0 0
        %808 = vmatprep.subr.bf16.mxu0 0
        %809 = vmatpush1.bf16.xpose.msra.mxu0 0
        %810 = vmatprep.subr.bf16.mxu0 0
        %811 = vmatpush1.bf16.xpose.msra.mxu0 0
        %812 = vmatprep.subr.bf16.mxu0 0
        %813 = vmatpush1.bf16.xpose.msra.mxu0 0
        %814 = vmatprep.mubr.bf16.mxu0 0
        %815 = vmatmul.mubr.bf16.gmra.mrb[0].mxu0 %v777
        %v816 = vpop.f32.mrb[0].mxu0
        %v817 = vadd.f32 0.0, %v816
        %v818 = vpop.f32.mrb[0].mxu0
        %v819 = vpop.f32.mrb[0].mxu0
        %v820 = vpop.f32.mrb[0].mxu0
        %821 = vdwg.mxu0
        %v822 = vmul.f32 %v817, 0.35355338
        %v823 = vsel %vm447, %v822, -inf
        %v824 = vsel %vm456, %v823, -inf
        %825 = vmax.xlane.f32.xlu0 %v824
        %v826 = vpop.xlane.xlu0 %825
        %v827 = vsub.f32 %v823, %v826
        %v828 = vmul.f32 %v827, 1.442695
        %v829 = vpow.pop %v828
        %v830 = vsel %vm456, %v829, 0.0
        %831 = vadd.xlane.f32.xlu0 %v830
        %v832 = vpop.xlane.xlu0 %831
        %v833 = vrcp.pop %v832
        %v834 = vmul.f32 %v829, %v833
        %v835 = vpack.c.bf16 %v834, %v834
        %836 = vrot.lane.b32.xlu0 %v452, 48
        %v837 = vpop.permute.xlu0 %836
        %v839 = vsel %vm456, %v835, 0
        %v842 = vsel %vm522, %v837, 0
        %844 = vmatprep.subr.bf16.mxu0 0
        %845 = vmatpush1.bf16.msra.mxu0 %v842
        %846 = vmatprep.subr.bf16.mxu0 0
        %847 = vmatpush1.bf16.msra.mxu0 0
        %848 = vmatprep.subr.bf16.mxu0 0
        %849 = vmatpush1.bf16.msra.mxu0 0
        %850 = vmatprep.subr.bf16.mxu0 0
        %851 = vmatpush1.bf16.msra.mxu0 0
        %852 = vmatprep.subr.bf16.mxu0 0
        %853 = vmatpush1.bf16.msra.mxu0 0
        %854 = vmatprep.subr.bf16.mxu0 0
        %855 = vmatpush1.bf16.msra.mxu0 0
        %856 = vmatprep.subr.bf16.mxu0 0
        %857 = vmatpush1.bf16.msra.mxu0 0
        %858 = vmatprep.subr.bf16.mxu0 0
        %859 = vmatpush1.bf16.msra.mxu0 0
        %860 = vmatprep.subr.bf16.mxu0 0
        %861 = vmatpush1.bf16.msra.mxu0 0
        %862 = vmatprep.subr.bf16.mxu0 0
        %863 = vmatpush1.bf16.msra.mxu0 0
        %864 = vmatprep.subr.bf16.mxu0 0
        %865 = vmatpush1.bf16.msra.mxu0 0
        %866 = vmatprep.subr.bf16.mxu0 0
        %867 = vmatpush1.bf16.msra.mxu0 0
        %868 = vmatprep.subr.bf16.mxu0 0
        %869 = vmatpush1.bf16.msra.mxu0 0
        %870 = vmatprep.subr.bf16.mxu0 0
        %871 = vmatpush1.bf16.msra.mxu0 0
        %872 = vmatprep.subr.bf16.mxu0 0
        %873 = vmatpush1.bf16.msra.mxu0 0
        %874 = vmatprep.subr.bf16.mxu0 0
        %875 = vmatpush1.bf16.msra.mxu0 0
        %876 = vmatprep.mubr.bf16.mxu0 0
        %877 = vmatmul.mubr.bf16.gmra.mrb[0].mxu0 %v839
        %v878 = vpop.f32.mrb[0].mxu0
        %v879 = vadd.f32 0.0, %v878
        %v880 = vpop.f32.mrb[0].mxu0
        %v881 = vpop.f32.mrb[0].mxu0
        %v882 = vpop.f32.mrb[0].mxu0
        %883 = vdwg.mxu0
        %v884 = vpack.c.bf16 %v879, %v879
        %v886 = vsel %vm456, %v884, 0
        %v889 = vsel %vm522, %v450, 0
        %891 = vmatprep.subr.bf16.mxu0 0
        %892 = vmatpush1.bf16.msra.mxu0 %v889
        %893 = vmatprep.subr.bf16.mxu0 0
        %894 = vmatpush1.bf16.msra.mxu0 0
        %895 = vmatprep.subr.bf16.mxu0 0
        %896 = vmatpush1.bf16.msra.mxu0 0
        %897 = vmatprep.subr.bf16.mxu0 0
        %898 = vmatpush1.bf16.msra.mxu0 0
        %899 = vmatprep.subr.bf16.mxu0 0
        %900 = vmatpush1.bf16.msra.mxu0 0
        %901 = vmatprep.subr.bf16.mxu0 0
        %902 = vmatpush1.bf16.msra.mxu0 0
        %903 = vmatprep.subr.bf16.mxu0 0
        %904 = vmatpush1.bf16.msra.mxu0 0
        %905 = vmatprep.subr.bf16.mxu0 0
        %906 = vmatpush1.bf16.msra.mxu0 0
        %907 = vmatprep.subr.bf16.mxu0 0
        %908 = vmatpush1.bf16.msra.mxu0 0
        %909 = vmatprep.subr.bf16.mxu0 0
        %910 = vmatpush1.bf16.msra.mxu0 0
        %911 = vmatprep.subr.bf16.mxu0 0
        %912 = vmatpush1.bf16.msra.mxu0 0
        %913 = vmatprep.subr.bf16.mxu0 0
        %914 = vmatpush1.bf16.msra.mxu0 0
        %915 = vmatprep.subr.bf16.mxu0 0
        %916 = vmatpush1.bf16.msra.mxu0 0
        %917 = vmatprep.subr.bf16.mxu0 0
        %918 = vmatpush1.bf16.msra.mxu0 0
        %919 = vmatprep.subr.bf16.mxu0 0
        %920 = vmatpush1.bf16.msra.mxu0 0
        %921 = vmatprep.subr.bf16.mxu0 0
        %922 = vmatpush1.bf16.msra.mxu0 0
        %923 = vmatprep.mubr.bf16.mxu0 0
        %924 = vmatmul.mubr.bf16.gmra.mrb[0].mxu0 %v886
        %v925 = vpop.f32.mrb[0].mxu0
        %v926 = vadd.f32 0.0, %v925
        %v927 = vpop.f32.mrb[0].mxu0
        %v928 = vpop.f32.mrb[0].mxu0
        %v929 = vpop.f32.mrb[0].mxu0
        %930 = vdwg.mxu0
        %v931 = vadd.f32 %v767, %v926
        %932 = vrot.lane.b32.xlu0 %v452, 104
        %v933 = vpop.permute.xlu0 %932
        %934 = vrot.lane.b32.xlu0 %v452, 72
        %v935 = vpop.permute.xlu0 %934
        %v937 = vsel %vm456, %v933, 0
        %v940 = vsel %vm456, %v935, 0
        %942 = vmatprep.subr.bf16.mxu0 0
        %943 = vmatpush1.bf16.xpose.msra.mxu0 %v940
        %944 = vmatprep.subr.bf16.mxu0 0
        %945 = vmatpush1.bf16.xpose.msra.mxu0 0
        %946 = vmatprep.subr.bf16.mxu0 0
        %947 = vmatpush1.bf16.xpose.msra.mxu0 0
        %948 = vmatprep.subr.bf16.mxu0 0
        %949 = vmatpush1.bf16.xpose.msra.mxu0 0
        %950 = vmatprep.subr.bf16.mxu0 0
        %951 = vmatpush1.bf16.xpose.msra.mxu0 0
        %952 = vmatprep.subr.bf16.mxu0 0
        %953 = vmatpush1.bf16.xpose.msra.mxu0 0
        %954 = vmatprep.subr.bf16.mxu0 0
        %955 = vmatpush1.bf16.xpose.msra.mxu0 0
        %956 = vmatprep.subr.bf16.mxu0 0
        %957 = vmatpush1.bf16.xpose.msra.mxu0 0
        %958 = vmatprep.subr.bf16.mxu0 0
        %959 = vmatpush1.bf16.xpose.msra.mxu0 0
        %960 = vmatprep.subr.bf16.mxu0 0
        %961 = vmatpush1.bf16.xpose.msra.mxu0 0
        %962 = vmatprep.subr.bf16.mxu0 0
        %963 = vmatpush1.bf16.xpose.msra.mxu0 0
        %964 = vmatprep.subr.bf16.mxu0 0
        %965 = vmatpush1.bf16.xpose.msra.mxu0 0
        %966 = vmatprep.subr.bf16.mxu0 0
        %967 = vmatpush1.bf16.xpose.msra.mxu0 0
        %968 = vmatprep.subr.bf16.mxu0 0
        %969 = vmatpush1.bf16.xpose.msra.mxu0 0
        %970 = vmatprep.subr.bf16.mxu0 0
        %971 = vmatpush1.bf16.xpose.msra.mxu0 0
        %972 = vmatprep.subr.bf16.mxu0 0
        %973 = vmatpush1.bf16.xpose.msra.mxu0 0
        %974 = vmatprep.mubr.bf16.mxu0 0
        %975 = vmatmul.mubr.bf16.gmra.mrb[0].mxu0 %v937
        %v976 = vpop.f32.mrb[0].mxu0
        %v977 = vadd.f32 0.0, %v976
        %v978 = vpop.f32.mrb[0].mxu0
        %v979 = vpop.f32.mrb[0].mxu0
        %v980 = vpop.f32.mrb[0].mxu0
        %981 = vdwg.mxu0
        %v982 = vmul.f32 %v977, 0.35355338
        %v983 = vsel %vm447, %v982, -inf
        %v984 = vsel %vm456, %v983, -inf
        %985 = vmax.xlane.f32.xlu0 %v984
        %v986 = vpop.xlane.xlu0 %985
        %v987 = vsub.f32 %v983, %v986
        %v988 = vmul.f32 %v987, 1.442695
        %v989 = vpow.pop %v988
        %v990 = vsel %vm456, %v989, 0.0
        %991 = vadd.xlane.f32.xlu0 %v990
        %v992 = vpop.xlane.xlu0 %991
        %v993 = vrcp.pop %v992
        %v994 = vmul.f32 %v989, %v993
        %v995 = vpack.c.bf16 %v994, %v994
        %996 = vrot.lane.b32.xlu0 %v452, 40
        %v997 = vpop.permute.xlu0 %996
        %v999 = vsel %vm456, %v995, 0
        %v1002 = vsel %vm522, %v997, 0
        %1004 = vmatprep.subr.bf16.mxu0 0
        %1005 = vmatpush1.bf16.msra.mxu0 %v1002
        %1006 = vmatprep.subr.bf16.mxu0 0
        %1007 = vmatpush1.bf16.msra.mxu0 0
        %1008 = vmatprep.subr.bf16.mxu0 0
        %1009 = vmatpush1.bf16.msra.mxu0 0
        %1010 = vmatprep.subr.bf16.mxu0 0
        %1011 = vmatpush1.bf16.msra.mxu0 0
        %1012 = vmatprep.subr.bf16.mxu0 0
        %1013 = vmatpush1.bf16.msra.mxu0 0
        %1014 = vmatprep.subr.bf16.mxu0 0
        %1015 = vmatpush1.bf16.msra.mxu0 0
        %1016 = vmatprep.subr.bf16.mxu0 0
        %1017 = vmatpush1.bf16.msra.mxu0 0
        %1018 = vmatprep.subr.bf16.mxu0 0
        %1019 = vmatpush1.bf16.msra.mxu0 0
        %1020 = vmatprep.subr.bf16.mxu0 0
        %1021 = vmatpush1.bf16.msra.mxu0 0
        %1022 = vmatprep.subr.bf16.mxu0 0
        %1023 = vmatpush1.bf16.msra.mxu0 0
        %1024 = vmatprep.subr.bf16.mxu0 0
        %1025 = vmatpush1.bf16.msra.mxu0 0
        %1026 = vmatprep.subr.bf16.mxu0 0
        %1027 = vmatpush1.bf16.msra.mxu0 0
        %1028 = vmatprep.subr.bf16.mxu0 0
        %1029 = vmatpush1.bf16.msra.mxu0 0
        %1030 = vmatprep.subr.bf16.mxu0 0
        %1031 = vmatpush1.bf16.msra.mxu0 0
        %1032 = vmatprep.subr.bf16.mxu0 0
        %1033 = vmatpush1.bf16.msra.mxu0 0
        %1034 = vmatprep.subr.bf16.mxu0 0
        %1035 = vmatpush1.bf16.msra.mxu0 0
        %1036 = vmatprep.mubr.bf16.mxu0 0
        %1037 = vmatmul.mubr.bf16.gmra.mrb[0].mxu0 %v999
        %v1038 = vpop.f32.mrb[0].mxu0
        %v1039 = vadd.f32 0.0, %v1038
        %v1040 = vpop.f32.mrb[0].mxu0
        %v1041 = vpop.f32.mrb[0].mxu0
        %v1042 = vpop.f32.mrb[0].mxu0
        %1043 = vdwg.mxu0
        %v1044 = vpack.c.bf16 %v1039, %v1039
        %v1046 = vsel %vm456, %v1044, 0
        %v1049 = vsel %vm522, %v451, 0
        %1051 = vmatprep.subr.bf16.mxu0 0
        %1052 = vmatpush1.bf16.msra.mxu0 %v1049
        %1053 = vmatprep.subr.bf16.mxu0 0
        %1054 = vmatpush1.bf16.msra.mxu0 0
        %1055 = vmatprep.subr.bf16.mxu0 0
        %1056 = vmatpush1.bf16.msra.mxu0 0
        %1057 = vmatprep.subr.bf16.mxu0 0
        %1058 = vmatpush1.bf16.msra.mxu0 0
        %1059 = vmatprep.subr.bf16.mxu0 0
        %1060 = vmatpush1.bf16.msra.mxu0 0
        %1061 = vmatprep.subr.bf16.mxu0 0
        %1062 = vmatpush1.bf16.msra.mxu0 0
        %1063 = vmatprep.subr.bf16.mxu0 0
        %1064 = vmatpush1.bf16.msra.mxu0 0
        %1065 = vmatprep.subr.bf16.mxu0 0
        %1066 = vmatpush1.bf16.msra.mxu0 0
        %1067 = vmatprep.subr.bf16.mxu0 0
        %1068 = vmatpush1.bf16.msra.mxu0 0
        %1069 = vmatprep.subr.bf16.mxu0 0
        %1070 = vmatpush1.bf16.msra.mxu0 0
        %1071 = vmatprep.subr.bf16.mxu0 0
        %1072 = vmatpush1.bf16.msra.mxu0 0
        %1073 = vmatprep.subr.bf16.mxu0 0
        %1074 = vmatpush1.bf16.msra.mxu0 0
        %1075 = vmatprep.subr.bf16.mxu0 0
        %1076 = vmatpush1.bf16.msra.mxu0 0
        %1077 = vmatprep.subr.bf16.mxu0 0
        %1078 = vmatpush1.bf16.msra.mxu0 0
        %1079 = vmatprep.subr.bf16.mxu0 0
        %1080 = vmatpush1.bf16.msra.mxu0 0
        %1081 = vmatprep.subr.bf16.mxu0 0
        %1082 = vmatpush1.bf16.msra.mxu0 0
        %1083 = vmatprep.mubr.bf16.mxu0 0
        %1084 = vmatmul.mubr.bf16.gmra.mrb[0].mxu0 %v1046
        %v1085 = vpop.f32.mrb[0].mxu0
        %v1086 = vadd.f32 0.0, %v1085
        %v1087 = vpop.f32.mrb[0].mxu0
        %v1088 = vpop.f32.mrb[0].mxu0
        %v1089 = vpop.f32.mrb[0].mxu0
        %1090 = vdwg.mxu0
        %v1091 = vadd.f32 %v931, %v1086
        %v1092 = vld [vmem:[#allocation10] sm:$0x1]
        %v1094 = vlaneseq
        %v1095 = vshrl.u32 %v1094, 7
        %v1096 = vsub.s32 0, %v1095
        %v1097 = vrot.slane %v1092, %v1096
        %v1099 = vadd.f32 %v1091, %v1097
        %v1100 = vadd.f32 %v1099, %v374
        %v1101 = vld [vmem:[#allocation11] sm:$0x1]
        %v1102 = vld [vmem:[#allocation13] sm:$0x1]
        %v1103 = vsel %vm399, %v1100, 0.0
        %1104 = vadd.xlane.f32.xlu0 %v1103
        %v1105 = vpop.xlane.xlu0 %1104
        %v1106 = vrcp.pop 32.0
        %v1107 = vmul.f32 %v1105, %v1106
        %v1108 = vsub.f32 %v1100, %v1107
        %v1109 = vmul.f32 %v1108, %v1108
        %v1110 = vsel %vm399, %v1109, 0.0
        %1111 = vadd.xlane.f32.xlu0 %v1110
        %v1112 = vpop.xlane.xlu0 %1111
        %v1113 = vmul.f32 %v1112, %v1106
        %v1114 = vadd.f32 %v1113, 1e-05
        %v1115 = vrsqrt.pop %v1114
        %v1116 = vmul.f32 %v1108, %v1115
        %v1118 = vlaneseq
        %v1119 = vshrl.u32 %v1118, 7
        %v1120 = vsub.s32 0, %v1119
        %v1121 = vrot.slane %v1101, %v1120
        %v1123 = vmul.f32 %v1116, %v1121
        %v1125 = vlaneseq
        %v1126 = vshrl.u32 %v1125, 7
        %v1127 = vsub.s32 0, %v1126
        %v1128 = vrot.slane %v1102, %v1127
        %v1130 = vadd.f32 %v1123, %v1128
        %1131 = vst.msk [vmem:[%s372] sm:$0xff] %vm399, %v1130
        %s1132 = sand.u32 %s187, 1
        %s1133 = scalar_lea.sflag [#allocation4], %s1132
        %s1134 = sand.u32 %s187, 1
        %s1135 = smul.addr %s1134, 8
        %s1136 = scalar_lea.vmem [#allocation14], %s1135
        // Predicated region
        $region77: #{decoder_forward.9} parent=47 // pred_check
          %p1137 = pneg %p197
        $region78: #{decoder_forward.9} parent=47 // pred_check_branch
          %1139 = sbr.rel (%p1137) target = $region80
        $region79: #{decoder_forward.9} parent=47 // pred_region
          %s1141 = ssub.s32 128, 128
          %1142 = vsyncadd %s1133, %s1141
          %s1143 = smul.addr %s27, 128
          %s1144 = scalar_lea.hbm %s7, %s1143
          %s1146 = sshll.u32 %s1136, 4
          %s1147 = int_to_ptr.vmem [resolvable:$true] %s1146
          %1149 = dma.vmem_to_hbm [thread:$0]  %s1147, 128, %s1144, %s1133
        $region80: #{decoder_forward.9} parent=47 // pred_fallthru
          _
      $region48: #{decoder_forward.9} parent=5 // pred_fallthru
        _
      %p1150 = scmp.le.s32.totalorder 2, %s22
      // Predicated region
      $region81: #{decoder_forward.9} parent=5 // pred_check
        %p1151 = pneg %p1150
      $region82: #{decoder_forward.9} parent=5 // pred_check_branch
        %1153 = sbr.rel (%p1151) target = $region84
      $region83: #{decoder_forward.9} parent=5 // pred_region
        %s1154 = ssub.s32 %s22, 2
        // Predicated region
        $region85: #{decoder_forward.9} parent=83 // pred_check
          %p1155 = pneg %p203
        $region86: #{decoder_forward.9} parent=83 // pred_check_branch
          %1157 = sbr.rel (%p1155) target = $region88
        $region87: #{decoder_forward.9} parent=83 // pred_region
          %s1158 = sand.u32 %s188, 1
          %s1159 = scalar_lea.sflag [#allocation4], %s1158
          %s1160 = sand.u32 %s188, 1
          %s1161 = smul.addr %s1160, 8
          %s1162 = scalar_lea.vmem [#allocation14], %s1161
          %1163 = dma.done %s1159, 128
        $region88: #{decoder_forward.9} parent=83 // pred_fallthru
          _
      $region84: #{decoder_forward.9} parent=5 // pred_fallthru
        _
    $region6: #{decoder_forward.9} parent=1 // loop_footer
      %s26 = sadd.s32 1, %s22
    $region7: #{decoder_forward.9} parent=1 // loop_footer_branch
      %21 = sbr.rel target = $region3
    $region8: #{decoder_forward.9} parent=1 // loop_exit
      _
    %1164 = vsyncpa [#allocation3], 1
    %s1165 = scalar_lea.sflag [#allocation3], 1
    %1166 = vsyncpa %s1165, 1
    %1167 = vsyncpa [#allocation6], 1
    %1168 = vsyncpa [#allocation9], 1
    %1169 = vsyncpa [#allocation12], 1
    %1170 = vsyncpa [#allocation4], 1
    %s1171 = scalar_lea.sflag [#allocation4], 1
    %1172 = vsyncpa %s1171, 1

// kernel: decoder_forward.10
$region0: #{decoder_forward.10}
  #allocation0 [shape = 'u32[]', space=smem, size = 0x4, offset = 0x4, fixed_abs, tag = 'smem constant byte address 0x4 - core index']
  #allocation1 [shape = 'u32[144,128]{1,0:T(1,128)}', space=vmem, size = 0x12000, scoped, tag = 'internal scratch']
  %s0 = inlined_call_operand.hbm [shape: f32[2,8,32], index: 0, kind: input, shape index: {}]
  %s1 = inlined_call_operand.hbm [shape: f32[2,8,32], index: 1, kind: input, shape index: {}]
  %s2 = inlined_call_operand.hbm [shape: bf16[32,32], index: 2, kind: input, shape index: {}]
  %s3 = inlined_call_operand.hbm [shape: f32[1,32], index: 3, kind: input, shape index: {}]
  %s4 = inlined_call_operand.hbm [shape: bf16[32,64], index: 4, kind: input, shape index: {}]
  %s5 = inlined_call_operand.hbm [shape: f32[1,64], index: 5, kind: input, shape index: {}]
  %s6 = inlined_call_operand.hbm [shape: bf16[32,32], index: 6, kind: input, shape index: {}]
  %s7 = inlined_call_operand.hbm [shape: f32[1,32], index: 7, kind: input, shape index: {}]
  %s8 = inlined_call_operand.hbm [shape: f32[1,32], index: 8, kind: input, shape index: {}]
  %s9 = inlined_call_operand.hbm [shape: f32[1,32], index: 9, kind: input, shape index: {}]
  %s10 = inlined_call_operand.hbm [shape: f32[2,8,32], index: 10, kind: output, shape index: {}]
  %s11 = sld [smem:[#allocation0]]
  $region113: #{decoder_forward.10} parent=0
    _
  %s13 = ssub.s32 1, %s11
  %s14 = scalar_select 0, %s13, %s11
  $region1: #{decoder_forward.10} parent=0
    #allocation2 [shape = 'u8[8192]{0}', space=vmem, size = 0x2000, scoped, tag = 'input window, operand 0']
    #allocation3 [shape = 's32[2]{0}', space=sflag, size = 0x8, scoped, tag = 'scoped memory for decoder_forward.10']
    #allocation4 [shape = 's32[2]{0}', space=sflag, size = 0x8, scoped, tag = 'scoped memory for decoder_forward.10']
    #allocation5 [shape = 'u8[8192]{0}', space=vmem, size = 0x2000, scoped, tag = 'input window, operand 1']
    #allocation6 [shape = 's32[2]{0}', space=sflag, size = 0x8, scoped, tag = 'scoped memory for decoder_forward.10']
    #allocation7 [shape = 'u8[8192]{0}', space=vmem, size = 0x2000, scoped, tag = 'input window, operand 2, single buffered']
    #allocation8 [shape = 'u8[512]{0}', space=vmem, size = 0x400, scoped, tag = 'input window, operand 3, single buffered']
    #allocation9 [shape = 's32[1]{0}', space=sflag, size = 0x4, scoped, tag = 'scoped memory for decoder_forward.10']
    #allocation10 [shape = 'u8[8192]{0}', space=vmem, size = 0x2000, scoped, tag = 'input window, operand 4, single buffered']
    #allocation11 [shape = 'u8[512]{0}', space=vmem, size = 0x400, scoped, tag = 'input window, operand 5, single buffered']
    #allocation12 [shape = 's32[1]{0}', space=sflag, size = 0x4, scoped, tag = 'scoped memory for decoder_forward.10']
    #allocation13 [shape = 'u8[8192]{0}', space=vmem, size = 0x2000, scoped, tag = 'input window, operand 6, single buffered']
    #allocation14 [shape = 'u8[512]{0}', space=vmem, size = 0x400, scoped, tag = 'input window, operand 7, single buffered']
    #allocation15 [shape = 's32[1]{0}', space=sflag, size = 0x4, scoped, tag = 'scoped memory for decoder_forward.10']
    #allocation16 [shape = 'u8[512]{0}', space=vmem, size = 0x400, scoped, tag = 'input window, operand 8, single buffered']
    #allocation17 [shape = 'u8[512]{0}', space=vmem, size = 0x400, scoped, tag = 'input window, operand 9, single buffered']
    #allocation18 [shape = 's32[1]{0}', space=sflag, size = 0x4, scoped, tag = 'scoped memory for decoder_forward.10']
    #allocation19 [shape = 'u8[8192]{0}', space=vmem, size = 0x2000, scoped, tag = 'output window, operand 0']
    %15 = vsyncpa [#allocation3], 0
    %s16 = scalar_lea.sflag [#allocation3], 1
    %17 = vsyncpa %s16, 0
    %18 = vsyncpa [#allocation6], 0
    %s19 = scalar_lea.sflag [#allocation6], 1
    %20 = vsyncpa %s19, 0
    %21 = vsyncpa [#allocation9], 0
    %22 = vsyncpa [#allocation12], 0
    %23 = vsyncpa [#allocation15], 0
    %24 = vsyncpa [#allocation18], 0
    %25 = vsyncpa [#allocation4], 0
    %s26 = scalar_lea.sflag [#allocation4], 1
    %27 = vsyncpa %s26, 0
    loop: start=0, step=1, limit=4
    $region2: #{decoder_forward.10} parent=1 // loop_pre_header
      _
    $region3: #{decoder_forward.10} parent=1 // loop_header
      %s29 = sphi 0, %s33
      %p30 = scmp.ge.s32.totalorder %s29, 4
      %s39 = sphi 0, %s41
      %s42 = sphi 0, %s39
      %s43 = sphi 0, %s42
      %s59 = sphi 0, %s43
      %s65 = sphi 0, %s67
      %s68 = sphi 0, %s65
      %s69 = sphi 0, %s68
      %s85 = sphi 0, %s69
      %s89 = sphi 0, %s89
      %s91 = sphi 0, %s89
      %s92 = sphi 0, %s91
      %s106 = sphi 0, %s92
      %s110 = sphi 0, %s110
      %s112 = sphi 0, %s110
      %s113 = sphi 0, %s112
      %s127 = sphi 0, %s113
      %s131 = sphi 0, %s131
      %s133 = sphi 0, %s131
      %s134 = sphi 0, %s133
      %s148 = sphi 0, %s134
      %s152 = sphi 0, %s152
      %s154 = sphi 0, %s152
      %s155 = sphi 0, %s154
      %s169 = sphi 0, %s155
      %s173 = sphi 0, %s173
      %s175 = sphi 0, %s173
      %s176 = sphi 0, %s175
      %s190 = sphi 0, %s176
      %s194 = sphi 0, %s194
      %s196 = sphi 0, %s194
      %s197 = sphi 0, %s196
      %s211 = sphi 0, %s197
      %s215 = sphi 0, %s215
      %s217 = sphi 0, %s215
      %s218 = sphi 0, %s217
      %s232 = sphi 0, %s218
      %s236 = sphi 0, %s236
      %s238 = sphi 0, %s236
      %s239 = sphi 0, %s238
      %s253 = sphi 0, %s239
      %s259 = sphi 0, %s261
      %s262 = sphi 0, %s259
      %s263 = sphi 0, %s262
      %s279 = sphi 0, %s263
    $region4: #{decoder_forward.10} parent=1 // loop_header_branch
      %32 = sbr.rel (%p30) target = $region8
    $region5: #{decoder_forward.10} parent=1 // loop_body
      %s34 = ssub.s32 %s29, 1
      %s35 = ssub.s32 %s29, 2
      %s36 = sadd.s32 %s29, 1
      %s37 = ssub.s32 %s29, %s36
      %p38 = scmp.eq.s32.totalorder %s37, 0
      %s40 = sadd.s32 %s39, 1
      %s41 = scalar_select %p38, %s39, %s40
      %p44 = pneg %p38
      %p45 = scmp.eq.s32.totalorder %s29, 1
      %p46 = por %p44, %p45
      %p47 = scmp.ne.s32.totalorder %s39, %s42
      %p48 = scmp.eq.s32.totalorder %s29, 0
      %p49 = por %p47, %p48
      %p50 = scmp.ne.s32.totalorder %s39, %s42
      %p51 = scmp.eq.s32.totalorder %s34, 1
      %p52 = por %p50, %p51
      %p53 = scmp.ne.s32.totalorder %s42, %s43
      %p54 = scmp.eq.s32.totalorder %s34, 0
      %p55 = por %p53, %p54
      %p56 = scmp.ne.s32.totalorder %s42, %s43
      %p57 = scmp.eq.s32.totalorder %s35, 1
      %p58 = por %p56, %p57
      %p60 = scmp.ne.s32.totalorder %s43, %s59
      %p61 = scmp.eq.s32.totalorder %s35, 0
      %p62 = por %p60, %p61
      %s63 = ssub.s32 %s29, %s36
      %p64 = scmp.eq.s32.totalorder %s63, 0
      %s66 = sadd.s32 %s65, 1
      %s67 = scalar_select %p64, %s65, %s66
      %p70 = pneg %p64
      %p71 = scmp.eq.s32.totalorder %s29, 1
      %p72 = por %p70, %p71
      %p73 = scmp.ne.s32.totalorder %s65, %s68
      %p74 = scmp.eq.s32.totalorder %s29, 0
      %p75 = por %p73, %p74
      %p76 = scmp.ne.s32.totalorder %s65, %s68
      %p77 = scmp.eq.s32.totalorder %s34, 1
      %p78 = por %p76, %p77
      %p79 = scmp.ne.s32.totalorder %s68, %s69
      %p80 = scmp.eq.s32.totalorder %s34, 0
      %p81 = por %p79, %p80
      %p82 = scmp.ne.s32.totalorder %s68, %s69
      %p83 = scmp.eq.s32.totalorder %s35, 1
      %p84 = por %p82, %p83
      %p86 = scmp.ne.s32.totalorder %s69, %s85
      %p87 = scmp.eq.s32.totalorder %s35, 0
      %p88 = por %p86, %p87
      %s90 = sadd.s32 %s89, 1
      %p93 = scmp.eq.s32.totalorder %s29, 1
      %p94 = scmp.ne.s32.totalorder %s89, %s91
      %p95 = scmp.eq.s32.totalorder %s29, 0
      %p96 = por %p94, %p95
      %p97 = scmp.ne.s32.totalorder %s89, %s91
      %p98 = scmp.eq.s32.totalorder %s34, 1
      %p99 = por %p97, %p98
      %p100 = scmp.ne.s32.totalorder %s91, %s92
      %p101 = scmp.eq.s32.totalorder %s34, 0
      %p102 = por %p100, %p101
      %p103 = scmp.ne.s32.totalorder %s91, %s92
      %p104 = scmp.eq.s32.totalorder %s35, 1
      %p105 = por %p103, %p104
      %p107 = scmp.ne.s32.totalorder %s92, %s106
      %p108 = scmp.eq.s32.totalorder %s35, 0
      %p109 = por %p107, %p108
      %s111 = sadd.s32 %s110, 1
      %p114 = scmp.eq.s32.totalorder %s29, 1
      %p115 = scmp.ne.s32.totalorder %s110, %s112
      %p116 = scmp.eq.s32.totalorder %s29, 0
      %p117 = por %p115, %p116
      %p118 = scmp.ne.s32.totalorder %s110, %s112
      %p119 = scmp.eq.s32.totalorder %s34, 1
      %p120 = por %p118, %p119
      %p121 = scmp.ne.s32.totalorder %s112, %s113
      %p122 = scmp.eq.s32.totalorder %s34, 0
      %p123 = por %p121, %p122
      %p124 = scmp.ne.s32.totalorder %s112, %s113
      %p125 = scmp.eq.s32.totalorder %s35, 1
      %p126 = por %p124, %p125
      %p128 = scmp.ne.s32.totalorder %s113, %s127
      %p129 = scmp.eq.s32.totalorder %s35, 0
      %p130 = por %p128, %p129
      %s132 = sadd.s32 %s131, 1
      %p135 = scmp.eq.s32.totalorder %s29, 1
      %p136 = scmp.ne.s32.totalorder %s131, %s133
      %p137 = scmp.eq.s32.totalorder %s29, 0
      %p138 = por %p136, %p137
      %p139 = scmp.ne.s32.totalorder %s131, %s133
      %p140 = scmp.eq.s32.totalorder %s34, 1
      %p141 = por %p139, %p140
      %p142 = scmp.ne.s32.totalorder %s133, %s134
      %p143 = scmp.eq.s32.totalorder %s34, 0
      %p144 = por %p142, %p143
      %p145 = scmp.ne.s32.totalorder %s133, %s134
      %p146 = scmp.eq.s32.totalorder %s35, 1
      %p147 = por %p145, %p146
      %p149 = scmp.ne.s32.totalorder %s134, %s148
      %p150 = scmp.eq.s32.totalorder %s35, 0
      %p151 = por %p149, %p150
      %s153 = sadd.s32 %s152, 1
      %p156 = scmp.eq.s32.totalorder %s29, 1
      %p157 = scmp.ne.s32.totalorder %s152, %s154
      %p158 = scmp.eq.s32.totalorder %s29, 0
      %p159 = por %p157, %p158
      %p160 = scmp.ne.s32.totalorder %s152, %s154
      %p161 = scmp.eq.s32.totalorder %s34, 1
      %p162 = por %p160, %p161
      %p163 = scmp.ne.s32.totalorder %s154, %s155
      %p164 = scmp.eq.s32.totalorder %s34, 0
      %p165 = por %p163, %p164
      %p166 = scmp.ne.s32.totalorder %s154, %s155
      %p167 = scmp.eq.s32.totalorder %s35, 1
      %p168 = por %p166, %p167
      %p170 = scmp.ne.s32.totalorder %s155, %s169
      %p171 = scmp.eq.s32.totalorder %s35, 0
      %p172 = por %p170, %p171
      %s174 = sadd.s32 %s173, 1
      %p177 = scmp.eq.s32.totalorder %s29, 1
      %p178 = scmp.ne.s32.totalorder %s173, %s175
      %p179 = scmp.eq.s32.totalorder %s29, 0
      %p180 = por %p178, %p179
      %p181 = scmp.ne.s32.totalorder %s173, %s175
      %p182 = scmp.eq.s32.totalorder %s34, 1
      %p183 = por %p181, %p182
      %p184 = scmp.ne.s32.totalorder %s175, %s176
      %p185 = scmp.eq.s32.totalorder %s34, 0
      %p186 = por %p184, %p185
      %p187 = scmp.ne.s32.totalorder %s175, %s176
      %p188 = scmp.eq.s32.totalorder %s35, 1
      %p189 = por %p187, %p188
      %p191 = scmp.ne.s32.totalorder %s176, %s190
      %p192 = scmp.eq.s32.totalorder %s35, 0
      %p193 = por %p191, %p192
      %s195 = sadd.s32 %s194, 1
      %p198 = scmp.eq.s32.totalorder %s29, 1
      %p199 = scmp.ne.s32.totalorder %s194, %s196
      %p200 = scmp.eq.s32.totalorder %s29, 0
      %p201 = por %p199, %p200
      %p202 = scmp.ne.s32.totalorder %s194, %s196
      %p203 = scmp.eq.s32.totalorder %s34, 1
      %p204 = por %p202, %p203
      %p205 = scmp.ne.s32.totalorder %s196, %s197
      %p206 = scmp.eq.s32.totalorder %s34, 0
      %p207 = por %p205, %p206
      %p208 = scmp.ne.s32.totalorder %s196, %s197
      %p209 = scmp.eq.s32.totalorder %s35, 1
      %p210 = por %p208, %p209
      %p212 = scmp.ne.s32.totalorder %s197, %s211
      %p213 = scmp.eq.s32.totalorder %s35, 0
      %p214 = por %p212, %p213
      %s216 = sadd.s32 %s215, 1
      %p219 = scmp.eq.s32.totalorder %s29, 1
      %p220 = scmp.ne.s32.totalorder %s215, %s217
      %p221 = scmp.eq.s32.totalorder %s29, 0
      %p222 = por %p220, %p221
      %p223 = scmp.ne.s32.totalorder %s215, %s217
      %p224 = scmp.eq.s32.totalorder %s34, 1
      %p225 = por %p223, %p224
      %p226 = scmp.ne.s32.totalorder %s217, %s218
      %p227 = scmp.eq.s32.totalorder %s34, 0
      %p228 = por %p226, %p227
      %p229 = scmp.ne.s32.totalorder %s217, %s218
      %p230 = scmp.eq.s32.totalorder %s35, 1
      %p231 = por %p229, %p230
      %p233 = scmp.ne.s32.totalorder %s218, %s232
      %p234 = scmp.eq.s32.totalorder %s35, 0
      %p235 = por %p233, %p234
      %s237 = sadd.s32 %s236, 1
      %p240 = scmp.eq.s32.totalorder %s29, 1
      %p241 = scmp.ne.s32.totalorder %s236, %s238
      %p242 = scmp.eq.s32.totalorder %s29, 0
      %p243 = por %p241, %p242
      %p244 = scmp.ne.s32.totalorder %s236, %s238
      %p245 = scmp.eq.s32.totalorder %s34, 1
      %p246 = por %p244, %p245
      %p247 = scmp.ne.s32.totalorder %s238, %s239
      %p248 = scmp.eq.s32.totalorder %s34, 0
      %p249 = por %p247, %p248
      %p250 = scmp.ne.s32.totalorder %s238, %s239
      %p251 = scmp.eq.s32.totalorder %s35, 1
      %p252 = por %p250, %p251
      %p254 = scmp.ne.s32.totalorder %s239, %s253
      %p255 = scmp.eq.s32.totalorder %s35, 0
      %p256 = por %p254, %p255
      %s257 = ssub.s32 %s29, %s36
      %p258 = scmp.eq.s32.totalorder %s257, 0
      %s260 = sadd.s32 %s259, 1
      %s261 = scalar_select %p258, %s259, %s260
      %p264 = pneg %p258
      %p265 = scmp.eq.s32.totalorder %s29, 1
      %p266 = por %p264, %p265
      %p267 = scmp.ne.s32.totalorder %s259, %s262
      %p268 = scmp.eq.s32.totalorder %s29, 0
      %p269 = por %p267, %p268
      %p270 = scmp.ne.s32.totalorder %s259, %s262
      %p271 = scmp.eq.s32.totalorder %s34, 1
      %p272 = por %p270, %p271
      %p273 = scmp.ne.s32.totalorder %s262, %s263
      %p274 = scmp.eq.s32.totalorder %s34, 0
      %p275 = por %p273, %p274
      %p276 = scmp.ne.s32.totalorder %s262, %s263
      %p277 = scmp.eq.s32.totalorder %s35, 1
      %p278 = por %p276, %p277
      %p280 = scmp.ne.s32.totalorder %s263, %s279
      %p281 = scmp.eq.s32.totalorder %s35, 0
      %p282 = por %p280, %p281
      %p283 = scmp.le.s32.totalorder 1, %s29
      %p284 = scmp.lt.s32.totalorder %s29, 3
      %p285 = pnand %p283, %p284
      %p286 = pneg %p285
      // Predicated region
      $region9: #{decoder_forward.10} parent=5 // pred_check
        _
      $region10: #{decoder_forward.10} parent=5 // pred_check_branch
        %288 = sbr.rel (%p285) target = $region12
      $region11: #{decoder_forward.10} parent=5 // pred_region
        %s289 = ssub.s32 %s29, 1
        // Predicated region
        $region13: #{decoder_forward.10} parent=11 // pred_check
          %p290 = pneg %p102
        $region14: #{decoder_forward.10} parent=11 // pred_check_branch
          %292 = sbr.rel (%p290) target = $region16
        $region15: #{decoder_forward.10} parent=11 // pred_region
          %s294 = ssub.s32 256, 256
          %295 = vsyncadd [#allocation6], %s294
          %s296 = sshll.u32 [#allocation7], 4
          %s297 = int_to_ptr.vmem [resolvable:$true] %s296
          %302 = dma.hbm_to_vmem [thread:$0]  %s2, 256, %s297, [#allocation6], 64, 64, 4
        $region16: #{decoder_forward.10} parent=11 // pred_fallthru
          _
        // Predicated region
        $region17: #{decoder_forward.10} parent=11 // pred_check
          %p303 = pneg %p123
        $region18: #{decoder_forward.10} parent=11 // pred_check_branch
          %305 = sbr.rel (%p303) target = $region20
        $region19: #{decoder_forward.10} parent=11 // pred_region
          %s307 = ssub.s32 16, 16
          %308 = vsyncadd [#allocation9], %s307
          %s310 = sshll.u32 [#allocation8], 4
          %s311 = int_to_ptr.vmem [resolvable:$true] %s310
          %313 = dma.hbm_to_vmem [thread:$0]  %s3, 16, %s311, [#allocation9]
        $region20: #{decoder_forward.10} parent=11 // pred_fallthru
          _
        // Predicated region
        $region21: #{decoder_forward.10} parent=11 // pred_check
          %p314 = pneg %p144
        $region22: #{decoder_forward.10} parent=11 // pred_check_branch
          %316 = sbr.rel (%p314) target = $region24
        $region23: #{decoder_forward.10} parent=11 // pred_region
          %s318 = ssub.s32 256, 256
          %319 = vsyncadd [#allocation9], %s318
          %s320 = sshll.u32 [#allocation10], 4
          %s321 = int_to_ptr.vmem [resolvable:$true] %s320
          %326 = dma.hbm_to_vmem [thread:$0]  %s4, 256, %s321, [#allocation9], 64, 64, 4
        $region24: #{decoder_forward.10} parent=11 // pred_fallthru
          _
        // Predicated region
        $region25: #{decoder_forward.10} parent=11 // pred_check
          %p327 = pneg %p165
        $region26: #{decoder_forward.10} parent=11 // pred_check_branch
          %329 = sbr.rel (%p327) target = $region28
        $region27: #{decoder_forward.10} parent=11 // pred_region
          %s331 = ssub.s32 16, 16
          %332 = vsyncadd [#allocation12], %s331
          %s334 = sshll.u32 [#allocation11], 4
          %s335 = int_to_ptr.vmem [resolvable:$true] %s334
          %337 = dma.hbm_to_vmem [thread:$0]  %s5, 16, %s335, [#allocation12]
        $region28: #{decoder_forward.10} parent=11 // pred_fallthru
          _
        // Predicated region
        $region29: #{decoder_forward.10} parent=11 // pred_check
          %p338 = pneg %p186
        $region30: #{decoder_forward.10} parent=11 // pred_check_branch
          %340 = sbr.rel (%p338) target = $region32
        $region31: #{decoder_forward.10} parent=11 // pred_region
          %s342 = ssub.s32 256, 256
          %343 = vsyncadd [#allocation12], %s342
          %s344 = sshll.u32 [#allocation13], 4
          %s345 = int_to_ptr.vmem [resolvable:$true] %s344
          %350 = dma.hbm_to_vmem [thread:$0]  %s6, 256, %s345, [#allocation12], 64, 64, 4
        $region32: #{decoder_forward.10} parent=11 // pred_fallthru
          _
        // Predicated region
        $region33: #{decoder_forward.10} parent=11 // pred_check
          %p351 = pneg %p207
        $region34: #{decoder_forward.10} parent=11 // pred_check_branch
          %353 = sbr.rel (%p351) target = $region36
        $region35: #{decoder_forward.10} parent=11 // pred_region
          %s355 = ssub.s32 16, 16
          %356 = vsyncadd [#allocation15], %s355
          %s358 = sshll.u32 [#allocation14], 4
          %s359 = int_to_ptr.vmem [resolvable:$true] %s358
          %361 = dma.hbm_to_vmem [thread:$0]  %s7, 16, %s359, [#allocation15]
        $region36: #{decoder_forward.10} parent=11 // pred_fallthru
          _
        // Predicated region
        $region37: #{decoder_forward.10} parent=11 // pred_check
          %p362 = pneg %p228
        $region38: #{decoder_forward.10} parent=11 // pred_check_branch
          %364 = sbr.rel (%p362) target = $region40
        $region39: #{decoder_forward.10} parent=11 // pred_region
          %s366 = ssub.s32 16, 16
          %367 = vsyncadd [#allocation15], %s366
          %s369 = sshll.u32 [#allocation16], 4
          %s370 = int_to_ptr.vmem [resolvable:$true] %s369
          %372 = dma.hbm_to_vmem [thread:$0]  %s8, 16, %s370, [#allocation15]
        $region40: #{decoder_forward.10} parent=11 // pred_fallthru
          _
        // Predicated region
        $region41: #{decoder_forward.10} parent=11 // pred_check
          %p373 = pneg %p249
        $region42: #{decoder_forward.10} parent=11 // pred_check_branch
          %375 = sbr.rel (%p373) target = $region44
        $region43: #{decoder_forward.10} parent=11 // pred_region
          %s377 = ssub.s32 16, 16
          %378 = vsyncadd [#allocation18], %s377
          %s380 = sshll.u32 [#allocation17], 4
          %s381 = int_to_ptr.vmem [resolvable:$true] %s380
          %383 = dma.hbm_to_vmem [thread:$0]  %s9, 16, %s381, [#allocation18]
        $region44: #{decoder_forward.10} parent=11 // pred_fallthru
          _
      $region12: #{decoder_forward.10} parent=5 // pred_fallthru
        _
      %p384 = scmp.lt.s32.totalorder %s29, 2
      // Predicated region
      $region45: #{decoder_forward.10} parent=5 // pred_check
        %p385 = pneg %p384
      $region46: #{decoder_forward.10} parent=5 // pred_check_branch
        %387 = sbr.rel (%p385) target = $region48
      $region47: #{decoder_forward.10} parent=5 // pred_region
        // Predicated region
        $region49: #{decoder_forward.10} parent=47 // pred_check
          %p388 = pneg %p49
        $region50: #{decoder_forward.10} parent=47 // pred_check_branch
          %390 = sbr.rel (%p388) target = $region52
        $region51: #{decoder_forward.10} parent=47 // pred_region
          %s391 = sand.u32 %s39, 1
          %s392 = scalar_lea.sflag [#allocation3], %s391
          %s393 = sand.u32 %s39, 1
          %s394 = smul.addr %s393, 8
          %s395 = scalar_lea.vmem [#allocation2], %s394
          %s397 = ssub.s32 128, 128
          %398 = vsyncadd %s392, %s397
          %s399 = smul.addr %s29, 128
          %s400 = scalar_lea.hbm %s0, %s399
          %s402 = sshll.u32 %s395, 4
          %s403 = int_to_ptr.vmem [resolvable:$true] %s402
          %405 = dma.hbm_to_vmem [thread:$0]  %s400, 128, %s403, %s392
        $region52: #{decoder_forward.10} parent=47 // pred_fallthru
          _
        // Predicated region
        $region53: #{decoder_forward.10} parent=47 // pred_check
          %p406 = pneg %p75
        $region54: #{decoder_forward.10} parent=47 // pred_check_branch
          %408 = sbr.rel (%p406) target = $region56
        $region55: #{decoder_forward.10} parent=47 // pred_region
          %s409 = sand.u32 %s29, 1
          %s410 = scalar_lea.sflag [#allocation6], %s409
          %s411 = sand.u32 %s65, 1
          %s412 = smul.addr %s411, 8
          %s413 = scalar_lea.vmem [#allocation5], %s412
          %s415 = ssub.s32 128, 128
          %416 = vsyncadd %s410, %s415
          %s417 = smul.addr %s29, 128
          %s418 = scalar_lea.hbm %s1, %s417
          %s420 = sshll.u32 %s413, 4
          %s421 = int_to_ptr.vmem [resolvable:$true] %s420
          %423 = dma.hbm_to_vmem [thread:$0]  %s418, 128, %s421, %s410
        $region56: #{decoder_forward.10} parent=47 // pred_fallthru
          _
      $region48: #{decoder_forward.10} parent=5 // pred_fallthru
        _
      %p424 = scmp.le.s32.totalorder 1, %s29
      %p425 = scmp.lt.s32.totalorder %s29, 3
      %p426 = pnand %p424, %p425
      %p427 = pneg %p426
      // Predicated region
      $region57: #{decoder_forward.10} parent=5 // pred_check
        _
      $region58: #{decoder_forward.10} parent=5 // pred_check_branch
        %429 = sbr.rel (%p426) target = $region60
      $region59: #{decoder_forward.10} parent=5 // pred_region
        %s430 = ssub.s32 %s29, 1
        %s431 = sand.u32 %s42, 1
        %s432 = scalar_lea.sflag [#allocation3], %s431
        %s433 = sand.u32 %s42, 1
        %s434 = smul.addr %s433, 8
        %s435 = scalar_lea.vmem [#allocation2], %s434
        // Predicated region
        $region61: #{decoder_forward.10} parent=59 // pred_check
          %p436 = pneg %p55
        $region62: #{decoder_forward.10} parent=59 // pred_check_branch
          %438 = sbr.rel (%p436) target = $region64
        $region63: #{decoder_forward.10} parent=59 // pred_region
          %439 = dma.done %s432, 128
        $region64: #{decoder_forward.10} parent=59 // pred_fallthru
          _
        %s440 = sand.u32 %s34, 1
        %s441 = scalar_lea.sflag [#allocation6], %s440
        %s442 = sand.u32 %s68, 1
        %s443 = smul.addr %s442, 8
        %s444 = scalar_lea.vmem [#allocation5], %s443
        // Predicated region
        $region65: #{decoder_forward.10} parent=59 // pred_check
          %p445 = pneg %p81
        $region66: #{decoder_forward.10} parent=59 // pred_check_branch
          %447 = sbr.rel (%p445) target = $region68
        $region67: #{decoder_forward.10} parent=59 // pred_region
          %448 = dma.done %s441, 128
        $region68: #{decoder_forward.10} parent=59 // pred_fallthru
          _
        // Predicated region
        $region69: #{decoder_forward.10} parent=59 // pred_check
          %p449 = pneg %p102
        $region70: #{decoder_forward.10} parent=59 // pred_check_branch
          %451 = sbr.rel (%p449) target = $region72
        $region71: #{decoder_forward.10} parent=59 // pred_region
          %452 = dma.done [#allocation6], 256
        $region72: #{decoder_forward.10} parent=59 // pred_fallthru
          _
        // Predicated region
        $region73: #{decoder_forward.10} parent=59 // pred_check
          %p453 = pneg %p123
        $region74: #{decoder_forward.10} parent=59 // pred_check_branch
          %455 = sbr.rel (%p453) target = $region76
        $region75: #{decoder_forward.10} parent=59 // pred_region
          %456 = dma.done [#allocation9], 16
        $region76: #{decoder_forward.10} parent=59 // pred_fallthru
          _
        // Predicated region
        $region77: #{decoder_forward.10} parent=59 // pred_check
          %p457 = pneg %p144
        $region78: #{decoder_forward.10} parent=59 // pred_check_branch
          %459 = sbr.rel (%p457) target = $region80
        $region79: #{decoder_forward.10} parent=59 // pred_region
          %460 = dma.done [#allocation9], 256
        $region80: #{decoder_forward.10} parent=59 // pred_fallthru
          _
        // Predicated region
        $region81: #{decoder_forward.10} parent=59 // pred_check
          %p461 = pneg %p165
        $region82: #{decoder_forward.10} parent=59 // pred_check_branch
          %463 = sbr.rel (%p461) target = $region84
        $region83: #{decoder_forward.10} parent=59 // pred_region
          %464 = dma.done [#allocation12], 16
        $region84: #{decoder_forward.10} parent=59 // pred_fallthru
          _
        // Predicated region
        $region85: #{decoder_forward.10} parent=59 // pred_check
          %p465 = pneg %p186
        $region86: #{decoder_forward.10} parent=59 // pred_check_branch
          %467 = sbr.rel (%p465) target = $region88
        $region87: #{decoder_forward.10} parent=59 // pred_region
          %468 = dma.done [#allocation12], 256
        $region88: #{decoder_forward.10} parent=59 // pred_fallthru
          _
        // Predicated region
        $region89: #{decoder_forward.10} parent=59 // pred_check
          %p469 = pneg %p207
        $region90: #{decoder_forward.10} parent=59 // pred_check_branch
          %471 = sbr.rel (%p469) target = $region92
        $region91: #{decoder_forward.10} parent=59 // pred_region
          %472 = dma.done [#allocation15], 16
        $region92: #{decoder_forward.10} parent=59 // pred_fallthru
          _
        // Predicated region
        $region93: #{decoder_forward.10} parent=59 // pred_check
          %p473 = pneg %p228
        $region94: #{decoder_forward.10} parent=59 // pred_check_branch
          %475 = sbr.rel (%p473) target = $region96
        $region95: #{decoder_forward.10} parent=59 // pred_region
          %476 = dma.done [#allocation15], 16
        $region96: #{decoder_forward.10} parent=59 // pred_fallthru
          _
        // Predicated region
        $region97: #{decoder_forward.10} parent=59 // pred_check
          %p477 = pneg %p249
        $region98: #{decoder_forward.10} parent=59 // pred_check_branch
          %479 = sbr.rel (%p477) target = $region100
        $region99: #{decoder_forward.10} parent=59 // pred_region
          %480 = dma.done [#allocation18], 16
        $region100: #{decoder_forward.10} parent=59 // pred_fallthru
          _
        %s481 = sand.u32 %s42, 1
        %s482 = scalar_lea.sflag [#allocation3], %s481
        %s483 = sand.u32 %s42, 1
        %s484 = smul.addr %s483, 8
        %s485 = scalar_lea.vmem [#allocation2], %s484
        %p486 = pneg %p55
        %p487 = pneg %p52
        %s488 = sand.u32 %s34, 1
        %s489 = scalar_lea.sflag [#allocation6], %s488
        %s490 = sand.u32 %s68, 1
        %s491 = smul.addr %s490, 8
        %s492 = scalar_lea.vmem [#allocation5], %s491
        %p493 = pneg %p81
        %p494 = pneg %p78
        %p495 = pneg %p102
        %p496 = pneg %p99
        %p497 = pneg %p123
        %p498 = pneg %p120
        %p499 = pneg %p144
        %p500 = pneg %p141
        %p501 = pneg %p165
        %p502 = pneg %p162
        %p503 = pneg %p186
        %p504 = pneg %p183
        %p505 = pneg %p207
        %p506 = pneg %p204
        %p507 = pneg %p228
        %p508 = pneg %p225
        %p509 = pneg %p249
        %p510 = pneg %p246
        %p511 = pneg %p275
        %p512 = pneg %p272
        %s513 = sand.u32 %s262, 1
        %s514 = scalar_lea.sflag [#allocation4], %s513
        %s515 = sand.u32 %s262, 1
        %s516 = smul.addr %s515, 8
        %s517 = scalar_lea.vmem [#allocation19], %s516
        %v519 = vld [vmem:[%s435] sm:$0xff]
        %v520 = vld [vmem:[%s444] sm:$0xff]
        %v521 = vpack.c.bf16 %v519, %v519
        %v522 = vld [vmem:[#allocation7] sm:$0xf]
        %v523 = vld [vmem:[#allocation7 + $0x4] sm:$0xf]
        %v524 = vld [vmem:[#allocation7 + $0x8] sm:$0xf]
        %v525 = vld [vmem:[#allocation7 + $0xc] sm:$0xf]
        %v526 = vld [vmem:[#allocation8] sm:$0x1]
        %v528 = vlaneseq
        %v529 = vshrl.u32 %v528, 7
        %v530 = vsub.s32 0, %v529
        %v531 = vrot.slane %v526, %v530
        %v537 = vunpack.c.l.b16 %v522
        %v538 = vunpack.c.l.b16 %v523
        %v539 = vunpack.c.l.b16 %v524
        %v540 = vunpack.c.l.b16 %v525
        %v541 = vpack.c.b16 %v538, %v537
        %v542 = vpack.c.b16 %v540, %v539
        %vm545 = vcmask 261120
        %v547 = vsel %vm545, %v521, 0
        %549 = vmatprep.subr.bf16.mxu0 0
        %550 = vmatpush1.bf16.msra.mxu0 %v541
        %551 = vmatprep.subr.bf16.mxu0 0
        %552 = vmatpush1.bf16.msra.mxu0 %v542
        %553 = vmatprep.subr.bf16.mxu0 0
        %554 = vmatpush1.bf16.msra.mxu0 0
        %555 = vmatprep.subr.bf16.mxu0 0
        %556 = vmatpush1.bf16.msra.mxu0 0
        %557 = vmatprep.subr.bf16.mxu0 0
        %558 = vmatpush1.bf16.msra.mxu0 0
        %559 = vmatprep.subr.bf16.mxu0 0
        %560 = vmatpush1.bf16.msra.mxu0 0
        %561 = vmatprep.subr.bf16.mxu0 0
        %562 = vmatpush1.bf16.msra.mxu0 0
        %563 = vmatprep.subr.bf16.mxu0 0
        %564 = vmatpush1.bf16.msra.mxu0 0
        %565 = vmatprep.subr.bf16.mxu0 0
        %566 = vmatpush1.bf16.msra.mxu0 0
        %567 = vmatprep.subr.bf16.mxu0 0
        %568 = vmatpush1.bf16.msra.mxu0 0
        %569 = vmatprep.subr.bf16.mxu0 0
        %570 = vmatpush1.bf16.msra.mxu0 0
        %571 = vmatprep.subr.bf16.mxu0 0
        %572 = vmatpush1.bf16.msra.mxu0 0
        %573 = vmatprep.subr.bf16.mxu0 0
        %574 = vmatpush1.bf16.msra.mxu0 0
        %575 = vmatprep.subr.bf16.mxu0 0
        %576 = vmatpush1.bf16.msra.mxu0 0
        %577 = vmatprep.subr.bf16.mxu0 0
        %578 = vmatpush1.bf16.msra.mxu0 0
        %579 = vmatprep.subr.bf16.mxu0 0
        %580 = vmatpush1.bf16.msra.mxu0 0
        %581 = vmatprep.mubr.bf16.mxu0 0
        %582 = vmatmul.mubr.bf16.gmra.mrb[0].mxu0 %v547
        %v583 = vpop.f32.mrb[0].mxu0
        %v584 = vadd.f32 %v531, %v583
        %v585 = vpop.f32.mrb[0].mxu0
        %v586 = vpop.f32.mrb[0].mxu0
        %v587 = vpop.f32.mrb[0].mxu0
        %588 = vdwg.mxu0
        %v589 = vpack.c.bf16 %v520, %v520
        %v590 = vld [vmem:[#allocation10] sm:$0xf]
        %v591 = vld [vmem:[#allocation10 + $0x4] sm:$0xf]
        %v592 = vld [vmem:[#allocation10 + $0x8] sm:$0xf]
        %v593 = vld [vmem:[#allocation10 + $0xc] sm:$0xf]
        %v594 = vld [vmem:[#allocation11] sm:$0x1]
        %v596 = vlaneseq
        %v597 = vshrl.u32 %v596, 7
        %v598 = vsub.s32 0, %v597
        %v599 = vrot.slane %v594, %v598
        %v605 = vunpack.c.l.b16 %v590
        %v606 = vunpack.c.l.b16 %v591
        %v607 = vunpack.c.l.b16 %v592
        %v608 = vunpack.c.l.b16 %v593
        %v609 = vpack.c.b16 %v606, %v605
        %v610 = vpack.c.b16 %v608, %v607
        %v614 = vsel %vm545, %v589, 0
        %616 = vmatprep.subr.bf16.mxu0 0
        %617 = vmatpush1.bf16.msra.mxu0 %v609
        %618 = vmatprep.subr.bf16.mxu0 0
        %619 = vmatpush1.bf16.msra.mxu0 %v610
        %620 = vmatprep.subr.bf16.mxu0 0
        %621 = vmatpush1.bf16.msra.mxu0 0
        %622 = vmatprep.subr.bf16.mxu0 0
        %623 = vmatpush1.bf16.msra.mxu0 0
        %624 = vmatprep.subr.bf16.mxu0 0
        %625 = vmatpush1.bf16.msra.mxu0 0
        %626 = vmatprep.subr.bf16.mxu0 0
        %627 = vmatpush1.bf16.msra.mxu0 0
        %628 = vmatprep.subr.bf16.mxu0 0
        %629 = vmatpush1.bf16.msra.mxu0 0
        %630 = vmatprep.subr.bf16.mxu0 0
        %631 = vmatpush1.bf16.msra.mxu0 0
        %632 = vmatprep.subr.bf16.mxu0 0
        %633 = vmatpush1.bf16.msra.mxu0 0
        %634 = vmatprep.subr.bf16.mxu0 0
        %635 = vmatpush1.bf16.msra.mxu0 0
        %636 = vmatprep.subr.bf16.mxu0 0
        %637 = vmatpush1.bf16.msra.mxu0 0
        %638 = vmatprep.subr.bf16.mxu0 0
        %639 = vmatpush1.bf16.msra.mxu0 0
        %640 = vmatprep.subr.bf16.mxu0 0
        %641 = vmatpush1.bf16.msra.mxu0 0
        %642 = vmatprep.subr.bf16.mxu0 0
        %643 = vmatpush1.bf16.msra.mxu0 0
        %644 = vmatprep.subr.bf16.mxu0 0
        %645 = vmatpush1.bf16.msra.mxu0 0
        %646 = vmatprep.subr.bf16.mxu0 0
        %647 = vmatpush1.bf16.msra.mxu0 0
        %648 = vmatprep.mubr.bf16.mxu0 0
        %649 = vmatmul.mubr.bf16.gmra.mrb[0].mxu0 %v614
        %v650 = vpop.f32.mrb[0].mxu0
        %v651 = vadd.f32 %v599, %v650
        %v652 = vpop.f32.mrb[0].mxu0
        %v653 = vpop.f32.mrb[0].mxu0
        %v654 = vpop.f32.mrb[0].mxu0
        %655 = vdwg.mxu0
        %v656 = vld [vmem:[#allocation13] sm:$0xf]
        %v657 = vld [vmem:[#allocation13 + $0x4] sm:$0xf]
        %v658 = vld [vmem:[#allocation13 + $0x8] sm:$0xf]
        %v659 = vld [vmem:[#allocation13 + $0xc] sm:$0xf]
        %v660 = vpack.c.bf16 %v584, %v584
        %v661 = vpack.c.bf16 %v651, %v651
        %vm662 = vcmask 64512
        %v664 = vsel %vm662, %v660, 0
        %v667 = vsel %vm662, %v661, 0
        %669 = vmatprep.subr.bf16.mxu0 0
        %670 = vmatpush1.bf16.xpose.msra.mxu0 %v667
        %671 = vmatprep.subr.bf16.mxu0 0
        %672 = vmatpush1.bf16.xpose.msra.mxu0 0
        %673 = vmatprep.subr.bf16.mxu0 0
        %674 = vmatpush1.bf16.xpose.msra.mxu0 0
        %675 = vmatprep.subr.bf16.mxu0 0
        %676 = vmatpush1.bf16.xpose.msra.mxu0 0
        %677 = vmatprep.subr.bf16.mxu0 0
        %678 = vmatpush1.bf16.xpose.msra.mxu0 0
        %679 = vmatprep.subr.bf16.mxu0 0
        %680 = vmatpush1.bf16.xpose.msra.mxu0 0
        %681 = vmatprep.subr.bf16.mxu0 0
        %682 = vmatpush1.bf16.xpose.msra.mxu0 0
        %683 = vmatprep.subr.bf16.mxu0 0
        %684 = vmatpush1.bf16.xpose.msra.mxu0 0
        %685 = vmatprep.subr.bf16.mxu0 0
        %686 = vmatpush1.bf16.xpose.msra.mxu0 0
        %687 = vmatprep.subr.bf16.mxu0 0
        %688 = vmatpush1.bf16.xpose.msra.mxu0 0
        %689 = vmatprep.subr.bf16.mxu0 0
        %690 = vmatpush1.bf16.xpose.msra.mxu0 0
        %691 = vmatprep.subr.bf16.mxu0 0
        %692 = vmatpush1.bf16.xpose.msra.mxu0 0
        %693 = vmatprep.subr.bf16.mxu0 0
        %694 = vmatpush1.bf16.xpose.msra.mxu0 0
        %695 = vmatprep.subr.bf16.mxu0 0
        %696 = vmatpush1.bf16.xpose.msra.mxu0 0
        %697 = vmatprep.subr.bf16.mxu0 0
        %698 = vmatpush1.bf16.xpose.msra.mxu0 0
        %699 = vmatprep.subr.bf16.mxu0 0
        %700 = vmatpush1.bf16.xpose.msra.mxu0 0
        %701 = vmatprep.mubr.bf16.mxu0 0
        %702 = vmatmul.mubr.bf16.gmra.mrb[0].mxu0 %v664
        %v703 = vpop.f32.mrb[0].mxu0
        %v704 = vadd.f32 0.0, %v703
        %v705 = vpop.f32.mrb[0].mxu0
        %v706 = vpop.f32.mrb[0].mxu0
        %v707 = vpop.f32.mrb[0].mxu0
        %708 = vdwg.mxu0
        %v709 = vmul.f32 %v704, 0.35355338
        %v710 = vsel %vm662, %v709, -inf
        %711 = vmax.xlane.f32.xlu0 %v710
        %v712 = vpop.xlane.xlu0 %711
        %v713 = vsub.f32 %v709, %v712
        %v714 = vmul.f32 %v713, 1.442695
        %v715 = vpow.pop %v714
        %v716 = vsel %vm662, %v715, 0.0
        %717 = vadd.xlane.f32.xlu0 %v716
        %v718 = vpop.xlane.xlu0 %717
        %v719 = vrcp.pop %v718
        %v720 = vmul.f32 %v715, %v719
        %v721 = vpack.c.bf16 %v720, %v720
        %723 = vrot.lane.b32.xlu0 %v661, 96
        %v724 = vpop.permute.xlu0 %723
        %v726 = vsel %vm662, %v721, 0
        %vm728 = vcmask 1043456
        %v730 = vsel %vm728, %v724, 0
        %732 = vmatprep.subr.bf16.mxu0 0
        %733 = vmatpush1.bf16.msra.mxu0 %v730
        %734 = vmatprep.subr.bf16.mxu0 0
        %735 = vmatpush1.bf16.msra.mxu0 0
        %736 = vmatprep.subr.bf16.mxu0 0
        %737 = vmatpush1.bf16.msra.mxu0 0
        %738 = vmatprep.subr.bf16.mxu0 0
        %739 = vmatpush1.bf16.msra.mxu0 0
        %740 = vmatprep.subr.bf16.mxu0 0
        %741 = vmatpush1.bf16.msra.mxu0 0
        %742 = vmatprep.subr.bf16.mxu0 0
        %743 = vmatpush1.bf16.msra.mxu0 0
        %744 = vmatprep.subr.bf16.mxu0 0
        %745 = vmatpush1.bf16.msra.mxu0 0
        %746 = vmatprep.subr.bf16.mxu0 0
        %747 = vmatpush1.bf16.msra.mxu0 0
        %748 = vmatprep.subr.bf16.mxu0 0
        %749 = vmatpush1.bf16.msra.mxu0 0
        %750 = vmatprep.subr.bf16.mxu0 0
        %751 = vmatpush1.bf16.msra.mxu0 0
        %752 = vmatprep.subr.bf16.mxu0 0
        %753 = vmatpush1.bf16.msra.mxu0 0
        %754 = vmatprep.subr.bf16.mxu0 0
        %755 = vmatpush1.bf16.msra.mxu0 0
        %756 = vmatprep.subr.bf16.mxu0 0
        %757 = vmatpush1.bf16.msra.mxu0 0
        %758 = vmatprep.subr.bf16.mxu0 0
        %759 = vmatpush1.bf16.msra.mxu0 0
        %760 = vmatprep.subr.bf16.mxu0 0
        %761 = vmatpush1.bf16.msra.mxu0 0
        %762 = vmatprep.subr.bf16.mxu0 0
        %763 = vmatpush1.bf16.msra.mxu0 0
        %764 = vmatprep.mubr.bf16.mxu0 0
        %765 = vmatmul.mubr.bf16.gmra.mrb[0].mxu0 %v726
        %v766 = vpop.f32.mrb[0].mxu0
        %v767 = vadd.f32 0.0, %v766
        %v768 = vpop.f32.mrb[0].mxu0
        %v769 = vpop.f32.mrb[0].mxu0
        %v770 = vpop.f32.mrb[0].mxu0
        %771 = vdwg.mxu0
        %v772 = vpack.c.bf16 %v767, %v767
        %774 = vrot.lane.b32.xlu0 %v660, 120
        %v775 = vpop.permute.xlu0 %774
        %776 = vrot.lane.b32.xlu0 %v661, 120
        %v777 = vpop.permute.xlu0 %776
        %v779 = vsel %vm662, %v775, 0
        %v782 = vsel %vm662, %v777, 0
        %784 = vmatprep.subr.bf16.mxu0 0
        %785 = vmatpush1.bf16.xpose.msra.mxu0 %v782
        %786 = vmatprep.subr.bf16.mxu0 0
        %787 = vmatpush1.bf16.xpose.msra.mxu0 0
        %788 = vmatprep.subr.bf16.mxu0 0
        %789 = vmatpush1.bf16.xpose.msra.mxu0 0
        %790 = vmatprep.subr.bf16.mxu0 0
        %791 = vmatpush1.bf16.xpose.msra.mxu0 0
        %792 = vmatprep.subr.bf16.mxu0 0
        %793 = vmatpush1.bf16.xpose.msra.mxu0 0
        %794 = vmatprep.subr.bf16.mxu0 0
        %795 = vmatpush1.bf16.xpose.msra.mxu0 0
        %796 = vmatprep.subr.bf16.mxu0 0
        %797 = vmatpush1.bf16.xpose.msra.mxu0 0
        %798 = vmatprep.subr.bf16.mxu0 0
        %799 = vmatpush1.bf16.xpose.msra.mxu0 0
        %800 = vmatprep.subr.bf16.mxu0 0
        %801 = vmatpush1.bf16.xpose.msra.mxu0 0
        %802 = vmatprep.subr.bf16.mxu0 0
        %803 = vmatpush1.bf16.xpose.msra.mxu0 0
        %804 = vmatprep.subr.bf16.mxu0 0
        %805 = vmatpush1.bf16.xpose.msra.mxu0 0
        %806 = vmatprep.subr.bf16.mxu0 0
        %807 = vmatpush1.bf16.xpose.msra.mxu0 0
        %808 = vmatprep.subr.bf16.mxu0 0
        %809 = vmatpush1.bf16.xpose.msra.mxu0 0
        %810 = vmatprep.subr.bf16.mxu0 0
        %811 = vmatpush1.bf16.xpose.msra.mxu0 0
        %812 = vmatprep.subr.bf16.mxu0 0
        %813 = vmatpush1.bf16.xpose.msra.mxu0 0
        %814 = vmatprep.subr.bf16.mxu0 0
        %815 = vmatpush1.bf16.xpose.msra.mxu0 0
        %816 = vmatprep.mubr.bf16.mxu0 0
        %817 = vmatmul.mubr.bf16.gmra.mrb[0].mxu0 %v779
        %v818 = vpop.f32.mrb[0].mxu0
        %v819 = vadd.f32 0.0, %v818
        %v820 = vpop.f32.mrb[0].mxu0
        %v821 = vpop.f32.mrb[0].mxu0
        %v822 = vpop.f32.mrb[0].mxu0
        %823 = vdwg.mxu0
        %v824 = vmul.f32 %v819, 0.35355338
        %v825 = vsel %vm662, %v824, -inf
        %826 = vmax.xlane.f32.xlu0 %v825
        %v827 = vpop.xlane.xlu0 %826
        %v828 = vsub.f32 %v824, %v827
        %v829 = vmul.f32 %v828, 1.442695
        %v830 = vpow.pop %v829
        %v831 = vsel %vm662, %v830, 0.0
        %832 = vadd.xlane.f32.xlu0 %v831
        %v833 = vpop.xlane.xlu0 %832
        %v834 = vrcp.pop %v833
        %v835 = vmul.f32 %v830, %v834
        %v836 = vpack.c.bf16 %v835, %v835
        %837 = vrot.lane.b32.xlu0 %v661, 88
        %v838 = vpop.permute.xlu0 %837
        %v840 = vsel %vm662, %v836, 0
        %v843 = vsel %vm728, %v838, 0
        %845 = vmatprep.subr.bf16.mxu0 0
        %846 = vmatpush1.bf16.msra.mxu0 %v843
        %847 = vmatprep.subr.bf16.mxu0 0
        %848 = vmatpush1.bf16.msra.mxu0 0
        %849 = vmatprep.subr.bf16.mxu0 0
        %850 = vmatpush1.bf16.msra.mxu0 0
        %851 = vmatprep.subr.bf16.mxu0 0
        %852 = vmatpush1.bf16.msra.mxu0 0
        %853 = vmatprep.subr.bf16.mxu0 0
        %854 = vmatpush1.bf16.msra.mxu0 0
        %855 = vmatprep.subr.bf16.mxu0 0
        %856 = vmatpush1.bf16.msra.mxu0 0
        %857 = vmatprep.subr.bf16.mxu0 0
        %858 = vmatpush1.bf16.msra.mxu0 0
        %859 = vmatprep.subr.bf16.mxu0 0
        %860 = vmatpush1.bf16.msra.mxu0 0
        %861 = vmatprep.subr.bf16.mxu0 0
        %862 = vmatpush1.bf16.msra.mxu0 0
        %863 = vmatprep.subr.bf16.mxu0 0
        %864 = vmatpush1.bf16.msra.mxu0 0
        %865 = vmatprep.subr.bf16.mxu0 0
        %866 = vmatpush1.bf16.msra.mxu0 0
        %867 = vmatprep.subr.bf16.mxu0 0
        %868 = vmatpush1.bf16.msra.mxu0 0
        %869 = vmatprep.subr.bf16.mxu0 0
        %870 = vmatpush1.bf16.msra.mxu0 0
        %871 = vmatprep.subr.bf16.mxu0 0
        %872 = vmatpush1.bf16.msra.mxu0 0
        %873 = vmatprep.subr.bf16.mxu0 0
        %874 = vmatpush1.bf16.msra.mxu0 0
        %875 = vmatprep.subr.bf16.mxu0 0
        %876 = vmatpush1.bf16.msra.mxu0 0
        %877 = vmatprep.mubr.bf16.mxu0 0
        %878 = vmatmul.mubr.bf16.gmra.mrb[0].mxu0 %v840
        %v879 = vpop.f32.mrb[0].mxu0
        %v880 = vadd.f32 0.0, %v879
        %v881 = vpop.f32.mrb[0].mxu0
        %v882 = vpop.f32.mrb[0].mxu0
        %v883 = vpop.f32.mrb[0].mxu0
        %884 = vdwg.mxu0
        %v885 = vpack.c.bf16 %v880, %v880
        %v887 = vsel %vm662, %v885, 0
        %v890 = vsel %vm728, %v657, 0
        %892 = vmatprep.subr.bf16.mxu0 0
        %893 = vmatpush1.bf16.msra.mxu0 %v890
        %894 = vmatprep.subr.bf16.mxu0 0
        %895 = vmatpush1.bf16.msra.mxu0 0
        %896 = vmatprep.subr.bf16.mxu0 0
        %897 = vmatpush1.bf16.msra.mxu0 0
        %898 = vmatprep.subr.bf16.mxu0 0
        %899 = vmatpush1.bf16.msra.mxu0 0
        %900 = vmatprep.subr.bf16.mxu0 0
        %901 = vmatpush1.bf16.msra.mxu0 0
        %902 = vmatprep.subr.bf16.mxu0 0
        %903 = vmatpush1.bf16.msra.mxu0 0
        %904 = vmatprep.subr.bf16.mxu0 0
        %905 = vmatpush1.bf16.msra.mxu0 0
        %906 = vmatprep.subr.bf16.mxu0 0
        %907 = vmatpush1.bf16.msra.mxu0 0
        %908 = vmatprep.subr.bf16.mxu0 0
        %909 = vmatpush1.bf16.msra.mxu0 0
        %910 = vmatprep.subr.bf16.mxu0 0
        %911 = vmatpush1.bf16.msra.mxu0 0
        %912 = vmatprep.subr.bf16.mxu0 0
        %913 = vmatpush1.bf16.msra.mxu0 0
        %914 = vmatprep.subr.bf16.mxu0 0
        %915 = vmatpush1.bf16.msra.mxu0 0
        %916 = vmatprep.subr.bf16.mxu0 0
        %917 = vmatpush1.bf16.msra.mxu0 0
        %918 = vmatprep.subr.bf16.mxu0 0
        %919 = vmatpush1.bf16.msra.mxu0 0
        %920 = vmatprep.subr.bf16.mxu0 0
        %921 = vmatpush1.bf16.msra.mxu0 0
        %922 = vmatprep.subr.bf16.mxu0 0
        %923 = vmatpush1.bf16.msra.mxu0 0
        %924 = vmatprep.mubr.bf16.mxu0 0
        %925 = vmatmul.mubr.bf16.gmra.mrb[0].mxu0 %v887
        %v926 = vpop.f32.mrb[0].mxu0
        %v927 = vadd.f32 0.0, %v926
        %v928 = vpop.f32.mrb[0].mxu0
        %v929 = vpop.f32.mrb[0].mxu0
        %v930 = vpop.f32.mrb[0].mxu0
        %931 = vdwg.mxu0
        %v933 = vsel %vm662, %v772, 0
        %v936 = vsel %vm728, %v656, 0
        %938 = vmatprep.subr.bf16.mxu0 0
        %939 = vmatpush1.bf16.msra.mxu0 %v936
        %940 = vmatprep.subr.bf16.mxu0 0
        %941 = vmatpush1.bf16.msra.mxu0 0
        %942 = vmatprep.subr.bf16.mxu0 0
        %943 = vmatpush1.bf16.msra.mxu0 0
        %944 = vmatprep.subr.bf16.mxu0 0
        %945 = vmatpush1.bf16.msra.mxu0 0
        %946 = vmatprep.subr.bf16.mxu0 0
        %947 = vmatpush1.bf16.msra.mxu0 0
        %948 = vmatprep.subr.bf16.mxu0 0
        %949 = vmatpush1.bf16.msra.mxu0 0
        %950 = vmatprep.subr.bf16.mxu0 0
        %951 = vmatpush1.bf16.msra.mxu0 0
        %952 = vmatprep.subr.bf16.mxu0 0
        %953 = vmatpush1.bf16.msra.mxu0 0
        %954 = vmatprep.subr.bf16.mxu0 0
        %955 = vmatpush1.bf16.msra.mxu0 0
        %956 = vmatprep.subr.bf16.mxu0 0
        %957 = vmatpush1.bf16.msra.mxu0 0
        %958 = vmatprep.subr.bf16.mxu0 0
        %959 = vmatpush1.bf16.msra.mxu0 0
        %960 = vmatprep.subr.bf16.mxu0 0
        %961 = vmatpush1.bf16.msra.mxu0 0
        %962 = vmatprep.subr.bf16.mxu0 0
        %963 = vmatpush1.bf16.msra.mxu0 0
        %964 = vmatprep.subr.bf16.mxu0 0
        %965 = vmatpush1.bf16.msra.mxu0 0
        %966 = vmatprep.subr.bf16.mxu0 0
        %967 = vmatpush1.bf16.msra.mxu0 0
        %968 = vmatprep.subr.bf16.mxu0 0
        %969 = vmatpush1.bf16.msra.mxu0 0
        %970 = vmatprep.mubr.bf16.mxu0 0
        %971 = vmatmul.mubr.bf16.gmra.mrb[0].mxu0 %v933
        %v972 = vpop.f32.mrb[0].mxu0
        %v973 = vadd.f32 %v927, %v972
        %v974 = vpop.f32.mrb[0].mxu0
        %v975 = vpop.f32.mrb[0].mxu0
        %v976 = vpop.f32.mrb[0].mxu0
        %977 = vdwg.mxu0
        %978 = vrot.lane.b32.xlu0 %v660, 112
        %v979 = vpop.permute.xlu0 %978
        %980 = vrot.lane.b32.xlu0 %v661, 112
        %v981 = vpop.permute.xlu0 %980
        %v983 = vsel %vm662, %v979, 0
        %v986 = vsel %vm662, %v981, 0
        %988 = vmatprep.subr.bf16.mxu0 0
        %989 = vmatpush1.bf16.xpose.msra.mxu0 %v986
        %990 = vmatprep.subr.bf16.mxu0 0
        %991 = vmatpush1.bf16.xpose.msra.mxu0 0
        %992 = vmatprep.subr.bf16.mxu0 0
        %993 = vmatpush1.bf16.xpose.msra.mxu0 0
        %994 = vmatprep.subr.bf16.mxu0 0
        %995 = vmatpush1.bf16.xpose.msra.mxu0 0
        %996 = vmatprep.subr.bf16.mxu0 0
        %997 = vmatpush1.bf16.xpose.msra.mxu0 0
        %998 = vmatprep.subr.bf16.mxu0 0
        %999 = vmatpush1.bf16.xpose.msra.mxu0 0
        %1000 = vmatprep.subr.bf16.mxu0 0
        %1001 = vmatpush1.bf16.xpose.msra.mxu0 0
        %1002 = vmatprep.subr.bf16.mxu0 0
        %1003 = vmatpush1.bf16.xpose.msra.mxu0 0
        %1004 = vmatprep.subr.bf16.mxu0 0
        %1005 = vmatpush1.bf16.xpose.msra.mxu0 0
        %1006 = vmatprep.subr.bf16.mxu0 0
        %1007 = vmatpush1.bf16.xpose.msra.mxu0 0
        %1008 = vmatprep.subr.bf16.mxu0 0
        %1009 = vmatpush1.bf16.xpose.msra.mxu0 0
        %1010 = vmatprep.subr.bf16.mxu0 0
        %1011 = vmatpush1.bf16.xpose.msra.mxu0 0
        %1012 = vmatprep.subr.bf16.mxu0 0
        %1013 = vmatpush1.bf16.xpose.msra.mxu0 0
        %1014 = vmatprep.subr.bf16.mxu0 0
        %1015 = vmatpush1.bf16.xpose.msra.mxu0 0
        %1016 = vmatprep.subr.bf16.mxu0 0
        %1017 = vmatpush1.bf16.xpose.msra.mxu0 0
        %1018 = vmatprep.subr.bf16.mxu0 0
        %1019 = vmatpush1.bf16.xpose.msra.mxu0 0
        %1020 = vmatprep.mubr.bf16.mxu0 0
        %1021 = vmatmul.mubr.bf16.gmra.mrb[0].mxu0 %v983
        %v1022 = vpop.f32.mrb[0].mxu0
        %v1023 = vadd.f32 0.0, %v1022
        %v1024 = vpop.f32.mrb[0].mxu0
        %v1025 = vpop.f32.mrb[0].mxu0
        %v1026 = vpop.f32.mrb[0].mxu0
        %1027 = vdwg.mxu0
        %v1028 = vmul.f32 %v1023, 0.35355338
        %v1029 = vsel %vm662, %v1028, -inf
        %1030 = vmax.xlane.f32.xlu0 %v1029
        %v1031 = vpop.xlane.xlu0 %1030
        %v1032 = vsub.f32 %v1028, %v1031
        %v1033 = vmul.f32 %v1032, 1.442695
        %v1034 = vpow.pop %v1033
        %v1035 = vsel %vm662, %v1034, 0.0
        %1036 = vadd.xlane.f32.xlu0 %v1035
        %v1037 = vpop.xlane.xlu0 %1036
        %v1038 = vrcp.pop %v1037
        %v1039 = vmul.f32 %v1034, %v1038
        %v1040 = vpack.c.bf16 %v1039, %v1039
        %1041 = vrot.lane.b32.xlu0 %v661, 80
        %v1042 = vpop.permute.xlu0 %1041
        %v1044 = vsel %vm662, %v1040, 0
        %v1047 = vsel %vm728, %v1042, 0
        %1049 = vmatprep.subr.bf16.mxu0 0
        %1050 = vmatpush1.bf16.msra.mxu0 %v1047
        %1051 = vmatprep.subr.bf16.mxu0 0
        %1052 = vmatpush1.bf16.msra.mxu0 0
        %1053 = vmatprep.subr.bf16.mxu0 0
        %1054 = vmatpush1.bf16.msra.mxu0 0
        %1055 = vmatprep.subr.bf16.mxu0 0
        %1056 = vmatpush1.bf16.msra.mxu0 0
        %1057 = vmatprep.subr.bf16.mxu0 0
        %1058 = vmatpush1.bf16.msra.mxu0 0
        %1059 = vmatprep.subr.bf16.mxu0 0
        %1060 = vmatpush1.bf16.msra.mxu0 0
        %1061 = vmatprep.subr.bf16.mxu0 0
        %1062 = vmatpush1.bf16.msra.mxu0 0
        %1063 = vmatprep.subr.bf16.mxu0 0
        %1064 = vmatpush1.bf16.msra.mxu0 0
        %1065 = vmatprep.subr.bf16.mxu0 0
        %1066 = vmatpush1.bf16.msra.mxu0 0
        %1067 = vmatprep.subr.bf16.mxu0 0
        %1068 = vmatpush1.bf16.msra.mxu0 0
        %1069 = vmatprep.subr.bf16.mxu0 0
        %1070 = vmatpush1.bf16.msra.mxu0 0
        %1071 = vmatprep.subr.bf16.mxu0 0
        %1072 = vmatpush1.bf16.msra.mxu0 0
        %1073 = vmatprep.subr.bf16.mxu0 0
        %1074 = vmatpush1.bf16.msra.mxu0 0
        %1075 = vmatprep.subr.bf16.mxu0 0
        %1076 = vmatpush1.bf16.msra.mxu0 0
        %1077 = vmatprep.subr.bf16.mxu0 0
        %1078 = vmatpush1.bf16.msra.mxu0 0
        %1079 = vmatprep.subr.bf16.mxu0 0
        %1080 = vmatpush1.bf16.msra.mxu0 0
        %1081 = vmatprep.mubr.bf16.mxu0 0
        %1082 = vmatmul.mubr.bf16.gmra.mrb[0].mxu0 %v1044
        %v1083 = vpop.f32.mrb[0].mxu0
        %v1084 = vadd.f32 0.0, %v1083
        %v1085 = vpop.f32.mrb[0].mxu0
        %v1086 = vpop.f32.mrb[0].mxu0
        %v1087 = vpop.f32.mrb[0].mxu0
        %1088 = vdwg.mxu0
        %v1089 = vpack.c.bf16 %v1084, %v1084
        %v1091 = vsel %vm662, %v1089, 0
        %v1094 = vsel %vm728, %v658, 0
        %1096 = vmatprep.subr.bf16.mxu0 0
        %1097 = vmatpush1.bf16.msra.mxu0 %v1094
        %1098 = vmatprep.subr.bf16.mxu0 0
        %1099 = vmatpush1.bf16.msra.mxu0 0
        %1100 = vmatprep.subr.bf16.mxu0 0
        %1101 = vmatpush1.bf16.msra.mxu0 0
        %1102 = vmatprep.subr.bf16.mxu0 0
        %1103 = vmatpush1.bf16.msra.mxu0 0
        %1104 = vmatprep.subr.bf16.mxu0 0
        %1105 = vmatpush1.bf16.msra.mxu0 0
        %1106 = vmatprep.subr.bf16.mxu0 0
        %1107 = vmatpush1.bf16.msra.mxu0 0
        %1108 = vmatprep.subr.bf16.mxu0 0
        %1109 = vmatpush1.bf16.msra.mxu0 0
        %1110 = vmatprep.subr.bf16.mxu0 0
        %1111 = vmatpush1.bf16.msra.mxu0 0
        %1112 = vmatprep.subr.bf16.mxu0 0
        %1113 = vmatpush1.bf16.msra.mxu0 0
        %1114 = vmatprep.subr.bf16.mxu0 0
        %1115 = vmatpush1.bf16.msra.mxu0 0
        %1116 = vmatprep.subr.bf16.mxu0 0
        %1117 = vmatpush1.bf16.msra.mxu0 0
        %1118 = vmatprep.subr.bf16.mxu0 0
        %1119 = vmatpush1.bf16.msra.mxu0 0
        %1120 = vmatprep.subr.bf16.mxu0 0
        %1121 = vmatpush1.bf16.msra.mxu0 0
        %1122 = vmatprep.subr.bf16.mxu0 0
        %1123 = vmatpush1.bf16.msra.mxu0 0
        %1124 = vmatprep.subr.bf16.mxu0 0
        %1125 = vmatpush1.bf16.msra.mxu0 0
        %1126 = vmatprep.subr.bf16.mxu0 0
        %1127 = vmatpush1.bf16.msra.mxu0 0
        %1128 = vmatprep.mubr.bf16.mxu0 0
        %1129 = vmatmul.mubr.bf16.gmra.mrb[0].mxu0 %v1091
        %v1130 = vpop.f32.mrb[0].mxu0
        %v1131 = vadd.f32 0.0, %v1130
        %v1132 = vpop.f32.mrb[0].mxu0
        %v1133 = vpop.f32.mrb[0].mxu0
        %v1134 = vpop.f32.mrb[0].mxu0
        %1135 = vdwg.mxu0
        %v1136 = vadd.f32 %v973, %v1131
        %1137 = vrot.lane.b32.xlu0 %v660, 104
        %v1138 = vpop.permute.xlu0 %1137
        %1139 = vrot.lane.b32.xlu0 %v661, 104
        %v1140 = vpop.permute.xlu0 %1139
        %v1142 = vsel %vm662, %v1138, 0
        %v1145 = vsel %vm662, %v1140, 0
        %1147 = vmatprep.subr.bf16.mxu0 0
        %1148 = vmatpush1.bf16.xpose.msra.mxu0 %v1145
        %1149 = vmatprep.subr.bf16.mxu0 0
        %1150 = vmatpush1.bf16.xpose.msra.mxu0 0
        %1151 = vmatprep.subr.bf16.mxu0 0
        %1152 = vmatpush1.bf16.xpose.msra.mxu0 0
        %1153 = vmatprep.subr.bf16.mxu0 0
        %1154 = vmatpush1.bf16.xpose.msra.mxu0 0
        %1155 = vmatprep.subr.bf16.mxu0 0
        %1156 = vmatpush1.bf16.xpose.msra.mxu0 0
        %1157 = vmatprep.subr.bf16.mxu0 0
        %1158 = vmatpush1.bf16.xpose.msra.mxu0 0
        %1159 = vmatprep.subr.bf16.mxu0 0
        %1160 = vmatpush1.bf16.xpose.msra.mxu0 0
        %1161 = vmatprep.subr.bf16.mxu0 0
        %1162 = vmatpush1.bf16.xpose.msra.mxu0 0
        %1163 = vmatprep.subr.bf16.mxu0 0
        %1164 = vmatpush1.bf16.xpose.msra.mxu0 0
        %1165 = vmatprep.subr.bf16.mxu0 0
        %1166 = vmatpush1.bf16.xpose.msra.mxu0 0
        %1167 = vmatprep.subr.bf16.mxu0 0
        %1168 = vmatpush1.bf16.xpose.msra.mxu0 0
        %1169 = vmatprep.subr.bf16.mxu0 0
        %1170 = vmatpush1.bf16.xpose.msra.mxu0 0
        %1171 = vmatprep.subr.bf16.mxu0 0
        %1172 = vmatpush1.bf16.xpose.msra.mxu0 0
        %1173 = vmatprep.subr.bf16.mxu0 0
        %1174 = vmatpush1.bf16.xpose.msra.mxu0 0
        %1175 = vmatprep.subr.bf16.mxu0 0
        %1176 = vmatpush1.bf16.xpose.msra.mxu0 0
        %1177 = vmatprep.subr.bf16.mxu0 0
        %1178 = vmatpush1.bf16.xpose.msra.mxu0 0
        %1179 = vmatprep.mubr.bf16.mxu0 0
        %1180 = vmatmul.mubr.bf16.gmra.mrb[0].mxu0 %v1142
        %v1181 = vpop.f32.mrb[0].mxu0
        %v1182 = vadd.f32 0.0, %v1181
        %v1183 = vpop.f32.mrb[0].mxu0
        %v1184 = vpop.f32.mrb[0].mxu0
        %v1185 = vpop.f32.mrb[0].mxu0
        %1186 = vdwg.mxu0
        %v1187 = vmul.f32 %v1182, 0.35355338
        %v1188 = vsel %vm662, %v1187, -inf
        %1189 = vmax.xlane.f32.xlu0 %v1188
        %v1190 = vpop.xlane.xlu0 %1189
        %v1191 = vsub.f32 %v1187, %v1190
        %v1192 = vmul.f32 %v1191, 1.442695
        %v1193 = vpow.pop %v1192
        %v1194 = vsel %vm662, %v1193, 0.0
        %1195 = vadd.xlane.f32.xlu0 %v1194
        %v1196 = vpop.xlane.xlu0 %1195
        %v1197 = vrcp.pop %v1196
        %v1198 = vmul.f32 %v1193, %v1197
        %v1199 = vpack.c.bf16 %v1198, %v1198
        %1200 = vrot.lane.b32.xlu0 %v661, 72
        %v1201 = vpop.permute.xlu0 %1200
        %v1203 = vsel %vm662, %v1199, 0
        %v1206 = vsel %vm728, %v1201, 0
        %1208 = vmatprep.subr.bf16.mxu0 0
        %1209 = vmatpush1.bf16.msra.mxu0 %v1206
        %1210 = vmatprep.subr.bf16.mxu0 0
        %1211 = vmatpush1.bf16.msra.mxu0 0
        %1212 = vmatprep.subr.bf16.mxu0 0
        %1213 = vmatpush1.bf16.msra.mxu0 0
        %1214 = vmatprep.subr.bf16.mxu0 0
        %1215 = vmatpush1.bf16.msra.mxu0 0
        %1216 = vmatprep.subr.bf16.mxu0 0
        %1217 = vmatpush1.bf16.msra.mxu0 0
        %1218 = vmatprep.subr.bf16.mxu0 0
        %1219 = vmatpush1.bf16.msra.mxu0 0
        %1220 = vmatprep.subr.bf16.mxu0 0
        %1221 = vmatpush1.bf16.msra.mxu0 0
        %1222 = vmatprep.subr.bf16.mxu0 0
        %1223 = vmatpush1.bf16.msra.mxu0 0
        %1224 = vmatprep.subr.bf16.mxu0 0
        %1225 = vmatpush1.bf16.msra.mxu0 0
        %1226 = vmatprep.subr.bf16.mxu0 0
        %1227 = vmatpush1.bf16.msra.mxu0 0
        %1228 = vmatprep.subr.bf16.mxu0 0
        %1229 = vmatpush1.bf16.msra.mxu0 0
        %1230 = vmatprep.subr.bf16.mxu0 0
        %1231 = vmatpush1.bf16.msra.mxu0 0
        %1232 = vmatprep.subr.bf16.mxu0 0
        %1233 = vmatpush1.bf16.msra.mxu0 0
        %1234 = vmatprep.subr.bf16.mxu0 0
        %1235 = vmatpush1.bf16.msra.mxu0 0
        %1236 = vmatprep.subr.bf16.mxu0 0
        %1237 = vmatpush1.bf16.msra.mxu0 0
        %1238 = vmatprep.subr.bf16.mxu0 0
        %1239 = vmatpush1.bf16.msra.mxu0 0
        %1240 = vmatprep.mubr.bf16.mxu0 0
        %1241 = vmatmul.mubr.bf16.gmra.mrb[0].mxu0 %v1203
        %v1242 = vpop.f32.mrb[0].mxu0
        %v1243 = vadd.f32 0.0, %v1242
        %v1244 = vpop.f32.mrb[0].mxu0
        %v1245 = vpop.f32.mrb[0].mxu0
        %v1246 = vpop.f32.mrb[0].mxu0
        %1247 = vdwg.mxu0
        %v1248 = vpack.c.bf16 %v1243, %v1243
        %v1250 = vsel %vm662, %v1248, 0
        %v1253 = vsel %vm728, %v659, 0
        %1255 = vmatprep.subr.bf16.mxu0 0
        %1256 = vmatpush1.bf16.msra.mxu0 %v1253
        %1257 = vmatprep.subr.bf16.mxu0 0
        %1258 = vmatpush1.bf16.msra.mxu0 0
        %1259 = vmatprep.subr.bf16.mxu0 0
        %1260 = vmatpush1.bf16.msra.mxu0 0
        %1261 = vmatprep.subr.bf16.mxu0 0
        %1262 = vmatpush1.bf16.msra.mxu0 0
        %1263 = vmatprep.subr.bf16.mxu0 0
        %1264 = vmatpush1.bf16.msra.mxu0 0
        %1265 = vmatprep.subr.bf16.mxu0 0
        %1266 = vmatpush1.bf16.msra.mxu0 0
        %1267 = vmatprep.subr.bf16.mxu0 0
        %1268 = vmatpush1.bf16.msra.mxu0 0
        %1269 = vmatprep.subr.bf16.mxu0 0
        %1270 = vmatpush1.bf16.msra.mxu0 0
        %1271 = vmatprep.subr.bf16.mxu0 0
        %1272 = vmatpush1.bf16.msra.mxu0 0
        %1273 = vmatprep.subr.bf16.mxu0 0
        %1274 = vmatpush1.bf16.msra.mxu0 0
        %1275 = vmatprep.subr.bf16.mxu0 0
        %1276 = vmatpush1.bf16.msra.mxu0 0
        %1277 = vmatprep.subr.bf16.mxu0 0
        %1278 = vmatpush1.bf16.msra.mxu0 0
        %1279 = vmatprep.subr.bf16.mxu0 0
        %1280 = vmatpush1.bf16.msra.mxu0 0
        %1281 = vmatprep.subr.bf16.mxu0 0
        %1282 = vmatpush1.bf16.msra.mxu0 0
        %1283 = vmatprep.subr.bf16.mxu0 0
        %1284 = vmatpush1.bf16.msra.mxu0 0
        %1285 = vmatprep.subr.bf16.mxu0 0
        %1286 = vmatpush1.bf16.msra.mxu0 0
        %1287 = vmatprep.mubr.bf16.mxu0 0
        %1288 = vmatmul.mubr.bf16.gmra.mrb[0].mxu0 %v1250
        %v1289 = vpop.f32.mrb[0].mxu0
        %v1290 = vadd.f32 0.0, %v1289
        %v1291 = vpop.f32.mrb[0].mxu0
        %v1292 = vpop.f32.mrb[0].mxu0
        %v1293 = vpop.f32.mrb[0].mxu0
        %1294 = vdwg.mxu0
        %v1295 = vadd.f32 %v1136, %v1290
        %v1296 = vld [vmem:[#allocation14] sm:$0x1]
        %v1298 = vlaneseq
        %v1299 = vshrl.u32 %v1298, 7
        %v1300 = vsub.s32 0, %v1299
        %v1301 = vrot.slane %v1296, %v1300
        %v1303 = vadd.f32 %v1295, %v1301
        %v1304 = vadd.f32 %v1303, %v519
        %v1305 = vld [vmem:[#allocation16] sm:$0x1]
        %v1306 = vld [vmem:[#allocation17] sm:$0x1]
        %v1307 = vsel %vm545, %v1304, 0.0
        %1308 = vadd.xlane.f32.xlu0 %v1307
        %v1309 = vpop.xlane.xlu0 %1308
        %v1310 = vrcp.pop 32.0
        %v1311 = vmul.f32 %v1309, %v1310
        %v1312 = vsub.f32 %v1304, %v1311
        %v1313 = vmul.f32 %v1312, %v1312
        %v1314 = vsel %vm545, %v1313, 0.0
        %1315 = vadd.xlane.f32.xlu0 %v1314
        %v1316 = vpop.xlane.xlu0 %1315
        %v1317 = vmul.f32 %v1316, %v1310
        %v1318 = vadd.f32 %v1317, 1e-05
        %v1319 = vrsqrt.pop %v1318
        %v1320 = vmul.f32 %v1312, %v1319
        %v1322 = vlaneseq
        %v1323 = vshrl.u32 %v1322, 7
        %v1324 = vsub.s32 0, %v1323
        %v1325 = vrot.slane %v1305, %v1324
        %v1327 = vmul.f32 %v1320, %v1325
        %v1329 = vlaneseq
        %v1330 = vshrl.u32 %v1329, 7
        %v1331 = vsub.s32 0, %v1330
        %v1332 = vrot.slane %v1306, %v1331
        %v1334 = vadd.f32 %v1327, %v1332
        %1335 = vst.msk [vmem:[%s517] sm:$0xff] %vm545, %v1334
        %s1336 = sand.u32 %s262, 1
        %s1337 = scalar_lea.sflag [#allocation4], %s1336
        %s1338 = sand.u32 %s262, 1
        %s1339 = smul.addr %s1338, 8
        %s1340 = scalar_lea.vmem [#allocation19], %s1339
        // Predicated region
        $region101: #{decoder_forward.10} parent=59 // pred_check
          %p1341 = pneg %p272
        $region102: #{decoder_forward.10} parent=59 // pred_check_branch
          %1343 = sbr.rel (%p1341) target = $region104
        $region103: #{decoder_forward.10} parent=59 // pred_region
          %s1345 = ssub.s32 128, 128
          %1346 = vsyncadd %s1337, %s1345
          %s1347 = smul.addr %s34, 128
          %s1348 = scalar_lea.hbm %s10, %s1347
          %s1350 = sshll.u32 %s1340, 4
          %s1351 = int_to_ptr.vmem [resolvable:$true] %s1350
          %1353 = dma.vmem_to_hbm [thread:$0]  %s1351, 128, %s1348, %s1337
        $region104: #{decoder_forward.10} parent=59 // pred_fallthru
          _
      $region60: #{decoder_forward.10} parent=5 // pred_fallthru
        _
      %p1354 = scmp.le.s32.totalorder 2, %s29
      // Predicated region
      $region105: #{decoder_forward.10} parent=5 // pred_check
        %p1355 = pneg %p1354
      $region106: #{decoder_forward.10} parent=5 // pred_check_branch
        %1357 = sbr.rel (%p1355) target = $region108
      $region107: #{decoder_forward.10} parent=5 // pred_region
        %s1358 = ssub.s32 %s29, 2
        // Predicated region
        $region109: #{decoder_forward.10} parent=107 // pred_check
          %p1359 = pneg %p278
        $region110: #{decoder_forward.10} parent=107 // pred_check_branch
          %1361 = sbr.rel (%p1359) target = $region112
        $region111: #{decoder_forward.10} parent=107 // pred_region
          %s1362 = sand.u32 %s263, 1
          %s1363 = scalar_lea.sflag [#allocation4], %s1362
          %s1364 = sand.u32 %s263, 1
          %s1365 = smul.addr %s1364, 8
          %s1366 = scalar_lea.vmem [#allocation19], %s1365
          %1367 = dma.done %s1363, 128
        $region112: #{decoder_forward.10} parent=107 // pred_fallthru
          _
      $region108: #{decoder_forward.10} parent=5 // pred_fallthru
        _
    $region6: #{decoder_forward.10} parent=1 // loop_footer
      %s33 = sadd.s32 1, %s29
    $region7: #{decoder_forward.10} parent=1 // loop_footer_branch
      %28 = sbr.rel target = $region3
    $region8: #{decoder_forward.10} parent=1 // loop_exit
      _
    %1368 = vsyncpa [#allocation3], 1
    %s1369 = scalar_lea.sflag [#allocation3], 1
    %1370 = vsyncpa %s1369, 1
    %1371 = vsyncpa [#allocation6], 1
    %s1372 = scalar_lea.sflag [#allocation6], 1
    %1373 = vsyncpa %s1372, 1
    %1374 = vsyncpa [#allocation9], 1
    %1375 = vsyncpa [#allocation12], 1
    %1376 = vsyncpa [#allocation15], 1
    %1377 = vsyncpa [#allocation18], 1
    %1378 = vsyncpa [#allocation4], 1
    %s1379 = scalar_lea.sflag [#allocation4], 1
    %1380 = vsyncpa %s1379, 1

// kernel: decoder_forward.17
$region0: #{decoder_forward.17}
  #allocation0 [shape = 'u32[]', space=smem, size = 0x4, offset = 0x4, fixed_abs, tag = 'smem constant byte address 0x4 - core index']
  #allocation1 [shape = 'u32[144,128]{1,0:T(1,128)}', space=vmem, size = 0x12000, scoped, tag = 'internal scratch']
  %s0 = inlined_call_operand.hbm [shape: f32[16,32], index: 0, kind: input, shape index: {}]
  %s1 = inlined_call_operand.hbm [shape: bf16[32,128], index: 1, kind: input, shape index: {}]
  %s2 = inlined_call_operand.hbm [shape: f32[1,128], index: 2, kind: input, shape index: {}]
  %s3 = inlined_call_operand.hbm [shape: f32[16,128], index: 3, kind: output, shape index: {}]
  %s4 = sld [smem:[#allocation0]]
  $region42: #{decoder_forward.17} parent=0
    _
  %s6 = ssub.s32 1, %s4
  %s7 = scalar_select 0, %s6, %s4
  $region1: #{decoder_forward.17} parent=0
    #allocation2 [shape = 'u8[8192]{0}', space=vmem, size = 0x2000, scoped, tag = 'input window, operand 0, single buffered']
    #allocation3 [shape = 's32[1]{0}', space=sflag, size = 0x4, scoped, tag = 'scoped memory for decoder_forward.17']
    #allocation4 [shape = 's32[1]{0}', space=sflag, size = 0x4, scoped, tag = 'scoped memory for decoder_forward.17']
    #allocation5 [shape = 'u8[8192]{0}', space=vmem, size = 0x2000, scoped, tag = 'input window, operand 1, single buffered']
    #allocation6 [shape = 's32[1]{0}', space=sflag, size = 0x4, scoped, tag = 'scoped memory for decoder_forward.17']
    #allocation7 [shape = 'u8[512]{0}', space=vmem, size = 0x400, scoped, tag = 'input window, operand 2, single buffered']
    #allocation8 [shape = 'u8[8192]{0}', space=vmem, size = 0x2000, scoped, tag = 'output window, operand 0, single buffered']
    %8 = vsyncpa [#allocation3], 0
    %9 = vsyncpa [#allocation6], 0
    %10 = vsyncpa [#allocation4], 0
    // Predicated region
    $region2: #{decoder_forward.17} parent=1 // pred_check
      _
    $region3: #{decoder_forward.17} parent=1 // pred_check_branch
      %12 = sbr.rel (0) target = $region5
    $region4: #{decoder_forward.17} parent=1 // pred_region
      %s14 = ssub.s32 256, 256
      %15 = vsyncadd [#allocation3], %s14
      %s16 = sshll.u32 [#allocation2], 4
      %s17 = int_to_ptr.vmem [resolvable:$true] %s16
      %22 = dma.hbm_to_vmem [thread:$0]  %s0, 256, %s17, [#allocation3], 128, 128, 8
    $region5: #{decoder_forward.17} parent=1 // pred_fallthru
      _
    // Predicated region
    $region6: #{decoder_forward.17} parent=1 // pred_check
      _
    $region7: #{decoder_forward.17} parent=1 // pred_check_branch
      %24 = sbr.rel (0) target = $region9
    $region8: #{decoder_forward.17} parent=1 // pred_region
      %s26 = ssub.s32 256, 256
      %27 = vsyncadd [#allocation6], %s26
      %s28 = sshll.u32 [#allocation5], 4
      %s29 = int_to_ptr.vmem [resolvable:$true] %s28
      %34 = dma.hbm_to_vmem [thread:$0]  %s1, 256, %s29, [#allocation6], 64, 64, 4
    $region9: #{decoder_forward.17} parent=1 // pred_fallthru
      _
    // Predicated region
    $region10: #{decoder_forward.17} parent=1 // pred_check
      _
    $region11: #{decoder_forward.17} parent=1 // pred_check_branch
      %36 = sbr.rel (0) target = $region13
    $region12: #{decoder_forward.17} parent=1 // pred_region
      %s38 = ssub.s32 16, 16
      %39 = vsyncadd [#allocation6], %s38
      %s41 = sshll.u32 [#allocation7], 4
      %s42 = int_to_ptr.vmem [resolvable:$true] %s41
      %44 = dma.hbm_to_vmem [thread:$0]  %s2, 16, %s42, [#allocation6]
    $region13: #{decoder_forward.17} parent=1 // pred_fallthru
      _
    // Predicated region
    $region14: #{decoder_forward.17} parent=1 // pred_check
      _
    $region15: #{decoder_forward.17} parent=1 // pred_check_branch
      %46 = sbr.rel (0) target = $region17
    $region16: #{decoder_forward.17} parent=1 // pred_region
      %47 = dma.done [#allocation3], 256
    $region17: #{decoder_forward.17} parent=1 // pred_fallthru
      _
    // Predicated region
    $region18: #{decoder_forward.17} parent=1 // pred_check
      _
    $region19: #{decoder_forward.17} parent=1 // pred_check_branch
      %49 = sbr.rel (0) target = $region21
    $region20: #{decoder_forward.17} parent=1 // pred_region
      %50 = dma.done [#allocation6], 256
    $region21: #{decoder_forward.17} parent=1 // pred_fallthru
      _
    // Predicated region
    $region22: #{decoder_forward.17} parent=1 // pred_check
      _
    $region23: #{decoder_forward.17} parent=1 // pred_check_branch
      %52 = sbr.rel (0) target = $region25
    $region24: #{decoder_forward.17} parent=1 // pred_region
      %53 = dma.done [#allocation6], 16
    $region25: #{decoder_forward.17} parent=1 // pred_fallthru
      _
    %p55 = scmp.eq.s32.totalorder 0, 0
    // Predicated region
    $region26: #{decoder_forward.17} parent=1 // pred_check
      %p56 = pneg %p55
    $region27: #{decoder_forward.17} parent=1 // pred_check_branch
      %58 = sbr.rel (%p56) target = $region29
    $region28: #{decoder_forward.17} parent=1 // pred_region
      %59 = vst [vmem:[#allocation8] sm:$0xff] 0.0
      %60 = vst [vmem:[#allocation8 + $0x8] sm:$0xff] 0.0
    $region29: #{decoder_forward.17} parent=1 // pred_fallthru
      _
    %v61 = vld [vmem:[#allocation8] sm:$0xff]
    %v62 = vld [vmem:[#allocation8 + $0x8] sm:$0xff]
    %v63 = vld [vmem:[#allocation2] sm:$0xff]
    %v64 = vld [vmem:[#allocation2 + $0x8] sm:$0xff]
    %v65 = vpack.c.bf16 %v64, %v63
    %v66 = vld [vmem:[#allocation5] sm:$0xf]
    %v67 = vld [vmem:[#allocation5 + $0x4] sm:$0xf]
    %v68 = vld [vmem:[#allocation5 + $0x8] sm:$0xf]
    %v69 = vld [vmem:[#allocation5 + $0xc] sm:$0xf]
    %v74 = vunpack.c.l.b16 %v66
    %v75 = vunpack.c.l.b16 %v67
    %v76 = vunpack.c.l.b16 %v68
    %v77 = vunpack.c.l.b16 %v69
    %v78 = vpack.c.b16 %v75, %v74
    %v79 = vpack.c.b16 %v77, %v76
    %vm82 = vcmask 261120
    %v84 = vsel %vm82, %v65, 0
    %86 = vmatprep.subr.bf16.mxu0 0
    %87 = vmatpush1.bf16.msra.mxu0 %v78
    %88 = vmatprep.subr.bf16.mxu0 0
    %89 = vmatpush1.bf16.msra.mxu0 %v79
    %90 = vmatprep.subr.bf16.mxu0 0
    %91 = vmatpush1.bf16.msra.mxu0 0
    %92 = vmatprep.subr.bf16.mxu0 0
    %93 = vmatpush1.bf16.msra.mxu0 0
    %94 = vmatprep.subr.bf16.mxu0 0
    %95 = vmatpush1.bf16.msra.mxu0 0
    %96 = vmatprep.subr.bf16.mxu0 0
    %97 = vmatpush1.bf16.msra.mxu0 0
    %98 = vmatprep.subr.bf16.mxu0 0
    %99 = vmatpush1.bf16.msra.mxu0 0
    %100 = vmatprep.subr.bf16.mxu0 0
    %101 = vmatpush1.bf16.msra.mxu0 0
    %102 = vmatprep.subr.bf16.mxu0 0
    %103 = vmatpush1.bf16.msra.mxu0 0
    %104 = vmatprep.subr.bf16.mxu0 0
    %105 = vmatpush1.bf16.msra.mxu0 0
    %106 = vmatprep.subr.bf16.mxu0 0
    %107 = vmatpush1.bf16.msra.mxu0 0
    %108 = vmatprep.subr.bf16.mxu0 0
    %109 = vmatpush1.bf16.msra.mxu0 0
    %110 = vmatprep.subr.bf16.mxu0 0
    %111 = vmatpush1.bf16.msra.mxu0 0
    %112 = vmatprep.subr.bf16.mxu0 0
    %113 = vmatpush1.bf16.msra.mxu0 0
    %114 = vmatprep.subr.bf16.mxu0 0
    %115 = vmatpush1.bf16.msra.mxu0 0
    %116 = vmatprep.subr.bf16.mxu0 0
    %117 = vmatpush1.bf16.msra.mxu0 0
    %118 = vmatprep.mubr.bf16.mxu0 0
    %119 = vmatmul.mubr.bf16.gmra.mrb[0].mxu0 %v84
    %v120 = vpop.f32.mrb[0].mxu0
    %v121 = vadd.f32 0.0, %v120
    %v122 = vpop.f32.mrb[0].mxu0
    %v123 = vpop.f32.mrb[0].mxu0
    %v124 = vadd.f32 0.0, %v123
    %v125 = vpop.f32.mrb[0].mxu0
    %126 = vdwg.mxu0
    %v127 = vadd.f32 %v61, %v121
    %v128 = vadd.f32 %v62, %v124
    %129 = vst [vmem:[#allocation8] sm:$0xff] %v127
    %130 = vst [vmem:[#allocation8 + $0x8] sm:$0xff] %v128
    // Predicated region
    $region30: #{decoder_forward.17} parent=1 // pred_check
      %p131 = pneg %p55
    $region31: #{decoder_forward.17} parent=1 // pred_check_branch
      %133 = sbr.rel (%p131) target = $region33
    $region32: #{decoder_forward.17} parent=1 // pred_region
      %v134 = vld [vmem:[#allocation8] sm:$0xff]
      %v135 = vld [vmem:[#allocation8 + $0x8] sm:$0xff]
      %v136 = vld [vmem:[#allocation7] sm:$0x1]
      %v138 = vlaneseq
      %v139 = vshrl.u32 %v138, 7
      %v140 = vsub.s32 0, %v139
      %v141 = vrot.slane %v136, %v140
      %v143 = vadd.f32 %v134, %v141
      %v144 = vadd.f32 %v135, %v141
      %145 = vst [vmem:[#allocation8] sm:$0xff] %v143
      %146 = vst [vmem:[#allocation8 + $0x8] sm:$0xff] %v144
    $region33: #{decoder_forward.17} parent=1 // pred_fallthru
      _
    // Predicated region
    $region34: #{decoder_forward.17} parent=1 // pred_check
      _
    $region35: #{decoder_forward.17} parent=1 // pred_check_branch
      %148 = sbr.rel (0) target = $region37
    $region36: #{decoder_forward.17} parent=1 // pred_region
      %s150 = ssub.s32 256, 256
      %151 = vsyncadd [#allocation4], %s150
      %s152 = sshll.u32 [#allocation8], 4
      %s153 = int_to_ptr.vmem [resolvable:$true] %s152
      %158 = dma.vmem_to_hbm [thread:$0]  %s153, 256, %s3, [#allocation4], 128, 128, 8
    $region37: #{decoder_forward.17} parent=1 // pred_fallthru
      _
    // Predicated region
    $region38: #{decoder_forward.17} parent=1 // pred_check
      _
    $region39: #{decoder_forward.17} parent=1 // pred_check_branch
      %160 = sbr.rel (0) target = $region41
    $region40: #{decoder_forward.17} parent=1 // pred_region
      %161 = dma.done [#allocation4], 256
    $region41: #{decoder_forward.17} parent=1 // pred_fallthru
      _
    %162 = vsyncpa [#allocation3], 1
    %163 = vsyncpa [#allocation6], 1
    %164 = vsyncpa [#allocation4], 1

// kernel: decoder_forward.12
$region0: #{decoder_forward.12}
  #allocation0 [shape = 'u32[]', space=smem, size = 0x4, offset = 0x4, fixed_abs, tag = 'smem constant byte address 0x4 - core index']
  #allocation1 [shape = 'u32[144,128]{1,0:T(1,128)}', space=vmem, size = 0x12000, scoped, tag = 'internal scratch']
  %s0 = inlined_call_operand.hbm [shape: bf16[16,2048], index: 0, kind: input, shape index: {}]
  %s1 = inlined_call_operand.hbm [shape: bf16[2048,32], index: 1, kind: input, shape index: {}]
  %s2 = inlined_call_operand.hbm [shape: f32[1,32], index: 2, kind: input, shape index: {}]
  %s3 = inlined_call_operand.hbm [shape: f32[16,32], index: 3, kind: input, shape index: {}]
  %s4 = inlined_call_operand.hbm [shape: f32[1,32], index: 4, kind: input, shape index: {}]
  %s5 = inlined_call_operand.hbm [shape: f32[1,32], index: 5, kind: input, shape index: {}]
  %s6 = inlined_call_operand.hbm [shape: f32[16,32], index: 6, kind: output, shape index: {}]
  %s7 = sld [smem:[#allocation0]]
  $region89: #{decoder_forward.12} parent=0
    _
  %s9 = ssub.s32 1, %s7
  %s10 = scalar_select 0, %s9, %s7
  $region1: #{decoder_forward.12} parent=0
    #allocation2 [shape = 'u8[65536]{0}', space=vmem, size = 0x10000, scoped, tag = 'input window, operand 0']
    #allocation3 [shape = 's32[2]{0}', space=sflag, size = 0x8, scoped, tag = 'scoped memory for decoder_forward.12']
    #allocation4 [shape = 's32[2]{0}', space=sflag, size = 0x8, scoped, tag = 'scoped memory for decoder_forward.12']
    #allocation5 [shape = 'u8[524288]{0}', space=vmem, size = 0x80000, scoped, tag = 'input window, operand 1']
    #allocation6 [shape = 's32[2]{0}', space=sflag, size = 0x8, scoped, tag = 'scoped memory for decoder_forward.12']
    #allocation7 [shape = 'u8[512]{0}', space=vmem, size = 0x400, scoped, tag = 'input window, operand 2, single buffered']
    #allocation8 [shape = 'u8[8192]{0}', space=vmem, size = 0x2000, scoped, tag = 'input window, operand 3, single buffered']
    #allocation9 [shape = 's32[1]{0}', space=sflag, size = 0x4, scoped, tag = 'scoped memory for decoder_forward.12']
    #allocation10 [shape = 'u8[512]{0}', space=vmem, size = 0x400, scoped, tag = 'input window, operand 4, single buffered']
    #allocation11 [shape = 'u8[512]{0}', space=vmem, size = 0x400, scoped, tag = 'input window, operand 5, single buffered']
    #allocation12 [shape = 's32[1]{0}', space=sflag, size = 0x4, scoped, tag = 'scoped memory for decoder_forward.12']
    #allocation13 [shape = 'u8[8192]{0}', space=vmem, size = 0x2000, scoped, tag = 'output window, operand 0, single buffered']
    %11 = vsyncpa [#allocation3], 0
    %s12 = scalar_lea.sflag [#allocation3], 1
    %13 = vsyncpa %s12, 0
    %14 = vsyncpa [#allocation6], 0
    %s15 = scalar_lea.sflag [#allocation6], 1
    %16 = vsyncpa %s15, 0
    %17 = vsyncpa [#allocation9], 0
    %18 = vsyncpa [#allocation12], 0
    %19 = vsyncpa [#allocation4], 0
    loop: start=0, step=1, limit=4
    $region2: #{decoder_forward.12} parent=1 // loop_pre_header
      _
    $region3: #{decoder_forward.12} parent=1 // loop_header
      %s21 = sphi 0, %s25
      %p22 = scmp.ge.s32.totalorder %s21, 4
      %s28 = sphi 0, %s40
      %s29 = sphi 0, %s36
      %s30 = sphi 0, %s28
      %s31 = sphi 0, %s29
      %s32 = sphi 0, %s30
      %s33 = sphi 0, %s31
      %s45 = sphi 0, %s47
      %s48 = sphi 0, %s45
      %s49 = sphi 0, %s48
      %s65 = sphi 0, %s49
      %s71 = sphi 0, %s73
      %s74 = sphi 0, %s71
      %s75 = sphi 0, %s74
      %s91 = sphi 0, %s75
      %s95 = sphi 0, %s95
      %s97 = sphi 0, %s95
      %s98 = sphi 0, %s97
      %s112 = sphi 0, %s98
      %s118 = sphi 0, %s120
      %s121 = sphi 0, %s118
      %s122 = sphi 0, %s121
      %s138 = sphi 0, %s122
      %s142 = sphi 0, %s142
      %s144 = sphi 0, %s142
      %s145 = sphi 0, %s144
      %s159 = sphi 0, %s145
      %s163 = sphi 0, %s163
      %s165 = sphi 0, %s163
      %s166 = sphi 0, %s165
      %s180 = sphi 0, %s166
      %s186 = sphi 0, %s188
      %s189 = sphi 0, %s186
      %s190 = sphi 0, %s189
      %s206 = sphi 0, %s190
    $region4: #{decoder_forward.12} parent=1 // loop_header_branch
      %24 = sbr.rel (%p22) target = $region8
    $region5: #{decoder_forward.12} parent=1 // loop_body
      %s26 = ssub.s32 %s21, 1
      %s27 = ssub.s32 %s21, 2
      %s34 = sadd.s32 1, %s29
      %p35 = scmp.ge.s32.totalorder %s34, 2
      %s36 = scalar_select %p35, 0, %s34
      %s37 = sadd.s32 1, %s28
      %s38 = scalar_select %p35, %s37, %s28
      %p39 = scmp.ge.s32.totalorder %s38, 1
      %s40 = scalar_select %p39, 0, %s38
      %s41 = ssub.s32 %s28, %s40
      %s42 = ssub.s32 %s29, %s36
      %s43 = sor.u32 %s41, %s42
      %p44 = scmp.eq.s32.totalorder %s43, 0
      %s46 = sadd.s32 %s45, 1
      %s47 = scalar_select %p44, %s45, %s46
      %p50 = pneg %p44
      %p51 = scmp.eq.s32.totalorder %s21, 1
      %p52 = por %p50, %p51
      %p53 = scmp.ne.s32.totalorder %s45, %s48
      %p54 = scmp.eq.s32.totalorder %s21, 0
      %p55 = por %p53, %p54
      %p56 = scmp.ne.s32.totalorder %s45, %s48
      %p57 = scmp.eq.s32.totalorder %s26, 1
      %p58 = por %p56, %p57
      %p59 = scmp.ne.s32.totalorder %s48, %s49
      %p60 = scmp.eq.s32.totalorder %s26, 0
      %p61 = por %p59, %p60
      %p62 = scmp.ne.s32.totalorder %s48, %s49
      %p63 = scmp.eq.s32.totalorder %s27, 1
      %p64 = por %p62, %p63
      %p66 = scmp.ne.s32.totalorder %s49, %s65
      %p67 = scmp.eq.s32.totalorder %s27, 0
      %p68 = por %p66, %p67
      %s69 = ssub.s32 %s29, %s36
      %p70 = scmp.eq.s32.totalorder %s69, 0
      %s72 = sadd.s32 %s71, 1
      %s73 = scalar_select %p70, %s71, %s72
      %p76 = pneg %p70
      %p77 = scmp.eq.s32.totalorder %s21, 1
      %p78 = por %p76, %p77
      %p79 = scmp.ne.s32.totalorder %s71, %s74
      %p80 = scmp.eq.s32.totalorder %s21, 0
      %p81 = por %p79, %p80
      %p82 = scmp.ne.s32.totalorder %s71, %s74
      %p83 = scmp.eq.s32.totalorder %s26, 1
      %p84 = por %p82, %p83
      %p85 = scmp.ne.s32.totalorder %s74, %s75
      %p86 = scmp.eq.s32.totalorder %s26, 0
      %p87 = por %p85, %p86
      %p88 = scmp.ne.s32.totalorder %s74, %s75
      %p89 = scmp.eq.s32.totalorder %s27, 1
      %p90 = por %p88, %p89
      %p92 = scmp.ne.s32.totalorder %s75, %s91
      %p93 = scmp.eq.s32.totalorder %s27, 0
      %p94 = por %p92, %p93
      %s96 = sadd.s32 %s95, 1
      %p99 = scmp.eq.s32.totalorder %s21, 1
      %p100 = scmp.ne.s32.totalorder %s95, %s97
      %p101 = scmp.eq.s32.totalorder %s21, 0
      %p102 = por %p100, %p101
      %p103 = scmp.ne.s32.totalorder %s95, %s97
      %p104 = scmp.eq.s32.totalorder %s26, 1
      %p105 = por %p103, %p104
      %p106 = scmp.ne.s32.totalorder %s97, %s98
      %p107 = scmp.eq.s32.totalorder %s26, 0
      %p108 = por %p106, %p107
      %p109 = scmp.ne.s32.totalorder %s97, %s98
      %p110 = scmp.eq.s32.totalorder %s27, 1
      %p111 = por %p109, %p110
      %p113 = scmp.ne.s32.totalorder %s98, %s112
      %p114 = scmp.eq.s32.totalorder %s27, 0
      %p115 = por %p113, %p114
      %s116 = ssub.s32 %s28, %s40
      %p117 = scmp.eq.s32.totalorder %s116, 0
      %s119 = sadd.s32 %s118, 1
      %s120 = scalar_select %p117, %s118, %s119
      %p123 = pneg %p117
      %p124 = scmp.eq.s32.totalorder %s21, 1
      %p125 = por %p123, %p124
      %p126 = scmp.ne.s32.totalorder %s118, %s121
      %p127 = scmp.eq.s32.totalorder %s21, 0
      %p128 = por %p126, %p127
      %p129 = scmp.ne.s32.totalorder %s118, %s121
      %p130 = scmp.eq.s32.totalorder %s26, 1
      %p131 = por %p129, %p130
      %p132 = scmp.ne.s32.totalorder %s121, %s122
      %p133 = scmp.eq.s32.totalorder %s26, 0
      %p134 = por %p132, %p133
      %p135 = scmp.ne.s32.totalorder %s121, %s122
      %p136 = scmp.eq.s32.totalorder %s27, 1
      %p137 = por %p135, %p136
      %p139 = scmp.ne.s32.totalorder %s122, %s138
      %p140 = scmp.eq.s32.totalorder %s27, 0
      %p141 = por %p139, %p140
      %s143 = sadd.s32 %s142, 1
      %p146 = scmp.eq.s32.totalorder %s21, 1
      %p147 = scmp.ne.s32.totalorder %s142, %s144
      %p148 = scmp.eq.s32.totalorder %s21, 0
      %p149 = por %p147, %p148
      %p150 = scmp.ne.s32.totalorder %s142, %s144
      %p151 = scmp.eq.s32.totalorder %s26, 1
      %p152 = por %p150, %p151
      %p153 = scmp.ne.s32.totalorder %s144, %s145
      %p154 = scmp.eq.s32.totalorder %s26, 0
      %p155 = por %p153, %p154
      %p156 = scmp.ne.s32.totalorder %s144, %s145
      %p157 = scmp.eq.s32.totalorder %s27, 1
      %p158 = por %p156, %p157
      %p160 = scmp.ne.s32.totalorder %s145, %s159
      %p161 = scmp.eq.s32.totalorder %s27, 0
      %p162 = por %p160, %p161
      %s164 = sadd.s32 %s163, 1
      %p167 = scmp.eq.s32.totalorder %s21, 1
      %p168 = scmp.ne.s32.totalorder %s163, %s165
      %p169 = scmp.eq.s32.totalorder %s21, 0
      %p170 = por %p168, %p169
      %p171 = scmp.ne.s32.totalorder %s163, %s165
      %p172 = scmp.eq.s32.totalorder %s26, 1
      %p173 = por %p171, %p172
      %p174 = scmp.ne.s32.totalorder %s165, %s166
      %p175 = scmp.eq.s32.totalorder %s26, 0
      %p176 = por %p174, %p175
      %p177 = scmp.ne.s32.totalorder %s165, %s166
      %p178 = scmp.eq.s32.totalorder %s27, 1
      %p179 = por %p177, %p178
      %p181 = scmp.ne.s32.totalorder %s166, %s180
      %p182 = scmp.eq.s32.totalorder %s27, 0
      %p183 = por %p181, %p182
      %s184 = ssub.s32 %s28, %s40
      %p185 = scmp.eq.s32.totalorder %s184, 0
      %s187 = sadd.s32 %s186, 1
      %s188 = scalar_select %p185, %s186, %s187
      %p191 = pneg %p185
      %p192 = scmp.eq.s32.totalorder %s21, 1
      %p193 = por %p191, %p192
      %p194 = scmp.ne.s32.totalorder %s186, %s189
      %p195 = scmp.eq.s32.totalorder %s21, 0
      %p196 = por %p194, %p195
      %p197 = scmp.ne.s32.totalorder %s186, %s189
      %p198 = scmp.eq.s32.totalorder %s26, 1
      %p199 = por %p197, %p198
      %p200 = scmp.ne.s32.totalorder %s189, %s190
      %p201 = scmp.eq.s32.totalorder %s26, 0
      %p202 = por %p200, %p201
      %p203 = scmp.ne.s32.totalorder %s189, %s190
      %p204 = scmp.eq.s32.totalorder %s27, 1
      %p205 = por %p203, %p204
      %p207 = scmp.ne.s32.totalorder %s190, %s206
      %p208 = scmp.eq.s32.totalorder %s27, 0
      %p209 = por %p207, %p208
      %p210 = scmp.le.s32.totalorder 1, %s21
      %p211 = scmp.lt.s32.totalorder %s21, 3
      %p212 = pnand %p210, %p211
      %p213 = pneg %p212
      // Predicated region
      $region9: #{decoder_forward.12} parent=5 // pred_check
        _
      $region10: #{decoder_forward.12} parent=5 // pred_check_branch
        %215 = sbr.rel (%p212) target = $region12
      $region11: #{decoder_forward.12} parent=5 // pred_region
        %s216 = ssub.s32 %s21, 1
        // Predicated region
        $region13: #{decoder_forward.12} parent=11 // pred_check
          %p217 = pneg %p108
        $region14: #{decoder_forward.12} parent=11 // pred_check_branch
          %219 = sbr.rel (%p217) target = $region16
        $region15: #{decoder_forward.12} parent=11 // pred_region
          %s221 = ssub.s32 16, 16
          %222 = vsyncadd [#allocation6], %s221
          %s224 = sshll.u32 [#allocation7], 4
          %s225 = int_to_ptr.vmem [resolvable:$true] %s224
          %227 = dma.hbm_to_vmem [thread:$0]  %s2, 16, %s225, [#allocation6]
        $region16: #{decoder_forward.12} parent=11 // pred_fallthru
          _
        // Predicated region
        $region17: #{decoder_forward.12} parent=11 // pred_check
          %p228 = pneg %p134
        $region18: #{decoder_forward.12} parent=11 // pred_check_branch
          %230 = sbr.rel (%p228) target = $region20
        $region19: #{decoder_forward.12} parent=11 // pred_region
          %s231 = smul.u32 2, %s30
          %s233 = ssub.s32 256, 256
          %234 = vsyncadd [#allocation9], %s233
          %s235 = smul.addr %s231, 128
          %s236 = scalar_lea.hbm %s3, %s235
          %s237 = sshll.u32 [#allocation8], 4
          %s238 = int_to_ptr.vmem [resolvable:$true] %s237
          %243 = dma.hbm_to_vmem [thread:$0]  %s236, 256, %s238, [#allocation9], 128, 128, 8
        $region20: #{decoder_forward.12} parent=11 // pred_fallthru
          _
        // Predicated region
        $region21: #{decoder_forward.12} parent=11 // pred_check
          %p244 = pneg %p155
        $region22: #{decoder_forward.12} parent=11 // pred_check_branch
          %246 = sbr.rel (%p244) target = $region24
        $region23: #{decoder_forward.12} parent=11 // pred_region
          %s248 = ssub.s32 16, 16
          %249 = vsyncadd [#allocation9], %s248
          %s251 = sshll.u32 [#allocation10], 4
          %s252 = int_to_ptr.vmem [resolvable:$true] %s251
          %254 = dma.hbm_to_vmem [thread:$0]  %s4, 16, %s252, [#allocation9]
        $region24: #{decoder_forward.12} parent=11 // pred_fallthru
          _
        // Predicated region
        $region25: #{decoder_forward.12} parent=11 // pred_check
          %p255 = pneg %p176
        $region26: #{decoder_forward.12} parent=11 // pred_check_branch
          %257 = sbr.rel (%p255) target = $region28
        $region27: #{decoder_forward.12} parent=11 // pred_region
          %s259 = ssub.s32 16, 16
          %260 = vsyncadd [#allocation12], %s259
          %s262 = sshll.u32 [#allocation11], 4
          %s263 = int_to_ptr.vmem [resolvable:$true] %s262
          %265 = dma.hbm_to_vmem [thread:$0]  %s5, 16, %s263, [#allocation12]
        $region28: #{decoder_forward.12} parent=11 // pred_fallthru
          _
      $region12: #{decoder_forward.12} parent=5 // pred_fallthru
        _
      %p266 = scmp.lt.s32.totalorder %s21, 2
      // Predicated region
      $region29: #{decoder_forward.12} parent=5 // pred_check
        %p267 = pneg %p266
      $region30: #{decoder_forward.12} parent=5 // pred_check_branch
        %269 = sbr.rel (%p267) target = $region32
      $region31: #{decoder_forward.12} parent=5 // pred_region
        // Predicated region
        $region33: #{decoder_forward.12} parent=31 // pred_check
          %p270 = pneg %p55
        $region34: #{decoder_forward.12} parent=31 // pred_check_branch
          %272 = sbr.rel (%p270) target = $region36
        $region35: #{decoder_forward.12} parent=31 // pred_region
          %s273 = sand.u32 %s45, 1
          %s274 = scalar_lea.sflag [#allocation3], %s273
          %s275 = sand.u32 %s45, 1
          %s276 = smul.addr %s275, 64
          %s277 = scalar_lea.vmem [#allocation2], %s276
          %s278 = smul.u32 2, %s28
          %s279 = smul.u32 8, %s29
          %s281 = ssub.s32 1024, 1024
          %282 = vsyncadd %s274, %s281
          %s283 = smul.addr %s278, 16
          %s284 = sadd.s32 %s279, %s283
          %s285 = smul.addr %s284, 64
          %s286 = scalar_lea.hbm %s0, %s285
          %s287 = sshll.u32 %s277, 4
          %s288 = int_to_ptr.vmem [resolvable:$true] %s287
          %293 = dma.hbm_to_vmem [thread:$0]  %s286, 1024, %s288, %s274, 1024, 512, 32
        $region36: #{decoder_forward.12} parent=31 // pred_fallthru
          _
        // Predicated region
        $region37: #{decoder_forward.12} parent=31 // pred_check
          %p294 = pneg %p81
        $region38: #{decoder_forward.12} parent=31 // pred_check_branch
          %296 = sbr.rel (%p294) target = $region40
        $region39: #{decoder_forward.12} parent=31 // pred_region
          %s297 = sand.u32 %s21, 1
          %s298 = scalar_lea.sflag [#allocation6], %s297
          %s299 = sand.u32 %s71, 1
          %s300 = smul.addr %s299, 512
          %s301 = scalar_lea.vmem [#allocation5], %s300
          %s302 = smul.u32 128, %s29
          %s304 = ssub.s32 8192, 8192
          %305 = vsyncadd %s298, %s304
          %s306 = smul.addr %s302, 64
          %s307 = scalar_lea.hbm %s1, %s306
          %s308 = sshll.u32 %s301, 4
          %s309 = int_to_ptr.vmem [resolvable:$true] %s308
          %314 = dma.hbm_to_vmem [thread:$0]  %s307, 8192, %s309, %s298, 64, 64, 4
        $region40: #{decoder_forward.12} parent=31 // pred_fallthru
          _
      $region32: #{decoder_forward.12} parent=5 // pred_fallthru
        _
      %p315 = scmp.le.s32.totalorder 1, %s21
      %p316 = scmp.lt.s32.totalorder %s21, 3
      %p317 = pnand %p315, %p316
      %p318 = pneg %p317
      // Predicated region
      $region41: #{decoder_forward.12} parent=5 // pred_check
        _
      $region42: #{decoder_forward.12} parent=5 // pred_check_branch
        %320 = sbr.rel (%p317) target = $region44
      $region43: #{decoder_forward.12} parent=5 // pred_region
        %s321 = ssub.s32 %s21, 1
        %s322 = sand.u32 %s48, 1
        %s323 = scalar_lea.sflag [#allocation3], %s322
        %s324 = sand.u32 %s48, 1
        %s325 = smul.addr %s324, 64
        %s326 = scalar_lea.vmem [#allocation2], %s325
        // Predicated region
        $region45: #{decoder_forward.12} parent=43 // pred_check
          %p327 = pneg %p61
        $region46: #{decoder_forward.12} parent=43 // pred_check_branch
          %329 = sbr.rel (%p327) target = $region48
        $region47: #{decoder_forward.12} parent=43 // pred_region
          %330 = dma.done %s323, 1024
        $region48: #{decoder_forward.12} parent=43 // pred_fallthru
          _
        %s331 = sand.u32 %s26, 1
        %s332 = scalar_lea.sflag [#allocation6], %s331
        %s333 = sand.u32 %s74, 1
        %s334 = smul.addr %s333, 512
        %s335 = scalar_lea.vmem [#allocation5], %s334
        // Predicated region
        $region49: #{decoder_forward.12} parent=43 // pred_check
          %p336 = pneg %p87
        $region50: #{decoder_forward.12} parent=43 // pred_check_branch
          %338 = sbr.rel (%p336) target = $region52
        $region51: #{decoder_forward.12} parent=43 // pred_region
          %339 = dma.done %s332, 8192
        $region52: #{decoder_forward.12} parent=43 // pred_fallthru
          _
        // Predicated region
        $region53: #{decoder_forward.12} parent=43 // pred_check
          %p340 = pneg %p108
        $region54: #{decoder_forward.12} parent=43 // pred_check_branch
          %342 = sbr.rel (%p340) target = $region56
        $region55: #{decoder_forward.12} parent=43 // pred_region
          %343 = dma.done [#allocation6], 16
        $region56: #{decoder_forward.12} parent=43 // pred_fallthru
          _
        // Predicated region
        $region57: #{decoder_forward.12} parent=43 // pred_check
          %p344 = pneg %p134
        $region58: #{decoder_forward.12} parent=43 // pred_check_branch
          %346 = sbr.rel (%p344) target = $region60
        $region59: #{decoder_forward.12} parent=43 // pred_region
          %347 = dma.done [#allocation9], 256
        $region60: #{decoder_forward.12} parent=43 // pred_fallthru
          _
        // Predicated region
        $region61: #{decoder_forward.12} parent=43 // pred_check
          %p348 = pneg %p155
        $region62: #{decoder_forward.12} parent=43 // pred_check_branch
          %350 = sbr.rel (%p348) target = $region64
        $region63: #{decoder_forward.12} parent=43 // pred_region
          %351 = dma.done [#allocation9], 16
        $region64: #{decoder_forward.12} parent=43 // pred_fallthru
          _
        // Predicated region
        $region65: #{decoder_forward.12} parent=43 // pred_check
          %p352 = pneg %p176
        $region66: #{decoder_forward.12} parent=43 // pred_check_branch
          %354 = sbr.rel (%p352) target = $region68
        $region67: #{decoder_forward.12} parent=43 // pred_region
          %355 = dma.done [#allocation12], 16
        $region68: #{decoder_forward.12} parent=43 // pred_fallthru
          _
        %s356 = sand.u32 %s48, 1
        %s357 = scalar_lea.sflag [#allocation3], %s356
        %s358 = sand.u32 %s48, 1
        %s359 = smul.addr %s358, 64
        %s360 = scalar_lea.vmem [#allocation2], %s359
        %p361 = pneg %p61
        %p362 = pneg %p58
        %s363 = sand.u32 %s26, 1
        %s364 = scalar_lea.sflag [#allocation6], %s363
        %s365 = sand.u32 %s74, 1
        %s366 = smul.addr %s365, 512
        %s367 = scalar_lea.vmem [#allocation5], %s366
        %p368 = pneg %p87
        %p369 = pneg %p84
        %p370 = pneg %p108
        %p371 = pneg %p105
        %p372 = pneg %p134
        %p373 = pneg %p131
        %p374 = pneg %p155
        %p375 = pneg %p152
        %p376 = pneg %p176
        %p377 = pneg %p173
        %p378 = pneg %p202
        %p379 = pneg %p199
        %s380 = smul.u32 2, %s30
        %s381 = smul.u32 8, %s31
        %s382 = smul.u32 128, %s31
        %s383 = smul.u32 2, %s30
        %s384 = smul.u32 2, %s30
        %p386 = scmp.eq.s32.totalorder %s31, 0
        // Predicated region
        $region69: #{decoder_forward.12} parent=43 // pred_check
          %p387 = pneg %p386
        $region70: #{decoder_forward.12} parent=43 // pred_check_branch
          %389 = sbr.rel (%p387) target = $region72
        $region71: #{decoder_forward.12} parent=43 // pred_region
          %vm390 = vcmask 261120
          %391 = vst.msk [vmem:[#allocation13] sm:$0xff] %vm390, 0.0
          %392 = vst.msk [vmem:[#allocation13 + $0x8] sm:$0xff] %vm390, 0.0
        $region72: #{decoder_forward.12} parent=43 // pred_fallthru
          _
        %v393 = vld [vmem:[#allocation13] sm:$0xff]
        %v394 = vld [vmem:[#allocation13 + $0x8] sm:$0xff]
        %v395 = vld [vmem:[%s326] sm:$0xff]
        %v396 = vld [vmem:[%s326 + $0x8] sm:$0xff]
        %v397 = vld [vmem:[%s326 + $0x10] sm:$0xff]
        %v398 = vld [vmem:[%s326 + $0x18] sm:$0xff]
        %v399 = vld [vmem:[%s326 + $0x20] sm:$0xff]
        %v400 = vld [vmem:[%s326 + $0x28] sm:$0xff]
        %v401 = vld [vmem:[%s326 + $0x30] sm:$0xff]
        %v402 = vld [vmem:[%s326 + $0x38] sm:$0xff]
        %v403 = vld [vmem:[%s335] sm:$0xf]
        %v404 = vld [vmem:[%s335 + $0x4] sm:$0xf]
        %v405 = vld [vmem:[%s335 + $0x8] sm:$0xf]
        %v406 = vld [vmem:[%s335 + $0xc] sm:$0xf]
        %v407 = vld [vmem:[%s335 + $0x10] sm:$0xf]
        %v408 = vld [vmem:[%s335 + $0x14] sm:$0xf]
        %v409 = vld [vmem:[%s335 + $0x18] sm:$0xf]
        %v410 = vld [vmem:[%s335 + $0x1c] sm:$0xf]
        %v411 = vld [vmem:[%s335 + $0x20] sm:$0xf]
        %v412 = vld [vmem:[%s335 + $0x24] sm:$0xf]
        %v413 = vld [vmem:[%s335 + $0x28] sm:$0xf]
        %v414 = vld [vmem:[%s335 + $0x2c] sm:$0xf]
        %v415 = vld [vmem:[%s335 + $0x30] sm:$0xf]
        %v416 = vld [vmem:[%s335 + $0x34] sm:$0xf]
        %v417 = vld [vmem:[%s335 + $0x38] sm:$0xf]
        %v418 = vld [vmem:[%s335 + $0x3c] sm:$0xf]
        %v419 = vld [vmem:[%s335 + $0x40] sm:$0xf]
        %v420 = vld [vmem:[%s335 + $0x44] sm:$0xf]
        %v421 = vld [vmem:[%s335 + $0x48] sm:$0xf]
        %v422 = vld [vmem:[%s335 + $0x4c] sm:$0xf]
        %v423 = vld [vmem:[%s335 + $0x50] sm:$0xf]
        %v424 = vld [vmem:[%s335 + $0x54] sm:$0xf]
        %v425 = vld [vmem:[%s335 + $0x58] sm:$0xf]
        %v426 = vld [vmem:[%s335 + $0x5c] sm:$0xf]
        %v427 = vld [vmem:[%s335 + $0x60] sm:$0xf]
        %v428 = vld [vmem:[%s335 + $0x64] sm:$0xf]
        %v429 = vld [vmem:[%s335 + $0x68] sm:$0xf]
        %v430 = vld [vmem:[%s335 + $0x6c] sm:$0xf]
        %v431 = vld [vmem:[%s335 + $0x70] sm:$0xf]
        %v432 = vld [vmem:[%s335 + $0x74] sm:$0xf]
        %v433 = vld [vmem:[%s335 + $0x78] sm:$0xf]
        %v434 = vld [vmem:[%s335 + $0x7c] sm:$0xf]
        %v435 = vld [vmem:[%s335 + $0x80] sm:$0xf]
        %v436 = vld [vmem:[%s335 + $0x84] sm:$0xf]
        %v437 = vld [vmem:[%s335 + $0x88] sm:$0xf]
        %v438 = vld [vmem:[%s335 + $0x8c] sm:$0xf]
        %v439 = vld [vmem:[%s335 + $0x90] sm:$0xf]
        %v440 = vld [vmem:[%s335 + $0x94] sm:$0xf]
        %v441 = vld [vmem:[%s335 + $0x98] sm:$0xf]
        %v442 = vld [vmem:[%s335 + $0x9c] sm:$0xf]
        %v443 = vld [vmem:[%s335 + $0xa0] sm:$0xf]
        %v444 = vld [vmem:[%s335 + $0xa4] sm:$0xf]
        %v445 = vld [vmem:[%s335 + $0xa8] sm:$0xf]
        %v446 = vld [vmem:[%s335 + $0xac] sm:$0xf]
        %v447 = vld [vmem:[%s335 + $0xb0] sm:$0xf]
        %v448 = vld [vmem:[%s335 + $0xb4] sm:$0xf]
        %v449 = vld [vmem:[%s335 + $0xb8] sm:$0xf]
        %v450 = vld [vmem:[%s335 + $0xbc] sm:$0xf]
        %v451 = vld [vmem:[%s335 + $0xc0] sm:$0xf]
        %v452 = vld [vmem:[%s335 + $0xc4] sm:$0xf]
        %v453 = vld [vmem:[%s335 + $0xc8] sm:$0xf]
        %v454 = vld [vmem:[%s335 + $0xcc] sm:$0xf]
        %v455 = vld [vmem:[%s335 + $0xd0] sm:$0xf]
        %v456 = vld [vmem:[%s335 + $0xd4] sm:$0xf]
        %v457 = vld [vmem:[%s335 + $0xd8] sm:$0xf]
        %v458 = vld [vmem:[%s335 + $0xdc] sm:$0xf]
        %v459 = vld [vmem:[%s335 + $0xe0] sm:$0xf]
        %v460 = vld [vmem:[%s335 + $0xe4] sm:$0xf]
        %v461 = vld [vmem:[%s335 + $0xe8] sm:$0xf]
        %v462 = vld [vmem:[%s335 + $0xec] sm:$0xf]
        %v463 = vld [vmem:[%s335 + $0xf0] sm:$0xf]
        %v464 = vld [vmem:[%s335 + $0xf4] sm:$0xf]
        %v465 = vld [vmem:[%s335 + $0xf8] sm:$0xf]
        %v466 = vld [vmem:[%s335 + $0xfc] sm:$0xf]
        %v467 = vld [vmem:[%s335 + $0x100] sm:$0xf]
        %v468 = vld [vmem:[%s335 + $0x104] sm:$0xf]
        %v469 = vld [vmem:[%s335 + $0x108] sm:$0xf]
        %v470 = vld [vmem:[%s335 + $0x10c] sm:$0xf]
        %v471 = vld [vmem:[%s335 + $0x110] sm:$0xf]
        %v472 = vld [vmem:[%s335 + $0x114] sm:$0xf]
        %v473 = vld [vmem:[%s335 + $0x118] sm:$0xf]
        %v474 = vld [vmem:[%s335 + $0x11c] sm:$0xf]
        %v475 = vld [vmem:[%s335 + $0x120] sm:$0xf]
        %v476 = vld [vmem:[%s335 + $0x124] sm:$0xf]
        %v477 = vld [vmem:[%s335 + $0x128] sm:$0xf]
        %v478 = vld [vmem:[%s335 + $0x12c] sm:$0xf]
        %v479 = vld [vmem:[%s335 + $0x130] sm:$0xf]
        %v480 = vld [vmem:[%s335 + $0x134] sm:$0xf]
        %v481 = vld [vmem:[%s335 + $0x138] sm:$0xf]
        %v482 = vld [vmem:[%s335 + $0x13c] sm:$0xf]
        %v483 = vld [vmem:[%s335 + $0x140] sm:$0xf]
        %v484 = vld [vmem:[%s335 + $0x144] sm:$0xf]
        %v485 = vld [vmem:[%s335 + $0x148] sm:$0xf]
        %v486 = vld [vmem:[%s335 + $0x14c] sm:$0xf]
        %v487 = vld [vmem:[%s335 + $0x150] sm:$0xf]
        %v488 = vld [vmem:[%s335 + $0x154] sm:$0xf]
        %v489 = vld [vmem:[%s335 + $0x158] sm:$0xf]
        %v490 = vld [vmem:[%s335 + $0x15c] sm:$0xf]
        %v491 = vld [vmem:[%s335 + $0x160] sm:$0xf]
        %v492 = vld [vmem:[%s335 + $0x164] sm:$0xf]
        %v493 = vld [vmem:[%s335 + $0x168] sm:$0xf]
        %v494 = vld [vmem:[%s335 + $0x16c] sm:$0xf]
        %v495 = vld [vmem:[%s335 + $0x170] sm:$0xf]
        %v496 = vld [vmem:[%s335 + $0x174] sm:$0xf]
        %v497 = vld [vmem:[%s335 + $0x178] sm:$0xf]
        %v498 = vld [vmem:[%s335 + $0x17c] sm:$0xf]
        %v499 = vld [vmem:[%s335 + $0x180] sm:$0xf]
        %v500 = vld [vmem:[%s335 + $0x184] sm:$0xf]
        %v501 = vld [vmem:[%s335 + $0x188] sm:$0xf]
        %v502 = vld [vmem:[%s335 + $0x18c] sm:$0xf]
        %v503 = vld [vmem:[%s335 + $0x190] sm:$0xf]
        %v504 = vld [vmem:[%s335 + $0x194] sm:$0xf]
        %v505 = vld [vmem:[%s335 + $0x198] sm:$0xf]
        %v506 = vld [vmem:[%s335 + $0x19c] sm:$0xf]
        %v507 = vld [vmem:[%s335 + $0x1a0] sm:$0xf]
        %v508 = vld [vmem:[%s335 + $0x1a4] sm:$0xf]
        %v509 = vld [vmem:[%s335 + $0x1a8] sm:$0xf]
        %v510 = vld [vmem:[%s335 + $0x1ac] sm:$0xf]
        %v511 = vld [vmem:[%s335 + $0x1b0] sm:$0xf]
        %v512 = vld [vmem:[%s335 + $0x1b4] sm:$0xf]
        %v513 = vld [vmem:[%s335 + $0x1b8] sm:$0xf]
        %v514 = vld [vmem:[%s335 + $0x1bc] sm:$0xf]
        %v515 = vld [vmem:[%s335 + $0x1c0] sm:$0xf]
        %v516 = vld [vmem:[%s335 + $0x1c4] sm:$0xf]
        %v517 = vld [vmem:[%s335 + $0x1c8] sm:$0xf]
        %v518 = vld [vmem:[%s335 + $0x1cc] sm:$0xf]
        %v519 = vld [vmem:[%s335 + $0x1d0] sm:$0xf]
        %v520 = vld [vmem:[%s335 + $0x1d4] sm:$0xf]
        %v521 = vld [vmem:[%s335 + $0x1d8] sm:$0xf]
        %v522 = vld [vmem:[%s335 + $0x1dc] sm:$0xf]
        %v523 = vld [vmem:[%s335 + $0x1e0] sm:$0xf]
        %v524 = vld [vmem:[%s335 + $0x1e4] sm:$0xf]
        %v525 = vld [vmem:[%s335 + $0x1e8] sm:$0xf]
        %v526 = vld [vmem:[%s335 + $0x1ec] sm:$0xf]
        %v527 = vld [vmem:[%s335 + $0x1f0] sm:$0xf]
        %v528 = vld [vmem:[%s335 + $0x1f4] sm:$0xf]
        %v529 = vld [vmem:[%s335 + $0x1f8] sm:$0xf]
        %v530 = vld [vmem:[%s335 + $0x1fc] sm:$0xf]
        %v539 = vunpack.c.l.b16 %v395
        %v540 = vunpack.c.h.b16 %v395
        %v541 = vunpack.c.l.b16 %v396
        %v542 = vunpack.c.h.b16 %v396
        %v543 = vunpack.c.l.b16 %v397
        %v544 = vunpack.c.h.b16 %v397
        %v545 = vunpack.c.l.b16 %v398
        %v546 = vunpack.c.h.b16 %v398
        %v547 = vunpack.c.l.b16 %v399
        %v548 = vunpack.c.h.b16 %v399
        %v549 = vunpack.c.l.b16 %v400
        %v550 = vunpack.c.h.b16 %v400
        %v551 = vunpack.c.l.b16 %v401
        %v552 = vunpack.c.h.b16 %v401
        %v553 = vunpack.c.l.b16 %v402
        %v554 = vunpack.c.h.b16 %v402
        %v555 = vpack.c.b16 %v547, %v539
        %v556 = vpack.c.b16 %v548, %v540
        %v557 = vpack.c.b16 %v549, %v541
        %v558 = vpack.c.b16 %v550, %v542
        %v559 = vpack.c.b16 %v551, %v543
        %v560 = vpack.c.b16 %v552, %v544
        %v561 = vpack.c.b16 %v553, %v545
        %v562 = vpack.c.b16 %v554, %v546
        %v699 = vunpack.c.l.b16 %v403
        %v700 = vunpack.c.l.b16 %v404
        %v701 = vunpack.c.l.b16 %v405
        %v702 = vunpack.c.l.b16 %v406
        %v703 = vunpack.c.l.b16 %v407
        %v704 = vunpack.c.l.b16 %v408
        %v705 = vunpack.c.l.b16 %v409
        %v706 = vunpack.c.l.b16 %v410
        %v707 = vunpack.c.l.b16 %v411
        %v708 = vunpack.c.l.b16 %v412
        %v709 = vunpack.c.l.b16 %v413
        %v710 = vunpack.c.l.b16 %v414
        %v711 = vunpack.c.l.b16 %v415
        %v712 = vunpack.c.l.b16 %v416
        %v713 = vunpack.c.l.b16 %v417
        %v714 = vunpack.c.l.b16 %v418
        %v715 = vunpack.c.l.b16 %v419
        %v716 = vunpack.c.l.b16 %v420
        %v717 = vunpack.c.l.b16 %v421
        %v718 = vunpack.c.l.b16 %v422
        %v719 = vunpack.c.l.b16 %v423
        %v720 = vunpack.c.l.b16 %v424
        %v721 = vunpack.c.l.b16 %v425
        %v722 = vunpack.c.l.b16 %v426
        %v723 = vunpack.c.l.b16 %v427
        %v724 = vunpack.c.l.b16 %v428
        %v725 = vunpack.c.l.b16 %v429
        %v726 = vunpack.c.l.b16 %v430
        %v727 = vunpack.c.l.b16 %v431
        %v728 = vunpack.c.l.b16 %v432
        %v729 = vunpack.c.l.b16 %v433
        %v730 = vunpack.c.l.b16 %v434
        %v731 = vunpack.c.l.b16 %v435
        %v732 = vunpack.c.l.b16 %v436
        %v733 = vunpack.c.l.b16 %v437
        %v734 = vunpack.c.l.b16 %v438
        %v735 = vunpack.c.l.b16 %v439
        %v736 = vunpack.c.l.b16 %v440
        %v737 = vunpack.c.l.b16 %v441
        %v738 = vunpack.c.l.b16 %v442
        %v739 = vunpack.c.l.b16 %v443
        %v740 = vunpack.c.l.b16 %v444
        %v741 = vunpack.c.l.b16 %v445
        %v742 = vunpack.c.l.b16 %v446
        %v743 = vunpack.c.l.b16 %v447
        %v744 = vunpack.c.l.b16 %v448
        %v745 = vunpack.c.l.b16 %v449
        %v746 = vunpack.c.l.b16 %v450
        %v747 = vunpack.c.l.b16 %v451
        %v748 = vunpack.c.l.b16 %v452
        %v749 = vunpack.c.l.b16 %v453
        %v750 = vunpack.c.l.b16 %v454
        %v751 = vunpack.c.l.b16 %v455
        %v752 = vunpack.c.l.b16 %v456
        %v753 = vunpack.c.l.b16 %v457
        %v754 = vunpack.c.l.b16 %v458
        %v755 = vunpack.c.l.b16 %v459
        %v756 = vunpack.c.l.b16 %v460
        %v757 = vunpack.c.l.b16 %v461
        %v758 = vunpack.c.l.b16 %v462
        %v759 = vunpack.c.l.b16 %v463
        %v760 = vunpack.c.l.b16 %v464
        %v761 = vunpack.c.l.b16 %v465
        %v762 = vunpack.c.l.b16 %v466
        %v763 = vunpack.c.l.b16 %v467
        %v764 = vunpack.c.l.b16 %v468
        %v765 = vunpack.c.l.b16 %v469
        %v766 = vunpack.c.l.b16 %v470
        %v767 = vunpack.c.l.b16 %v471
        %v768 = vunpack.c.l.b16 %v472
        %v769 = vunpack.c.l.b16 %v473
        %v770 = vunpack.c.l.b16 %v474
        %v771 = vunpack.c.l.b16 %v475
        %v772 = vunpack.c.l.b16 %v476
        %v773 = vunpack.c.l.b16 %v477
        %v774 = vunpack.c.l.b16 %v478
        %v775 = vunpack.c.l.b16 %v479
        %v776 = vunpack.c.l.b16 %v480
        %v777 = vunpack.c.l.b16 %v481
        %v778 = vunpack.c.l.b16 %v482
        %v779 = vunpack.c.l.b16 %v483
        %v780 = vunpack.c.l.b16 %v484
        %v781 = vunpack.c.l.b16 %v485
        %v782 = vunpack.c.l.b16 %v486
        %v783 = vunpack.c.l.b16 %v487
        %v784 = vunpack.c.l.b16 %v488
        %v785 = vunpack.c.l.b16 %v489
        %v786 = vunpack.c.l.b16 %v490
        %v787 = vunpack.c.l.b16 %v491
        %v788 = vunpack.c.l.b16 %v492
        %v789 = vunpack.c.l.b16 %v493
        %v790 = vunpack.c.l.b16 %v494
        %v791 = vunpack.c.l.b16 %v495
        %v792 = vunpack.c.l.b16 %v496
        %v793 = vunpack.c.l.b16 %v497
        %v794 = vunpack.c.l.b16 %v498
        %v795 = vunpack.c.l.b16 %v499
        %v796 = vunpack.c.l.b16 %v500
        %v797 = vunpack.c.l.b16 %v501
        %v798 = vunpack.c.l.b16 %v502
        %v799 = vunpack.c.l.b16 %v503
        %v800 = vunpack.c.l.b16 %v504
        %v801 = vunpack.c.l.b16 %v505
        %v802 = vunpack.c.l.b16 %v506
        %v803 = vunpack.c.l.b16 %v507
        %v804 = vunpack.c.l.b16 %v508
        %v805 = vunpack.c.l.b16 %v509
        %v806 = vunpack.c.l.b16 %v510
        %v807 = vunpack.c.l.b16 %v511
        %v808 = vunpack.c.l.b16 %v512
        %v809 = vunpack.c.l.b16 %v513
        %v810 = vunpack.c.l.b16 %v514
        %v811 = vunpack.c.l.b16 %v515
        %v812 = vunpack.c.l.b16 %v516
        %v813 = vunpack.c.l.b16 %v517
        %v814 = vunpack.c.l.b16 %v518
        %v815 = vunpack.c.l.b16 %v519
        %v816 = vunpack.c.l.b16 %v520
        %v817 = vunpack.c.l.b16 %v521
        %v818 = vunpack.c.l.b16 %v522
        %v819 = vunpack.c.l.b16 %v523
        %v820 = vunpack.c.l.b16 %v524
        %v821 = vunpack.c.l.b16 %v525
        %v822 = vunpack.c.l.b16 %v526
        %v823 = vunpack.c.l.b16 %v527
        %v824 = vunpack.c.l.b16 %v528
        %v825 = vunpack.c.l.b16 %v529
        %v826 = vunpack.c.l.b16 %v530
        %v827 = vpack.c.b16 %v700, %v699
        %v828 = vpack.c.b16 %v702, %v701
        %v829 = vpack.c.b16 %v704, %v703
        %v830 = vpack.c.b16 %v706, %v705
        %v831 = vpack.c.b16 %v708, %v707
        %v832 = vpack.c.b16 %v710, %v709
        %v833 = vpack.c.b16 %v712, %v711
        %v834 = vpack.c.b16 %v714, %v713
        %v835 = vpack.c.b16 %v716, %v715
        %v836 = vpack.c.b16 %v718, %v717
        %v837 = vpack.c.b16 %v720, %v719
        %v838 = vpack.c.b16 %v722, %v721
        %v839 = vpack.c.b16 %v724, %v723
        %v840 = vpack.c.b16 %v726, %v725
        %v841 = vpack.c.b16 %v728, %v727
        %v842 = vpack.c.b16 %v730, %v729
        %v843 = vpack.c.b16 %v732, %v731
        %v844 = vpack.c.b16 %v734, %v733
        %v845 = vpack.c.b16 %v736, %v735
        %v846 = vpack.c.b16 %v738, %v737
        %v847 = vpack.c.b16 %v740, %v739
        %v848 = vpack.c.b16 %v742, %v741
        %v849 = vpack.c.b16 %v744, %v743
        %v850 = vpack.c.b16 %v746, %v745
        %v851 = vpack.c.b16 %v748, %v747
        %v852 = vpack.c.b16 %v750, %v749
        %v853 = vpack.c.b16 %v752, %v751
        %v854 = vpack.c.b16 %v754, %v753
        %v855 = vpack.c.b16 %v756, %v755
        %v856 = vpack.c.b16 %v758, %v757
        %v857 = vpack.c.b16 %v760, %v759
        %v858 = vpack.c.b16 %v762, %v761
        %v859 = vpack.c.b16 %v764, %v763
        %v860 = vpack.c.b16 %v766, %v765
        %v861 = vpack.c.b16 %v768, %v767
        %v862 = vpack.c.b16 %v770, %v769
        %v863 = vpack.c.b16 %v772, %v771
        %v864 = vpack.c.b16 %v774, %v773
        %v865 = vpack.c.b16 %v776, %v775
        %v866 = vpack.c.b16 %v778, %v777
        %v867 = vpack.c.b16 %v780, %v779
        %v868 = vpack.c.b16 %v782, %v781
        %v869 = vpack.c.b16 %v784, %v783
        %v870 = vpack.c.b16 %v786, %v785
        %v871 = vpack.c.b16 %v788, %v787
        %v872 = vpack.c.b16 %v790, %v789
        %v873 = vpack.c.b16 %v792, %v791
        %v874 = vpack.c.b16 %v794, %v793
        %v875 = vpack.c.b16 %v796, %v795
        %v876 = vpack.c.b16 %v798, %v797
        %v877 = vpack.c.b16 %v800, %v799
        %v878 = vpack.c.b16 %v802, %v801
        %v879 = vpack.c.b16 %v804, %v803
        %v880 = vpack.c.b16 %v806, %v805
        %v881 = vpack.c.b16 %v808, %v807
        %v882 = vpack.c.b16 %v810, %v809
        %v883 = vpack.c.b16 %v812, %v811
        %v884 = vpack.c.b16 %v814, %v813
        %v885 = vpack.c.b16 %v816, %v815
        %v886 = vpack.c.b16 %v818, %v817
        %v887 = vpack.c.b16 %v820, %v819
        %v888 = vpack.c.b16 %v822, %v821
        %v889 = vpack.c.b16 %v824, %v823
        %v890 = vpack.c.b16 %v826, %v825
        %955 = vmatprep.subr.bf16.mxu0 0
        %956 = vmatpush1.bf16.msra.mxu0 %v827
        %957 = vmatprep.subr.bf16.mxu0 0
        %958 = vmatpush1.bf16.msra.mxu0 %v828
        %959 = vmatprep.subr.bf16.mxu0 0
        %960 = vmatpush1.bf16.msra.mxu0 %v829
        %961 = vmatprep.subr.bf16.mxu0 0
        %962 = vmatpush1.bf16.msra.mxu0 %v830
        %963 = vmatprep.subr.bf16.mxu0 0
        %964 = vmatpush1.bf16.msra.mxu0 %v831
        %965 = vmatprep.subr.bf16.mxu0 0
        %966 = vmatpush1.bf16.msra.mxu0 %v832
        %967 = vmatprep.subr.bf16.mxu0 0
        %968 = vmatpush1.bf16.msra.mxu0 %v833
        %969 = vmatprep.subr.bf16.mxu0 0
        %970 = vmatpush1.bf16.msra.mxu0 %v834
        %971 = vmatprep.subr.bf16.mxu0 0
        %972 = vmatpush1.bf16.msra.mxu0 %v835
        %973 = vmatprep.subr.bf16.mxu0 0
        %974 = vmatpush1.bf16.msra.mxu0 %v836
        %975 = vmatprep.subr.bf16.mxu0 0
        %976 = vmatpush1.bf16.msra.mxu0 %v837
        %977 = vmatprep.subr.bf16.mxu0 0
        %978 = vmatpush1.bf16.msra.mxu0 %v838
        %979 = vmatprep.subr.bf16.mxu0 0
        %980 = vmatpush1.bf16.msra.mxu0 %v839
        %981 = vmatprep.subr.bf16.mxu0 0
        %982 = vmatpush1.bf16.msra.mxu0 %v840
        %983 = vmatprep.subr.bf16.mxu0 0
        %984 = vmatpush1.bf16.msra.mxu0 %v841
        %985 = vmatprep.subr.bf16.mxu0 0
        %986 = vmatpush1.bf16.msra.mxu0 %v842
        %987 = vmatprep.mubr.bf16.mxu0 %v556
        %988 = vmatmul.mubr.bf16.gmra.mrb[0].mxu0 %v555
        %v989 = vpop.f32.mrb[0].mxu0
        %v990 = vadd.f32 0.0, %v989
        %v991 = vpop.f32.mrb[0].mxu0
        %v992 = vpop.f32.mrb[0].mxu0
        %v993 = vadd.f32 0.0, %v992
        %v994 = vpop.f32.mrb[0].mxu0
        %995 = vdwg.mxu0
        %996 = vmatprep.subr.bf16.mxu0 0
        %997 = vmatpush1.bf16.msra.mxu0 %v843
        %998 = vmatprep.subr.bf16.mxu0 0
        %999 = vmatpush1.bf16.msra.mxu0 %v844
        %1000 = vmatprep.subr.bf16.mxu0 0
        %1001 = vmatpush1.bf16.msra.mxu0 %v845
        %1002 = vmatprep.subr.bf16.mxu0 0
        %1003 = vmatpush1.bf16.msra.mxu0 %v846
        %1004 = vmatprep.subr.bf16.mxu0 0
        %1005 = vmatpush1.bf16.msra.mxu0 %v847
        %1006 = vmatprep.subr.bf16.mxu0 0
        %1007 = vmatpush1.bf16.msra.mxu0 %v848
        %1008 = vmatprep.subr.bf16.mxu0 0
        %1009 = vmatpush1.bf16.msra.mxu0 %v849
        %1010 = vmatprep.subr.bf16.mxu0 0
        %1011 = vmatpush1.bf16.msra.mxu0 %v850
        %1012 = vmatprep.subr.bf16.mxu0 0
        %1013 = vmatpush1.bf16.msra.mxu0 %v851
        %1014 = vmatprep.subr.bf16.mxu0 0
        %1015 = vmatpush1.bf16.msra.mxu0 %v852
        %1016 = vmatprep.subr.bf16.mxu0 0
        %1017 = vmatpush1.bf16.msra.mxu0 %v853
        %1018 = vmatprep.subr.bf16.mxu0 0
        %1019 = vmatpush1.bf16.msra.mxu0 %v854
        %1020 = vmatprep.subr.bf16.mxu0 0
        %1021 = vmatpush1.bf16.msra.mxu0 %v855
        %1022 = vmatprep.subr.bf16.mxu0 0
        %1023 = vmatpush1.bf16.msra.mxu0 %v856
        %1024 = vmatprep.subr.bf16.mxu0 0
        %1025 = vmatpush1.bf16.msra.mxu0 %v857
        %1026 = vmatprep.subr.bf16.mxu0 0
        %1027 = vmatpush1.bf16.msra.mxu0 %v858
        %1028 = vmatprep.mubr.bf16.mxu0 %v558
        %1029 = vmatmul.mubr.bf16.gmra.mrb[0].mxu0 %v557
        %v1030 = vpop.f32.mrb[0].mxu0
        %v1031 = vadd.f32 %v990, %v1030
        %v1032 = vpop.f32.mrb[0].mxu0
        %v1033 = vpop.f32.mrb[0].mxu0
        %v1034 = vadd.f32 %v993, %v1033
        %v1035 = vpop.f32.mrb[0].mxu0
        %1036 = vdwg.mxu0
        %1037 = vmatprep.subr.bf16.mxu0 0
        %1038 = vmatpush1.bf16.msra.mxu0 %v859
        %1039 = vmatprep.subr.bf16.mxu0 0
        %1040 = vmatpush1.bf16.msra.mxu0 %v860
        %1041 = vmatprep.subr.bf16.mxu0 0
        %1042 = vmatpush1.bf16.msra.mxu0 %v861
        %1043 = vmatprep.subr.bf16.mxu0 0
        %1044 = vmatpush1.bf16.msra.mxu0 %v862
        %1045 = vmatprep.subr.bf16.mxu0 0
        %1046 = vmatpush1.bf16.msra.mxu0 %v863
        %1047 = vmatprep.subr.bf16.mxu0 0
        %1048 = vmatpush1.bf16.msra.mxu0 %v864
        %1049 = vmatprep.subr.bf16.mxu0 0
        %1050 = vmatpush1.bf16.msra.mxu0 %v865
        %1051 = vmatprep.subr.bf16.mxu0 0
        %1052 = vmatpush1.bf16.msra.mxu0 %v866
        %1053 = vmatprep.subr.bf16.mxu0 0
        %1054 = vmatpush1.bf16.msra.mxu0 %v867
        %1055 = vmatprep.subr.bf16.mxu0 0
        %1056 = vmatpush1.bf16.msra.mxu0 %v868
        %1057 = vmatprep.subr.bf16.mxu0 0
        %1058 = vmatpush1.bf16.msra.mxu0 %v869
        %1059 = vmatprep.subr.bf16.mxu0 0
        %1060 = vmatpush1.bf16.msra.mxu0 %v870
        %1061 = vmatprep.subr.bf16.mxu0 0
        %1062 = vmatpush1.bf16.msra.mxu0 %v871
        %1063 = vmatprep.subr.bf16.mxu0 0
        %1064 = vmatpush1.bf16.msra.mxu0 %v872
        %1065 = vmatprep.subr.bf16.mxu0 0
        %1066 = vmatpush1.bf16.msra.mxu0 %v873
        %1067 = vmatprep.subr.bf16.mxu0 0
        %1068 = vmatpush1.bf16.msra.mxu0 %v874
        %1069 = vmatprep.mubr.bf16.mxu0 %v560
        %1070 = vmatmul.mubr.bf16.gmra.mrb[0].mxu0 %v559
        %v1071 = vpop.f32.mrb[0].mxu0
        %v1072 = vadd.f32 %v1031, %v1071
        %v1073 = vpop.f32.mrb[0].mxu0
        %v1074 = vpop.f32.mrb[0].mxu0
        %v1075 = vadd.f32 %v1034, %v1074
        %v1076 = vpop.f32.mrb[0].mxu0
        %1077 = vdwg.mxu0
        %1078 = vmatprep.subr.bf16.mxu0 0
        %1079 = vmatpush1.bf16.msra.mxu0 %v875
        %1080 = vmatprep.subr.bf16.mxu0 0
        %1081 = vmatpush1.bf16.msra.mxu0 %v876
        %1082 = vmatprep.subr.bf16.mxu0 0
        %1083 = vmatpush1.bf16.msra.mxu0 %v877
        %1084 = vmatprep.subr.bf16.mxu0 0
        %1085 = vmatpush1.bf16.msra.mxu0 %v878
        %1086 = vmatprep.subr.bf16.mxu0 0
        %1087 = vmatpush1.bf16.msra.mxu0 %v879
        %1088 = vmatprep.subr.bf16.mxu0 0
        %1089 = vmatpush1.bf16.msra.mxu0 %v880
        %1090 = vmatprep.subr.bf16.mxu0 0
        %1091 = vmatpush1.bf16.msra.mxu0 %v881
        %1092 = vmatprep.subr.bf16.mxu0 0
        %1093 = vmatpush1.bf16.msra.mxu0 %v882
        %1094 = vmatprep.subr.bf16.mxu0 0
        %1095 = vmatpush1.bf16.msra.mxu0 %v883
        %1096 = vmatprep.subr.bf16.mxu0 0
        %1097 = vmatpush1.bf16.msra.mxu0 %v884
        %1098 = vmatprep.subr.bf16.mxu0 0
        %1099 = vmatpush1.bf16.msra.mxu0 %v885
        %1100 = vmatprep.subr.bf16.mxu0 0
        %1101 = vmatpush1.bf16.msra.mxu0 %v886
        %1102 = vmatprep.subr.bf16.mxu0 0
        %1103 = vmatpush1.bf16.msra.mxu0 %v887
        %1104 = vmatprep.subr.bf16.mxu0 0
        %1105 = vmatpush1.bf16.msra.mxu0 %v888
        %1106 = vmatprep.subr.bf16.mxu0 0
        %1107 = vmatpush1.bf16.msra.mxu0 %v889
        %1108 = vmatprep.subr.bf16.mxu0 0
        %1109 = vmatpush1.bf16.msra.mxu0 %v890
        %1110 = vmatprep.mubr.bf16.mxu0 %v562
        %1111 = vmatmul.mubr.bf16.gmra.mrb[0].mxu0 %v561
        %v1112 = vpop.f32.mrb[0].mxu0
        %v1113 = vadd.f32 %v1072, %v1112
        %v1114 = vpop.f32.mrb[0].mxu0
        %v1115 = vpop.f32.mrb[0].mxu0
        %v1116 = vadd.f32 %v1075, %v1115
        %v1117 = vpop.f32.mrb[0].mxu0
        %1118 = vdwg.mxu0
        %v1119 = vadd.f32 %v393, %v1113
        %v1120 = vadd.f32 %v394, %v1116
        %vm1121 = vcmask 261120
        %1122 = vst.msk [vmem:[#allocation13] sm:$0xff] %vm1121, %v1119
        %1123 = vst.msk [vmem:[#allocation13 + $0x8] sm:$0xff] %vm1121, %v1120
        %p1124 = scmp.eq.s32.totalorder %s31, 1
        // Predicated region
        $region73: #{decoder_forward.12} parent=43 // pred_check
          %p1125 = pneg %p1124
        $region74: #{decoder_forward.12} parent=43 // pred_check_branch
          %1127 = sbr.rel (%p1125) target = $region76
        $region75: #{decoder_forward.12} parent=43 // pred_region
          %v1128 = vld [vmem:[#allocation13] sm:$0xff]
          %v1129 = vld [vmem:[#allocation13 + $0x8] sm:$0xff]
          %v1130 = vld [vmem:[#allocation7] sm:$0x1]
          %v1132 = vlaneseq
          %v1133 = vshrl.u32 %v1132, 7
          %v1134 = vsub.s32 0, %v1133
          %v1135 = vrot.slane %v1130, %v1134
          %v1137 = vadd.f32 %v1128, %v1135
          %v1138 = vadd.f32 %v1129, %v1135
          %v1139 = vld [vmem:[#allocation8] sm:$0xff]
          %v1140 = vld [vmem:[#allocation8 + $0x8] sm:$0xff]
          %v1141 = vadd.f32 %v1137, %v1139
          %v1142 = vadd.f32 %v1138, %v1140
          %v1143 = vld [vmem:[#allocation10] sm:$0x1]
          %v1144 = vld [vmem:[#allocation11] sm:$0x1]
          %v1145 = vsel %vm1121, %v1141, 0.0
          %1146 = vadd.xlane.f32.xlu0 %v1145
          %v1147 = vpop.xlane.xlu0 %1146
          %v1148 = vsel %vm1121, %v1142, 0.0
          %1149 = vadd.xlane.f32.xlu0 %v1148
          %v1150 = vpop.xlane.xlu0 %1149
          %v1151 = vrcp.pop 32.0
          %v1152 = vmul.f32 %v1147, %v1151
          %v1153 = vmul.f32 %v1150, %v1151
          %v1154 = vsub.f32 %v1141, %v1152
          %v1155 = vsub.f32 %v1142, %v1153
          %v1156 = vmul.f32 %v1154, %v1154
          %v1157 = vmul.f32 %v1155, %v1155
          %v1158 = vsel %vm1121, %v1156, 0.0
          %1159 = vadd.xlane.f32.xlu0 %v1158
          %v1160 = vpop.xlane.xlu0 %1159
          %v1161 = vsel %vm1121, %v1157, 0.0
          %1162 = vadd.xlane.f32.xlu0 %v1161
          %v1163 = vpop.xlane.xlu0 %1162
          %v1164 = vmul.f32 %v1160, %v1151
          %v1165 = vmul.f32 %v1163, %v1151
          %v1166 = vadd.f32 %v1164, 1e-05
          %v1167 = vadd.f32 %v1165, 1e-05
          %v1168 = vrsqrt.pop %v1166
          %v1169 = vrsqrt.pop %v1167
          %v1170 = vmul.f32 %v1154, %v1168
          %v1171 = vmul.f32 %v1155, %v1169
          %v1173 = vlaneseq
          %v1174 = vshrl.u32 %v1173, 7
          %v1175 = vsub.s32 0, %v1174
          %v1176 = vrot.slane %v1143, %v1175
          %v1178 = vmul.f32 %v1170, %v1176
          %v1179 = vmul.f32 %v1171, %v1176
          %v1181 = vlaneseq
          %v1182 = vshrl.u32 %v1181, 7
          %v1183 = vsub.s32 0, %v1182
          %v1184 = vrot.slane %v1144, %v1183
          %v1186 = vadd.f32 %v1178, %v1184
          %v1187 = vadd.f32 %v1179, %v1184
          %1188 = vst.msk [vmem:[#allocation13] sm:$0xff] %vm1121, %v1186
          %1189 = vst.msk [vmem:[#allocation13 + $0x8] sm:$0xff] %vm1121, %v1187
        $region76: #{decoder_forward.12} parent=43 // pred_fallthru
          _
        // Predicated region
        $region77: #{decoder_forward.12} parent=43 // pred_check
          %p1190 = pneg %p199
        $region78: #{decoder_forward.12} parent=43 // pred_check_branch
          %1192 = sbr.rel (%p1190) target = $region80
        $region79: #{decoder_forward.12} parent=43 // pred_region
          %s1193 = smul.u32 2, %s30
          %s1195 = ssub.s32 256, 256
          %1196 = vsyncadd [#allocation4], %s1195
          %s1197 = smul.addr %s1193, 128
          %s1198 = scalar_lea.hbm %s6, %s1197
          %s1199 = sshll.u32 [#allocation13], 4
          %s1200 = int_to_ptr.vmem [resolvable:$true] %s1199
          %1205 = dma.vmem_to_hbm [thread:$0]  %s1200, 256, %s1198, [#allocation4], 128, 128, 8
        $region80: #{decoder_forward.12} parent=43 // pred_fallthru
          _
        // Predicated region
        $region81: #{decoder_forward.12} parent=43 // pred_check
          %p1206 = pneg %p199
        $region82: #{decoder_forward.12} parent=43 // pred_check_branch
          %1208 = sbr.rel (%p1206) target = $region84
        $region83: #{decoder_forward.12} parent=43 // pred_region
          %1209 = dma.done [#allocation4], 256
        $region84: #{decoder_forward.12} parent=43 // pred_fallthru
          _
      $region44: #{decoder_forward.12} parent=5 // pred_fallthru
        _
      %p1210 = scmp.le.s32.totalorder 2, %s21
      // Predicated region
      $region85: #{decoder_forward.12} parent=5 // pred_check
        %p1211 = pneg %p1210
      $region86: #{decoder_forward.12} parent=5 // pred_check_branch
        %1213 = sbr.rel (%p1211) target = $region88
      $region87: #{decoder_forward.12} parent=5 // pred_region
        %s1214 = ssub.s32 %s21, 2
      $region88: #{decoder_forward.12} parent=5 // pred_fallthru
        _
    $region6: #{decoder_forward.12} parent=1 // loop_footer
      %s25 = sadd.s32 1, %s21
    $region7: #{decoder_forward.12} parent=1 // loop_footer_branch
      %20 = sbr.rel target = $region3
    $region8: #{decoder_forward.12} parent=1 // loop_exit
      _
    %1215 = vsyncpa [#allocation3], 1
    %s1216 = scalar_lea.sflag [#allocation3], 1
    %1217 = vsyncpa %s1216, 1
    %1218 = vsyncpa [#allocation6], 1
    %s1219 = scalar_lea.sflag [#allocation6], 1
    %1220 = vsyncpa %s1219, 1
    %1221 = vsyncpa [#allocation9], 1
    %1222 = vsyncpa [#allocation12], 1
    %1223 = vsyncpa [#allocation4], 1
    %s1224 = scalar_lea.sflag [#allocation4], 1
    %1225 = vsyncpa %s1224, 1

</llo_original>
